<compile_context>
chip_gen: v7x
topology: tpu7x:2x2x1
jax: 0.10.0
libtpu: 0.0.40
codegen_flags: <defaults>
</compile_context>

<pallas_src>
import functools

import jax
import jax.numpy as jnp
from jax import lax
from jax.experimental import pallas as pl
from jax.experimental.pallas import tpu as pltpu


def _round_up(v, m):
    return (v + m - 1) // m * m


# ----------------------------------------------------------------------------
# Fused InceptionA kernel (one grid step per batch image)
# ----------------------------------------------------------------------------
def _make_kernel(h, w, cinp, mxu_dtype):
    hw = h * w

    def kernel(col_ref, x_ref, w1_ref, b1_ref, wp_ref, bp_ref,
               w5_ref, b5_ref, w3a_ref, b3a_ref, w3b_ref, b3b_ref,
               o_ref, im2col_ref):
        # col_ref   : (1, HW)  int32   column index of every flattened pixel
        # x_ref     : (Cp, HW) f32     one image, channel-major, lane-dense HW
        # w*_ref    : (Cout, K) mxu_dtype   repacked weights (W @ X orientation)
        # b*_ref    : (Cout, 1) f32
        # o_ref     : (88, HW) f32     NCHW output rows for this image
        # im2col_ref: (Kmax, HW) mxu_dtype  shared K-concatenated patch scratch
        col = col_ref[...]                       # (1, hw) int32
        x = x_ref[...]                           # (cinp, hw) f32

        def shifted(m, dy, dx):
            # out[:, y*w + c] = m[:, (y+dy)*w + (c+dx)], zero outside the image.
            # Flat lane shift (zero fill at the ends handles the row halo) plus
            # a column-validity mask (handles the x-direction halo / row wrap).
            off = dy * w + dx
            cdim = m.shape[0]
            if off > 0:
                s = jnp.concatenate(
                    [m[:, off:], jnp.zeros((cdim, off), m.dtype)], axis=1)
            elif off < 0:
                s = jnp.concatenate(
                    [jnp.zeros((cdim, -off), m.dtype), m[:, :hw + off]], axis=1)
            else:
                s = m
            if dx == 0:
                return s
            valid = ((col + dx >= 0) & (col + dx < w)).astype(m.dtype)  # (1, hw)
            return s * valid

        def conv_kxk(m, wk_ref, bias, k, cblk):
            # Build the K-concatenated im2col in VMEM (aligned, lane-dense
            # stores), then one big-K GEMM on the MXU.
            p = k // 2
            t = 0
            for dy in range(-p, p + 1):
                for dx in range(-p, p + 1):
                    im2col_ref[t * cblk:(t + 1) * cblk, :] = (
                        shifted(m, dy, dx).astype(im2col_ref.dtype))
                    t += 1
            kk = k * k * cblk
            patches = im2col_ref[0:kk, :]                      # (kk, hw)
            return jnp.dot(wk_ref[...], patches,
                           preferred_element_type=jnp.float32) + bias

        # ---- merged 1x1 GEMM over x: [branch1x1 | 3x3-reduce | 5x5-reduce] ----
        a48 = jnp.dot(w1_ref[...], x.astype(w1_ref.dtype),
                      preferred_element_type=jnp.float32) + b1_ref[...]
        b1_out = a48[0:16, :]                                   # branch1x1
        t3 = a48[16:32, :]                                      # 3x3 reduce
        t5 = a48[32:48, :]                                      # 5x5 reduce

        # ---- pool branch: avgpool3x3 (count_include_pad) + 1x1 == 3x3 conv w/9
        pool_out = conv_kxk(x, wp_ref, bp_ref[...], 3, cinp)

        # ---- 5x5 branch ----
        b5_out = conv_kxk(t5, w5_ref, b5_ref[...], 5, 16)

        # ---- 3x3 branch (two chained 3x3 convs) ----
        mid3 = conv_kxk(t3, w3a_ref, b3a_ref[...], 3, 16)
        b3_out = conv_kxk(mid3, w3b_ref, b3b_ref[...], 3, 24)

        # ---- torch concat order [pool, 1x1, 5x5, 3x3]: direct row-range stores
        #      (offsets/sizes all multiples of 8 sublanes, HW lanes dense). ----
        o_ref[0:24, :] = pool_out
        o_ref[24:40, :] = b1_out
        o_ref[40:64, :] = b5_out
        o_ref[64:88, :] = b3_out

    return kernel


# ----------------------------------------------------------------------------
# Wrapper: weight repacking + one pallas_call (grid over batch)
# ----------------------------------------------------------------------------
def _w1x1_mat(wt):
    # (O, C, 1, 1) -> (O, C)
    return wt.reshape(wt.shape[0], wt.shape[1])


def _wkxk_mat(wt, cpad):
    # (O, C, kh, kw) -> (O, kh*kw*Cp); column = (ky*kw + kx)*Cp + c, matching
    # the kernel's tap-major / channel-minor im2col layout.
    o, c, kh, kw = wt.shape
    wt = jnp.transpose(wt, (0, 2, 3, 1))                    # (O, kh, kw, C)
    if cpad > c:
        wt = jnp.pad(wt, ((0, 0), (0, 0), (0, 0), (0, cpad - c)))
    return wt.reshape(o, kh * kw * cpad)


@functools.partial(jax.jit, static_argnames=("mxu_dtype",))
def inception_a(x_nchw, p, mxu_dtype=jnp.bfloat16):
    N, cin, H, W = x_nchw.shape
    HW = H * W                                  # 256 here (multiple of 128)
    cinp = _round_up(cin, 8)

    # x stays native NCHW; only fold HW and zero-pad channels to a sublane mult.
    x3 = x_nchw.reshape(N, cin, HW)
    if cinp > cin:
        x3 = jnp.pad(x3, ((0, 0), (0, cinp - cin), (0, 0)))

    # Column index of every flattened pixel (for in-kernel halo masking).
    col = jnp.broadcast_to(jnp.arange(W, dtype=jnp.int32), (H, W)).reshape(1, HW)

    # ---- weight repacking into W(Cout, K) for Y = W @ X(K, HW) ----
    w1 = jnp.concatenate([_w1x1_mat(p["b1_w"]), _w1x1_mat(p["b3_1_w"]),
                          _w1x1_mat(p["b5_1_w"])], axis=0)          # (48, cin)
    if cinp > cin:
        w1 = jnp.pad(w1, ((0, 0), (0, cinp - cin)))
    b1c = jnp.concatenate([p["b1_b"], p["b3_1_b"], p["b5_1_b"]]).reshape(48, 1)

    # avgpool3x3(count_include_pad=True) + 1x1  ==  3x3 conv with weight wp/9
    wp2 = _w1x1_mat(p["pool_w"])
    if cinp > cin:
        wp2 = jnp.pad(wp2, ((0, 0), (0, cinp - cin)))
    wpool = jnp.tile(wp2 * (1.0 / 9.0), (1, 9))                      # (24, 9*cinp)
    bpool = p["pool_b"].reshape(24, 1)

    w5 = _wkxk_mat(p["b5_2_w"], 16)                                  # (24, 400)
    b5 = p["b5_2_b"].reshape(24, 1)
    w3a = _wkxk_mat(p["b3_2_w"], 16)                                 # (24, 144)
    b3a = p["b3_2_b"].reshape(24, 1)
    w3b = _wkxk_mat(p["b3_3_w"], 24)                                 # (24, 216)
    b3b = p["b3_3_b"].reshape(24, 1)

    # MXU operands in mxu_dtype (bf16 default); biases / accumulation stay f32.
    w1, wpool, w5, w3a, w3b = (a.astype(mxu_dtype)
                               for a in (w1, wpool, w5, w3a, w3b))

    kmax = max(9 * cinp, 9 * 16, 25 * 16, 9 * 24)

    args = (col, x3, w1, b1c, wpool, bpool, w5, b5, w3a, b3a, w3b, b3b)

    def _full(a):
        nd = a.ndim
        return pl.BlockSpec(a.shape, lambda b, nd=nd: (0,) * nd)

    in_specs = [
        _full(col),                                            # (1, HW) int32
        pl.BlockSpec((None, cinp, HW), lambda b: (b, 0, 0)),   # one image/step
    ] + [_full(a) for a in args[2:]]                           # small weights

    out = pl.pallas_call(
        _make_kernel(H, W, cinp, mxu_dtype),
        out_shape=jax.ShapeDtypeStruct((N, 88, HW), jnp.float32),
        grid=(N,),
        in_specs=in_specs,
        out_specs=pl.BlockSpec((None, 88, HW), lambda b: (b, 0, 0)),
        scratch_shapes=[pltpu.VMEM((kmax, HW), mxu_dtype)],    # shared im2col
        compiler_params=pltpu.CompilerParams(
            dimension_semantics=("parallel",),                 # 2 TCs on v7x
            vmem_limit_bytes=32 * 1024 * 1024),
    )(*args)

    # (N, 88, HW) is already NCHW channel-major; reshape is free.
    return out.reshape(N, 88, H, W)


# ----------------------------------------------------------------------------
# Pure-JAX reference (lax convolutions) for a correctness check
# ----------------------------------------------------------------------------
def _ref_conv(x, w, b, pad):
    y = lax.conv_general_dilated(
        x, w, window_strides=(1, 1), padding=[(pad, pad), (pad, pad)],
        dimension_numbers=("NCHW", "OIHW", "NCHW"))
    return y + b.reshape(1, -1, 1, 1)


def _ref_avgpool(x):
    s = lax.reduce_window(x, 0.0, lax.add, (1, 1, 3, 3), (1, 1, 1, 1),
                          [(0, 0), (0, 0), (1, 1), (1, 1)])
    return s / 9.0


def _ref_inception(x, p):
    bp = _ref_conv(_ref_avgpool(x), p["pool_w"], p["pool_b"], 0)
    b1 = _ref_conv(x, p["b1_w"], p["b1_b"], 0)
    b3 = _ref_conv(x, p["b3_1_w"], p["b3_1_b"], 0)
    b3 = _ref_conv(b3, p["b3_2_w"], p["b3_2_b"], 1)
    b3 = _ref_conv(b3, p["b3_3_w"], p["b3_3_b"], 1)
    b5 = _ref_conv(x, p["b5_1_w"], p["b5_1_b"], 0)
    b5 = _ref_conv(b5, p["b5_2_w"], p["b5_2_b"], 2)
    return jnp.concatenate([bp, b1, b5, b3], axis=1)


# ----------------------------------------------------------------------------
def _make_params(key, in_channel):
    shapes = {
        "pool_w": (24, in_channel, 1, 1), "pool_b": (24,),
        "b1_w": (16, in_channel, 1, 1), "b1_b": (16,),
        "b5_1_w": (16, in_channel, 1, 1), "b5_1_b": (16,),
        "b5_2_w": (24, 16, 5, 5), "b5_2_b": (24,),
        "b3_1_w": (16, in_channel, 1, 1), "b3_1_b": (16,),
        "b3_2_w": (24, 16, 3, 3), "b3_2_b": (24,),
        "b3_3_w": (24, 24, 3, 3), "b3_3_b": (24,),
    }
    params = {}
    keys = jax.random.split(key, len(shapes))
    for k_, (name, shp) in zip(keys, sorted(shapes.items())):
        params[name] = 0.1 * jax.random.normal(k_, shp, dtype=jnp.float32)
    return params


if __name__ == "__main__":
    key = jax.random.PRNGKey(0)
    k_x, k_p = jax.random.split(key)

    N, C, H, W = 2, 4, 16, 16
    x = jax.random.normal(k_x, (N, C, H, W), dtype=jnp.float32)
    params = _make_params(k_p, C)

    ref = jax.block_until_ready(_ref_inception(x, params))

    # Exact-parity path (f32 MXU operands).
    out_f32 = jax.block_until_ready(inception_a(x, params, mxu_dtype=jnp.float32))
    assert out_f32.shape == (N, 88, H, W), out_f32.shape
    assert jnp.allclose(out_f32, ref, atol=1e-4, rtol=1e-4), float(
        jnp.max(jnp.abs(out_f32 - ref)))

    # Default perf path (bf16 MXU operands, f32 accumulation).
    out_bf16 = jax.block_until_ready(inception_a(x, params))
    assert out_bf16.shape == (N, 88, H, W), out_bf16.shape
    assert jnp.allclose(out_bf16, ref, atol=6e-2, rtol=6e-2), float(
        jnp.max(jnp.abs(out_bf16 - ref)))

    print("KERNEL_OK")
</pallas_src>

<mosaic_0001>
module attributes {stable_mosaic.version = 11 : i64} {
  func.func @kernel(%arg0: i32, %arg1: memref<1x256xi32, #tpu.memory_space<vmem>>, %arg2: memref<1x8x256xf32, #tpu.memory_space<vmem>>, %arg3: memref<48x8xf32, #tpu.memory_space<vmem>>, %arg4: memref<48x1xf32, #tpu.memory_space<vmem>>, %arg5: memref<24x72xf32, #tpu.memory_space<vmem>>, %arg6: memref<24x1xf32, #tpu.memory_space<vmem>>, %arg7: memref<24x400xf32, #tpu.memory_space<vmem>>, %arg8: memref<24x1xf32, #tpu.memory_space<vmem>>, %arg9: memref<24x144xf32, #tpu.memory_space<vmem>>, %arg10: memref<24x1xf32, #tpu.memory_space<vmem>>, %arg11: memref<24x216xf32, #tpu.memory_space<vmem>>, %arg12: memref<24x1xf32, #tpu.memory_space<vmem>>, %arg13: memref<1x88x256xf32, #tpu.memory_space<vmem>>, %arg14: memref<400x256xf32, #tpu.memory_space<vmem>>) attributes {dimension_semantics = [#tpu.dimension_semantics<parallel>], iteration_bounds = array<i64: 2>, scalar_prefetch = 0 : i64, scratch_operands = 1 : i64, tpu.core_type = #tpu.core_type<tc>, window_params = [{pipeline_mode = #tpu.pipeline_mode<synchronous>, transform_indices = @transform_0, window_bounds = array<i64: 1, 256>}, {transform_indices = @transform_1, window_bounds = array<i64: 1, 8, 256>}, {pipeline_mode = #tpu.pipeline_mode<synchronous>, transform_indices = @transform_2, window_bounds = array<i64: 48, 8>}, {pipeline_mode = #tpu.pipeline_mode<synchronous>, transform_indices = @transform_3, window_bounds = array<i64: 48, 1>}, {pipeline_mode = #tpu.pipeline_mode<synchronous>, transform_indices = @transform_4, window_bounds = array<i64: 24, 72>}, {pipeline_mode = #tpu.pipeline_mode<synchronous>, transform_indices = @transform_5, window_bounds = array<i64: 24, 1>}, {pipeline_mode = #tpu.pipeline_mode<synchronous>, transform_indices = @transform_6, window_bounds = array<i64: 24, 400>}, {pipeline_mode = #tpu.pipeline_mode<synchronous>, transform_indices = @transform_7, window_bounds = array<i64: 24, 1>}, {pipeline_mode = #tpu.pipeline_mode<synchronous>, transform_indices = @transform_8, window_bounds = array<i64: 24, 144>}, {pipeline_mode = #tpu.pipeline_mode<synchronous>, transform_indices = @transform_9, window_bounds = array<i64: 24, 1>}, {pipeline_mode = #tpu.pipeline_mode<synchronous>, transform_indices = @transform_10, window_bounds = array<i64: 24, 216>}, {pipeline_mode = #tpu.pipeline_mode<synchronous>, transform_indices = @transform_11, window_bounds = array<i64: 24, 1>}, {transform_indices = @transform_12, window_bounds = array<i64: 1, 88, 256>}]} {
    %c0 = arith.constant 0 : index
    %c0_0 = arith.constant 0 : index
    %0 = vector.load %arg1[%c0, %c0_0] : memref<1x256xi32, #tpu.memory_space<vmem>>, vector<1x256xi32>
    %c0_1 = arith.constant 0 : index
    %c0_2 = arith.constant 0 : index
    %c0_3 = arith.constant 0 : index
    %1 = vector.load %arg2[%c0_1, %c0_2, %c0_3] : memref<1x8x256xf32, #tpu.memory_space<vmem>>, vector<1x8x256xf32>
    %2 = vector.shape_cast %1 : vector<1x8x256xf32> to vector<8x256xf32>
    %c0_4 = arith.constant 0 : index
    %c0_5 = arith.constant 0 : index
    %3 = vector.load %arg3[%c0_4, %c0_5] : memref<48x8xf32, #tpu.memory_space<vmem>>, vector<48x8xf32>
    %cst = arith.constant dense<0.000000e+00> : vector<48x256xf32>
    %4 = tpu.matmul %3, %2, %cst {dimension_numbers = #tpu.dot_dimension_numbers<[1], [0], [0], [1], [0, 0, 1, 1], [], []>} : vector<48x8xf32>, vector<8x256xf32>, vector<48x256xf32> -> vector<48x256xf32>
    %c0_6 = arith.constant 0 : index
    %c0_7 = arith.constant 0 : index
    %5 = vector.load %arg4[%c0_6, %c0_7] : memref<48x1xf32, #tpu.memory_space<vmem>>, vector<48x1xf32>
    %6 = vector.broadcast %5 : vector<48x1xf32> to vector<48x256xf32>
    %7 = arith.addf %4, %6 : vector<48x256xf32>
    %8 = vector.extract_strided_slice %7 {offsets = [0, 0], sizes = [16, 256], strides = [1, 1]} : vector<48x256xf32> to vector<16x256xf32>
    %9 = vector.extract_strided_slice %7 {offsets = [16, 0], sizes = [16, 256], strides = [1, 1]} : vector<48x256xf32> to vector<16x256xf32>
    %10 = vector.extract_strided_slice %7 {offsets = [32, 0], sizes = [16, 256], strides = [1, 1]} : vector<48x256xf32> to vector<16x256xf32>
    %c0_8 = arith.constant 0 : index
    %c0_9 = arith.constant 0 : index
    %11 = vector.load %arg6[%c0_8, %c0_9] : memref<24x1xf32, #tpu.memory_space<vmem>>, vector<24x1xf32>
    %cst_10 = arith.constant 0.000000e+00 : f32
    %12 = vector.broadcast %cst_10 : f32 to vector<8x17xf32>
    %13 = vector.extract_strided_slice %2 {offsets = [0, 0], sizes = [8, 239], strides = [1, 1]} : vector<8x256xf32> to vector<8x239xf32>
    %14 = tpu.concatenate %12, %13 in 1 : vector<8x17xf32>, vector<8x239xf32> -> vector<8x256xf32>
    %c-1_i32 = arith.constant -1 : i32
    %15 = vector.broadcast %c-1_i32 : i32 to vector<1x256xi32>
    %16 = arith.addi %0, %15 : vector<1x256xi32>
    %c0_i32 = arith.constant 0 : i32
    %17 = vector.broadcast %c0_i32 : i32 to vector<1x256xi32>
    %18 = arith.cmpi sge, %16, %17 : vector<1x256xi32>
    %c-1_i32_11 = arith.constant -1 : i32
    %19 = vector.broadcast %c-1_i32_11 : i32 to vector<1x256xi32>
    %20 = arith.addi %0, %19 : vector<1x256xi32>
    %c16_i32 = arith.constant 16 : i32
    %21 = vector.broadcast %c16_i32 : i32 to vector<1x256xi32>
    %22 = arith.cmpi slt, %20, %21 : vector<1x256xi32>
    %23 = arith.andi %18, %22 : vector<1x256xi1>
    %24 = arith.extui %23 : vector<1x256xi1> to vector<1x256xi32>
    %25 = arith.sitofp %24 : vector<1x256xi32> to vector<1x256xf32>
    %26 = vector.broadcast %25 : vector<1x256xf32> to vector<8x256xf32>
    %27 = arith.mulf %14, %26 : vector<8x256xf32>
    %c0_12 = arith.constant 0 : index
    %c0_13 = arith.constant 0 : index
    %28 = vector.load %arg14[%c0_12, %c0_13] : memref<400x256xf32, #tpu.memory_space<vmem>>, vector<8x256xf32>
    tpu.vector_store %arg14[%c0_12, %c0_13], %27 {strides = array<i32>} : memref<400x256xf32, #tpu.memory_space<vmem>>, vector<8x256xf32>,
    %cst_14 = arith.constant 0.000000e+00 : f32
    %29 = vector.broadcast %cst_14 : f32 to vector<8x16xf32>
    %30 = vector.extract_strided_slice %2 {offsets = [0, 0], sizes = [8, 240], strides = [1, 1]} : vector<8x256xf32> to vector<8x240xf32>
    %31 = tpu.concatenate %29, %30 in 1 : vector<8x16xf32>, vector<8x240xf32> -> vector<8x256xf32>
    %c8 = arith.constant 8 : index
    %c0_15 = arith.constant 0 : index
    %32 = vector.load %arg14[%c8, %c0_15] : memref<400x256xf32, #tpu.memory_space<vmem>>, vector<8x256xf32>
    tpu.vector_store %arg14[%c8, %c0_15], %31 {strides = array<i32>} : memref<400x256xf32, #tpu.memory_space<vmem>>, vector<8x256xf32>,
    %cst_16 = arith.constant 0.000000e+00 : f32
    %33 = vector.broadcast %cst_16 : f32 to vector<8x15xf32>
    %34 = vector.extract_strided_slice %2 {offsets = [0, 0], sizes = [8, 241], strides = [1, 1]} : vector<8x256xf32> to vector<8x241xf32>
    %35 = tpu.concatenate %33, %34 in 1 : vector<8x15xf32>, vector<8x241xf32> -> vector<8x256xf32>
    %c1_i32 = arith.constant 1 : i32
    %36 = vector.broadcast %c1_i32 : i32 to vector<1x256xi32>
    %37 = arith.addi %0, %36 : vector<1x256xi32>
    %c0_i32_17 = arith.constant 0 : i32
    %38 = vector.broadcast %c0_i32_17 : i32 to vector<1x256xi32>
    %39 = arith.cmpi sge, %37, %38 : vector<1x256xi32>
    %c1_i32_18 = arith.constant 1 : i32
    %40 = vector.broadcast %c1_i32_18 : i32 to vector<1x256xi32>
    %41 = arith.addi %0, %40 : vector<1x256xi32>
    %c16_i32_19 = arith.constant 16 : i32
    %42 = vector.broadcast %c16_i32_19 : i32 to vector<1x256xi32>
    %43 = arith.cmpi slt, %41, %42 : vector<1x256xi32>
    %44 = arith.andi %39, %43 : vector<1x256xi1>
    %45 = arith.extui %44 : vector<1x256xi1> to vector<1x256xi32>
    %46 = arith.sitofp %45 : vector<1x256xi32> to vector<1x256xf32>
    %47 = vector.broadcast %46 : vector<1x256xf32> to vector<8x256xf32>
    %48 = arith.mulf %35, %47 : vector<8x256xf32>
    %c16 = arith.constant 16 : index
    %c0_20 = arith.constant 0 : index
    %49 = vector.load %arg14[%c16, %c0_20] : memref<400x256xf32, #tpu.memory_space<vmem>>, vector<8x256xf32>
    tpu.vector_store %arg14[%c16, %c0_20], %48 {strides = array<i32>} : memref<400x256xf32, #tpu.memory_space<vmem>>, vector<8x256xf32>,
    %cst_21 = arith.constant 0.000000e+00 : f32
    %50 = vector.broadcast %cst_21 : f32 to vector<8x1xf32>
    %51 = vector.extract_strided_slice %2 {offsets = [0, 0], sizes = [8, 255], strides = [1, 1]} : vector<8x256xf32> to vector<8x255xf32>
    %52 = tpu.concatenate %50, %51 in 1 : vector<8x1xf32>, vector<8x255xf32> -> vector<8x256xf32>
    %c-1_i32_22 = arith.constant -1 : i32
    %53 = vector.broadcast %c-1_i32_22 : i32 to vector<1x256xi32>
    %54 = arith.addi %0, %53 : vector<1x256xi32>
    %c0_i32_23 = arith.constant 0 : i32
    %55 = vector.broadcast %c0_i32_23 : i32 to vector<1x256xi32>
    %56 = arith.cmpi sge, %54, %55 : vector<1x256xi32>
    %c-1_i32_24 = arith.constant -1 : i32
    %57 = vector.broadcast %c-1_i32_24 : i32 to vector<1x256xi32>
    %58 = arith.addi %0, %57 : vector<1x256xi32>
    %c16_i32_25 = arith.constant 16 : i32
    %59 = vector.broadcast %c16_i32_25 : i32 to vector<1x256xi32>
    %60 = arith.cmpi slt, %58, %59 : vector<1x256xi32>
    %61 = arith.andi %56, %60 : vector<1x256xi1>
    %62 = arith.extui %61 : vector<1x256xi1> to vector<1x256xi32>
    %63 = arith.sitofp %62 : vector<1x256xi32> to vector<1x256xf32>
    %64 = vector.broadcast %63 : vector<1x256xf32> to vector<8x256xf32>
    %65 = arith.mulf %52, %64 : vector<8x256xf32>
    %c24 = arith.constant 24 : index
    %c0_26 = arith.constant 0 : index
    %66 = vector.load %arg14[%c24, %c0_26] : memref<400x256xf32, #tpu.memory_space<vmem>>, vector<8x256xf32>
    tpu.vector_store %arg14[%c24, %c0_26], %65 {strides = array<i32>} : memref<400x256xf32, #tpu.memory_space<vmem>>, vector<8x256xf32>,
    %c32 = arith.constant 32 : index
    %c0_27 = arith.constant 0 : index
    %67 = vector.load %arg14[%c32, %c0_27] : memref<400x256xf32, #tpu.memory_space<vmem>>, vector<8x256xf32>
    tpu.vector_store %arg14[%c32, %c0_27], %2 {strides = array<i32>} : memref<400x256xf32, #tpu.memory_space<vmem>>, vector<8x256xf32>,
    %68 = vector.extract_strided_slice %2 {offsets = [0, 1], sizes = [8, 255], strides = [1, 1]} : vector<8x256xf32> to vector<8x255xf32>
    %cst_28 = arith.constant 0.000000e+00 : f32
    %69 = vector.broadcast %cst_28 : f32 to vector<8x1xf32>
    %70 = tpu.concatenate %68, %69 in 1 : vector<8x255xf32>, vector<8x1xf32> -> vector<8x256xf32>
    %c1_i32_29 = arith.constant 1 : i32
    %71 = vector.broadcast %c1_i32_29 : i32 to vector<1x256xi32>
    %72 = arith.addi %0, %71 : vector<1x256xi32>
    %c0_i32_30 = arith.constant 0 : i32
    %73 = vector.broadcast %c0_i32_30 : i32 to vector<1x256xi32>
    %74 = arith.cmpi sge, %72, %73 : vector<1x256xi32>
    %c1_i32_31 = arith.constant 1 : i32
    %75 = vector.broadcast %c1_i32_31 : i32 to vector<1x256xi32>
    %76 = arith.addi %0, %75 : vector<1x256xi32>
    %c16_i32_32 = arith.constant 16 : i32
    %77 = vector.broadcast %c16_i32_32 : i32 to vector<1x256xi32>
    %78 = arith.cmpi slt, %76, %77 : vector<1x256xi32>
    %79 = arith.andi %74, %78 : vector<1x256xi1>
    %80 = arith.extui %79 : vector<1x256xi1> to vector<1x256xi32>
    %81 = arith.sitofp %80 : vector<1x256xi32> to vector<1x256xf32>
    %82 = vector.broadcast %81 : vector<1x256xf32> to vector<8x256xf32>
    %83 = arith.mulf %70, %82 : vector<8x256xf32>
    %c40 = arith.constant 40 : index
    %c0_33 = arith.constant 0 : index
    %84 = vector.load %arg14[%c40, %c0_33] : memref<400x256xf32, #tpu.memory_space<vmem>>, vector<8x256xf32>
    tpu.vector_store %arg14[%c40, %c0_33], %83 {strides = array<i32>} : memref<400x256xf32, #tpu.memory_space<vmem>>, vector<8x256xf32>,
    %85 = vector.extract_strided_slice %2 {offsets = [0, 15], sizes = [8, 241], strides = [1, 1]} : vector<8x256xf32> to vector<8x241xf32>
    %cst_34 = arith.constant 0.000000e+00 : f32
    %86 = vector.broadcast %cst_34 : f32 to vector<8x15xf32>
    %87 = tpu.concatenate %85, %86 in 1 : vector<8x241xf32>, vector<8x15xf32> -> vector<8x256xf32>
    %c-1_i32_35 = arith.constant -1 : i32
    %88 = vector.broadcast %c-1_i32_35 : i32 to vector<1x256xi32>
    %89 = arith.addi %0, %88 : vector<1x256xi32>
    %c0_i32_36 = arith.constant 0 : i32
    %90 = vector.broadcast %c0_i32_36 : i32 to vector<1x256xi32>
    %91 = arith.cmpi sge, %89, %90 : vector<1x256xi32>
    %c-1_i32_37 = arith.constant -1 : i32
    %92 = vector.broadcast %c-1_i32_37 : i32 to vector<1x256xi32>
    %93 = arith.addi %0, %92 : vector<1x256xi32>
    %c16_i32_38 = arith.constant 16 : i32
    %94 = vector.broadcast %c16_i32_38 : i32 to vector<1x256xi32>
    %95 = arith.cmpi slt, %93, %94 : vector<1x256xi32>
    %96 = arith.andi %91, %95 : vector<1x256xi1>
    %97 = arith.extui %96 : vector<1x256xi1> to vector<1x256xi32>
    %98 = arith.sitofp %97 : vector<1x256xi32> to vector<1x256xf32>
    %99 = vector.broadcast %98 : vector<1x256xf32> to vector<8x256xf32>
    %100 = arith.mulf %87, %99 : vector<8x256xf32>
    %c48 = arith.constant 48 : index
    %c0_39 = arith.constant 0 : index
    %101 = vector.load %arg14[%c48, %c0_39] : memref<400x256xf32, #tpu.memory_space<vmem>>, vector<8x256xf32>
    tpu.vector_store %arg14[%c48, %c0_39], %100 {strides = array<i32>} : memref<400x256xf32, #tpu.memory_space<vmem>>, vector<8x256xf32>,
    %102 = vector.extract_strided_slice %2 {offsets = [0, 16], sizes = [8, 240], strides = [1, 1]} : vector<8x256xf32> to vector<8x240xf32>
    %cst_40 = arith.constant 0.000000e+00 : f32
    %103 = vector.broadcast %cst_40 : f32 to vector<8x16xf32>
    %104 = tpu.concatenate %102, %103 in 1 : vector<8x240xf32>, vector<8x16xf32> -> vector<8x256xf32>
    %c56 = arith.constant 56 : index
    %c0_41 = arith.constant 0 : index
    %105 = vector.load %arg14[%c56, %c0_41] : memref<400x256xf32, #tpu.memory_space<vmem>>, vector<8x256xf32>
    tpu.vector_store %arg14[%c56, %c0_41], %104 {strides = array<i32>} : memref<400x256xf32, #tpu.memory_space<vmem>>, vector<8x256xf32>,
    %106 = vector.extract_strided_slice %2 {offsets = [0, 17], sizes = [8, 239], strides = [1, 1]} : vector<8x256xf32> to vector<8x239xf32>
    %cst_42 = arith.constant 0.000000e+00 : f32
    %107 = vector.broadcast %cst_42 : f32 to vector<8x17xf32>
    %108 = tpu.concatenate %106, %107 in 1 : vector<8x239xf32>, vector<8x17xf32> -> vector<8x256xf32>
    %c1_i32_43 = arith.constant 1 : i32
    %109 = vector.broadcast %c1_i32_43 : i32 to vector<1x256xi32>
    %110 = arith.addi %0, %109 : vector<1x256xi32>
    %c0_i32_44 = arith.constant 0 : i32
    %111 = vector.broadcast %c0_i32_44 : i32 to vector<1x256xi32>
    %112 = arith.cmpi sge, %110, %111 : vector<1x256xi32>
    %c1_i32_45 = arith.constant 1 : i32
    %113 = vector.broadcast %c1_i32_45 : i32 to vector<1x256xi32>
    %114 = arith.addi %0, %113 : vector<1x256xi32>
    %c16_i32_46 = arith.constant 16 : i32
    %115 = vector.broadcast %c16_i32_46 : i32 to vector<1x256xi32>
    %116 = arith.cmpi slt, %114, %115 : vector<1x256xi32>
    %117 = arith.andi %112, %116 : vector<1x256xi1>
    %118 = arith.extui %117 : vector<1x256xi1> to vector<1x256xi32>
    %119 = arith.sitofp %118 : vector<1x256xi32> to vector<1x256xf32>
    %120 = vector.broadcast %119 : vector<1x256xf32> to vector<8x256xf32>
    %121 = arith.mulf %108, %120 : vector<8x256xf32>
    %c64 = arith.constant 64 : index
    %c0_47 = arith.constant 0 : index
    %122 = vector.load %arg14[%c64, %c0_47] : memref<400x256xf32, #tpu.memory_space<vmem>>, vector<8x256xf32>
    tpu.vector_store %arg14[%c64, %c0_47], %121 {strides = array<i32>} : memref<400x256xf32, #tpu.memory_space<vmem>>, vector<8x256xf32>,
    %c0_48 = arith.constant 0 : index
    %c0_49 = arith.constant 0 : index
    %123 = vector.load %arg14[%c0_48, %c0_49] : memref<400x256xf32, #tpu.memory_space<vmem>>, vector<72x256xf32>
    %c0_50 = arith.constant 0 : index
    %c0_51 = arith.constant 0 : index
    %124 = vector.load %arg5[%c0_50, %c0_51] : memref<24x72xf32, #tpu.memory_space<vmem>>, vector<24x72xf32>
    %cst_52 = arith.constant dense<0.000000e+00> : vector<24x256xf32>
    %125 = tpu.matmul %124, %123, %cst_52 {dimension_numbers = #tpu.dot_dimension_numbers<[1], [0], [0], [1], [0, 0, 1, 1], [], []>} : vector<24x72xf32>, vector<72x256xf32>, vector<24x256xf32> -> vector<24x256xf32>
    %126 = vector.broadcast %11 : vector<24x1xf32> to vector<24x256xf32>
    %127 = arith.addf %125, %126 : vector<24x256xf32>
    %c0_53 = arith.constant 0 : index
    %c0_54 = arith.constant 0 : index
    %128 = vector.load %arg8[%c0_53, %c0_54] : memref<24x1xf32, #tpu.memory_space<vmem>>, vector<24x1xf32>
    %cst_55 = arith.constant 0.000000e+00 : f32
    %129 = vector.broadcast %cst_55 : f32 to vector<16x34xf32>
    %130 = vector.extract_strided_slice %10 {offsets = [0, 0], sizes = [16, 222], strides = [1, 1]} : vector<16x256xf32> to vector<16x222xf32>
    %131 = tpu.concatenate %129, %130 in 1 : vector<16x34xf32>, vector<16x222xf32> -> vector<16x256xf32>
    %c-2_i32 = arith.constant -2 : i32
    %132 = vector.broadcast %c-2_i32 : i32 to vector<1x256xi32>
    %133 = arith.addi %0, %132 : vector<1x256xi32>
    %c0_i32_56 = arith.constant 0 : i32
    %134 = vector.broadcast %c0_i32_56 : i32 to vector<1x256xi32>
    %135 = arith.cmpi sge, %133, %134 : vector<1x256xi32>
    %c-2_i32_57 = arith.constant -2 : i32
    %136 = vector.broadcast %c-2_i32_57 : i32 to vector<1x256xi32>
    %137 = arith.addi %0, %136 : vector<1x256xi32>
    %c16_i32_58 = arith.constant 16 : i32
    %138 = vector.broadcast %c16_i32_58 : i32 to vector<1x256xi32>
    %139 = arith.cmpi slt, %137, %138 : vector<1x256xi32>
    %140 = arith.andi %135, %139 : vector<1x256xi1>
    %141 = arith.extui %140 : vector<1x256xi1> to vector<1x256xi32>
    %142 = arith.sitofp %141 : vector<1x256xi32> to vector<1x256xf32>
    %143 = vector.broadcast %142 : vector<1x256xf32> to vector<16x256xf32>
    %144 = arith.mulf %131, %143 : vector<16x256xf32>
    %c0_59 = arith.constant 0 : index
    %c0_60 = arith.constant 0 : index
    %145 = vector.load %arg14[%c0_59, %c0_60] : memref<400x256xf32, #tpu.memory_space<vmem>>, vector<16x256xf32>
    tpu.vector_store %arg14[%c0_59, %c0_60], %144 {strides = array<i32>} : memref<400x256xf32, #tpu.memory_space<vmem>>, vector<16x256xf32>,
    %cst_61 = arith.constant 0.000000e+00 : f32
    %146 = vector.broadcast %cst_61 : f32 to vector<16x33xf32>
    %147 = vector.extract_strided_slice %10 {offsets = [0, 0], sizes = [16, 223], strides = [1, 1]} : vector<16x256xf32> to vector<16x223xf32>
    %148 = tpu.concatenate %146, %147 in 1 : vector<16x33xf32>, vector<16x223xf32> -> vector<16x256xf32>
    %c-1_i32_62 = arith.constant -1 : i32
    %149 = vector.broadcast %c-1_i32_62 : i32 to vector<1x256xi32>
    %150 = arith.addi %0, %149 : vector<1x256xi32>
    %c0_i32_63 = arith.constant 0 : i32
    %151 = vector.broadcast %c0_i32_63 : i32 to vector<1x256xi32>
    %152 = arith.cmpi sge, %150, %151 : vector<1x256xi32>
    %c-1_i32_64 = arith.constant -1 : i32
    %153 = vector.broadcast %c-1_i32_64 : i32 to vector<1x256xi32>
    %154 = arith.addi %0, %153 : vector<1x256xi32>
    %c16_i32_65 = arith.constant 16 : i32
    %155 = vector.broadcast %c16_i32_65 : i32 to vector<1x256xi32>
    %156 = arith.cmpi slt, %154, %155 : vector<1x256xi32>
    %157 = arith.andi %152, %156 : vector<1x256xi1>
    %158 = arith.extui %157 : vector<1x256xi1> to vector<1x256xi32>
    %159 = arith.sitofp %158 : vector<1x256xi32> to vector<1x256xf32>
    %160 = vector.broadcast %159 : vector<1x256xf32> to vector<16x256xf32>
    %161 = arith.mulf %148, %160 : vector<16x256xf32>
    %c16_66 = arith.constant 16 : index
    %c0_67 = arith.constant 0 : index
    %162 = vector.load %arg14[%c16_66, %c0_67] : memref<400x256xf32, #tpu.memory_space<vmem>>, vector<16x256xf32>
    tpu.vector_store %arg14[%c16_66, %c0_67], %161 {strides = array<i32>} : memref<400x256xf32, #tpu.memory_space<vmem>>, vector<16x256xf32>,
    %cst_68 = arith.constant 0.000000e+00 : f32
    %163 = vector.broadcast %cst_68 : f32 to vector<16x32xf32>
    %164 = vector.extract_strided_slice %10 {offsets = [0, 0], sizes = [16, 224], strides = [1, 1]} : vector<16x256xf32> to vector<16x224xf32>
    %165 = tpu.concatenate %163, %164 in 1 : vector<16x32xf32>, vector<16x224xf32> -> vector<16x256xf32>
    %c32_69 = arith.constant 32 : index
    %c0_70 = arith.constant 0 : index
    %166 = vector.load %arg14[%c32_69, %c0_70] : memref<400x256xf32, #tpu.memory_space<vmem>>, vector<16x256xf32>
    tpu.vector_store %arg14[%c32_69, %c0_70], %165 {strides = array<i32>} : memref<400x256xf32, #tpu.memory_space<vmem>>, vector<16x256xf32>,
    %cst_71 = arith.constant 0.000000e+00 : f32
    %167 = vector.broadcast %cst_71 : f32 to vector<16x31xf32>
    %168 = vector.extract_strided_slice %10 {offsets = [0, 0], sizes = [16, 225], strides = [1, 1]} : vector<16x256xf32> to vector<16x225xf32>
    %169 = tpu.concatenate %167, %168 in 1 : vector<16x31xf32>, vector<16x225xf32> -> vector<16x256xf32>
    %c1_i32_72 = arith.constant 1 : i32
    %170 = vector.broadcast %c1_i32_72 : i32 to vector<1x256xi32>
    %171 = arith.addi %0, %170 : vector<1x256xi32>
    %c0_i32_73 = arith.constant 0 : i32
    %172 = vector.broadcast %c0_i32_73 : i32 to vector<1x256xi32>
    %173 = arith.cmpi sge, %171, %172 : vector<1x256xi32>
    %c1_i32_74 = arith.constant 1 : i32
    %174 = vector.broadcast %c1_i32_74 : i32 to vector<1x256xi32>
    %175 = arith.addi %0, %174 : vector<1x256xi32>
    %c16_i32_75 = arith.constant 16 : i32
    %176 = vector.broadcast %c16_i32_75 : i32 to vector<1x256xi32>
    %177 = arith.cmpi slt, %175, %176 : vector<1x256xi32>
    %178 = arith.andi %173, %177 : vector<1x256xi1>
    %179 = arith.extui %178 : vector<1x256xi1> to vector<1x256xi32>
    %180 = arith.sitofp %179 : vector<1x256xi32> to vector<1x256xf32>
    %181 = vector.broadcast %180 : vector<1x256xf32> to vector<16x256xf32>
    %182 = arith.mulf %169, %181 : vector<16x256xf32>
    %c48_76 = arith.constant 48 : index
    %c0_77 = arith.constant 0 : index
    %183 = vector.load %arg14[%c48_76, %c0_77] : memref<400x256xf32, #tpu.memory_space<vmem>>, vector<16x256xf32>
    tpu.vector_store %arg14[%c48_76, %c0_77], %182 {strides = array<i32>} : memref<400x256xf32, #tpu.memory_space<vmem>>, vector<16x256xf32>,
    %cst_78 = arith.constant 0.000000e+00 : f32
    %184 = vector.broadcast %cst_78 : f32 to vector<16x30xf32>
    %185 = vector.extract_strided_slice %10 {offsets = [0, 0], sizes = [16, 226], strides = [1, 1]} : vector<16x256xf32> to vector<16x226xf32>
    %186 = tpu.concatenate %184, %185 in 1 : vector<16x30xf32>, vector<16x226xf32> -> vector<16x256xf32>
    %c2_i32 = arith.constant 2 : i32
    %187 = vector.broadcast %c2_i32 : i32 to vector<1x256xi32>
    %188 = arith.addi %0, %187 : vector<1x256xi32>
    %c0_i32_79 = arith.constant 0 : i32
    %189 = vector.broadcast %c0_i32_79 : i32 to vector<1x256xi32>
    %190 = arith.cmpi sge, %188, %189 : vector<1x256xi32>
    %c2_i32_80 = arith.constant 2 : i32
    %191 = vector.broadcast %c2_i32_80 : i32 to vector<1x256xi32>
    %192 = arith.addi %0, %191 : vector<1x256xi32>
    %c16_i32_81 = arith.constant 16 : i32
    %193 = vector.broadcast %c16_i32_81 : i32 to vector<1x256xi32>
    %194 = arith.cmpi slt, %192, %193 : vector<1x256xi32>
    %195 = arith.andi %190, %194 : vector<1x256xi1>
    %196 = arith.extui %195 : vector<1x256xi1> to vector<1x256xi32>
    %197 = arith.sitofp %196 : vector<1x256xi32> to vector<1x256xf32>
    %198 = vector.broadcast %197 : vector<1x256xf32> to vector<16x256xf32>
    %199 = arith.mulf %186, %198 : vector<16x256xf32>
    %c64_82 = arith.constant 64 : index
    %c0_83 = arith.constant 0 : index
    %200 = vector.load %arg14[%c64_82, %c0_83] : memref<400x256xf32, #tpu.memory_space<vmem>>, vector<16x256xf32>
    tpu.vector_store %arg14[%c64_82, %c0_83], %199 {strides = array<i32>} : memref<400x256xf32, #tpu.memory_space<vmem>>, vector<16x256xf32>,
    %cst_84 = arith.constant 0.000000e+00 : f32
    %201 = vector.broadcast %cst_84 : f32 to vector<16x18xf32>
    %202 = vector.extract_strided_slice %10 {offsets = [0, 0], sizes = [16, 238], strides = [1, 1]} : vector<16x256xf32> to vector<16x238xf32>
    %203 = tpu.concatenate %201, %202 in 1 : vector<16x18xf32>, vector<16x238xf32> -> vector<16x256xf32>
    %c-2_i32_85 = arith.constant -2 : i32
    %204 = vector.broadcast %c-2_i32_85 : i32 to vector<1x256xi32>
    %205 = arith.addi %0, %204 : vector<1x256xi32>
    %c0_i32_86 = arith.constant 0 : i32
    %206 = vector.broadcast %c0_i32_86 : i32 to vector<1x256xi32>
    %207 = arith.cmpi sge, %205, %206 : vector<1x256xi32>
    %c-2_i32_87 = arith.constant -2 : i32
    %208 = vector.broadcast %c-2_i32_87 : i32 to vector<1x256xi32>
    %209 = arith.addi %0, %208 : vector<1x256xi32>
    %c16_i32_88 = arith.constant 16 : i32
    %210 = vector.broadcast %c16_i32_88 : i32 to vector<1x256xi32>
    %211 = arith.cmpi slt, %209, %210 : vector<1x256xi32>
    %212 = arith.andi %207, %211 : vector<1x256xi1>
    %213 = arith.extui %212 : vector<1x256xi1> to vector<1x256xi32>
    %214 = arith.sitofp %213 : vector<1x256xi32> to vector<1x256xf32>
    %215 = vector.broadcast %214 : vector<1x256xf32> to vector<16x256xf32>
    %216 = arith.mulf %203, %215 : vector<16x256xf32>
    %c80 = arith.constant 80 : index
    %c0_89 = arith.constant 0 : index
    %217 = vector.load %arg14[%c80, %c0_89] : memref<400x256xf32, #tpu.memory_space<vmem>>, vector<16x256xf32>
    tpu.vector_store %arg14[%c80, %c0_89], %216 {strides = array<i32>} : memref<400x256xf32, #tpu.memory_space<vmem>>, vector<16x256xf32>,
    %cst_90 = arith.constant 0.000000e+00 : f32
    %218 = vector.broadcast %cst_90 : f32 to vector<16x17xf32>
    %219 = vector.extract_strided_slice %10 {offsets = [0, 0], sizes = [16, 239], strides = [1, 1]} : vector<16x256xf32> to vector<16x239xf32>
    %220 = tpu.concatenate %218, %219 in 1 : vector<16x17xf32>, vector<16x239xf32> -> vector<16x256xf32>
    %c-1_i32_91 = arith.constant -1 : i32
    %221 = vector.broadcast %c-1_i32_91 : i32 to vector<1x256xi32>
    %222 = arith.addi %0, %221 : vector<1x256xi32>
    %c0_i32_92 = arith.constant 0 : i32
    %223 = vector.broadcast %c0_i32_92 : i32 to vector<1x256xi32>
    %224 = arith.cmpi sge, %222, %223 : vector<1x256xi32>
    %c-1_i32_93 = arith.constant -1 : i32
    %225 = vector.broadcast %c-1_i32_93 : i32 to vector<1x256xi32>
    %226 = arith.addi %0, %225 : vector<1x256xi32>
    %c16_i32_94 = arith.constant 16 : i32
    %227 = vector.broadcast %c16_i32_94 : i32 to vector<1x256xi32>
    %228 = arith.cmpi slt, %226, %227 : vector<1x256xi32>
    %229 = arith.andi %224, %228 : vector<1x256xi1>
    %230 = arith.extui %229 : vector<1x256xi1> to vector<1x256xi32>
    %231 = arith.sitofp %230 : vector<1x256xi32> to vector<1x256xf32>
    %232 = vector.broadcast %231 : vector<1x256xf32> to vector<16x256xf32>
    %233 = arith.mulf %220, %232 : vector<16x256xf32>
    %c96 = arith.constant 96 : index
    %c0_95 = arith.constant 0 : index
    %234 = vector.load %arg14[%c96, %c0_95] : memref<400x256xf32, #tpu.memory_space<vmem>>, vector<16x256xf32>
    tpu.vector_store %arg14[%c96, %c0_95], %233 {strides = array<i32>} : memref<400x256xf32, #tpu.memory_space<vmem>>, vector<16x256xf32>,
    %cst_96 = arith.constant 0.000000e+00 : f32
    %235 = vector.broadcast %cst_96 : f32 to vector<16x16xf32>
    %236 = vector.extract_strided_slice %10 {offsets = [0, 0], sizes = [16, 240], strides = [1, 1]} : vector<16x256xf32> to vector<16x240xf32>
    %237 = tpu.concatenate %235, %236 in 1 : vector<16x16xf32>, vector<16x240xf32> -> vector<16x256xf32>
    %c112 = arith.constant 112 : index
    %c0_97 = arith.constant 0 : index
    %238 = vector.load %arg14[%c112, %c0_97] : memref<400x256xf32, #tpu.memory_space<vmem>>, vector<16x256xf32>
    tpu.vector_store %arg14[%c112, %c0_97], %237 {strides = array<i32>} : memref<400x256xf32, #tpu.memory_space<vmem>>, vector<16x256xf32>,
    %cst_98 = arith.constant 0.000000e+00 : f32
    %239 = vector.broadcast %cst_98 : f32 to vector<16x15xf32>
    %240 = vector.extract_strided_slice %10 {offsets = [0, 0], sizes = [16, 241], strides = [1, 1]} : vector<16x256xf32> to vector<16x241xf32>
    %241 = tpu.concatenate %239, %240 in 1 : vector<16x15xf32>, vector<16x241xf32> -> vector<16x256xf32>
    %c1_i32_99 = arith.constant 1 : i32
    %242 = vector.broadcast %c1_i32_99 : i32 to vector<1x256xi32>
    %243 = arith.addi %0, %242 : vector<1x256xi32>
    %c0_i32_100 = arith.constant 0 : i32
    %244 = vector.broadcast %c0_i32_100 : i32 to vector<1x256xi32>
    %245 = arith.cmpi sge, %243, %244 : vector<1x256xi32>
    %c1_i32_101 = arith.constant 1 : i32
    %246 = vector.broadcast %c1_i32_101 : i32 to vector<1x256xi32>
    %247 = arith.addi %0, %246 : vector<1x256xi32>
    %c16_i32_102 = arith.constant 16 : i32
    %248 = vector.broadcast %c16_i32_102 : i32 to vector<1x256xi32>
    %249 = arith.cmpi slt, %247, %248 : vector<1x256xi32>
    %250 = arith.andi %245, %249 : vector<1x256xi1>
    %251 = arith.extui %250 : vector<1x256xi1> to vector<1x256xi32>
    %252 = arith.sitofp %251 : vector<1x256xi32> to vector<1x256xf32>
    %253 = vector.broadcast %252 : vector<1x256xf32> to vector<16x256xf32>
    %254 = arith.mulf %241, %253 : vector<16x256xf32>
    %c128 = arith.constant 128 : index
    %c0_103 = arith.constant 0 : index
    %255 = vector.load %arg14[%c128, %c0_103] : memref<400x256xf32, #tpu.memory_space<vmem>>, vector<16x256xf32>
    tpu.vector_store %arg14[%c128, %c0_103], %254 {strides = array<i32>} : memref<400x256xf32, #tpu.memory_space<vmem>>, vector<16x256xf32>,
    %cst_104 = arith.constant 0.000000e+00 : f32
    %256 = vector.broadcast %cst_104 : f32 to vector<16x14xf32>
    %257 = vector.extract_strided_slice %10 {offsets = [0, 0], sizes = [16, 242], strides = [1, 1]} : vector<16x256xf32> to vector<16x242xf32>
    %258 = tpu.concatenate %256, %257 in 1 : vector<16x14xf32>, vector<16x242xf32> -> vector<16x256xf32>
    %c2_i32_105 = arith.constant 2 : i32
    %259 = vector.broadcast %c2_i32_105 : i32 to vector<1x256xi32>
    %260 = arith.addi %0, %259 : vector<1x256xi32>
    %c0_i32_106 = arith.constant 0 : i32
    %261 = vector.broadcast %c0_i32_106 : i32 to vector<1x256xi32>
    %262 = arith.cmpi sge, %260, %261 : vector<1x256xi32>
    %c2_i32_107 = arith.constant 2 : i32
    %263 = vector.broadcast %c2_i32_107 : i32 to vector<1x256xi32>
    %264 = arith.addi %0, %263 : vector<1x256xi32>
    %c16_i32_108 = arith.constant 16 : i32
    %265 = vector.broadcast %c16_i32_108 : i32 to vector<1x256xi32>
    %266 = arith.cmpi slt, %264, %265 : vector<1x256xi32>
    %267 = arith.andi %262, %266 : vector<1x256xi1>
    %268 = arith.extui %267 : vector<1x256xi1> to vector<1x256xi32>
    %269 = arith.sitofp %268 : vector<1x256xi32> to vector<1x256xf32>
    %270 = vector.broadcast %269 : vector<1x256xf32> to vector<16x256xf32>
    %271 = arith.mulf %258, %270 : vector<16x256xf32>
    %c144 = arith.constant 144 : index
    %c0_109 = arith.constant 0 : index
    %272 = vector.load %arg14[%c144, %c0_109] : memref<400x256xf32, #tpu.memory_space<vmem>>, vector<16x256xf32>
    tpu.vector_store %arg14[%c144, %c0_109], %271 {strides = array<i32>} : memref<400x256xf32, #tpu.memory_space<vmem>>, vector<16x256xf32>,
    %cst_110 = arith.constant 0.000000e+00 : f32
    %273 = vector.broadcast %cst_110 : f32 to vector<16x2xf32>
    %274 = vector.extract_strided_slice %10 {offsets = [0, 0], sizes = [16, 254], strides = [1, 1]} : vector<16x256xf32> to vector<16x254xf32>
    %275 = tpu.concatenate %273, %274 in 1 : vector<16x2xf32>, vector<16x254xf32> -> vector<16x256xf32>
    %c-2_i32_111 = arith.constant -2 : i32
    %276 = vector.broadcast %c-2_i32_111 : i32 to vector<1x256xi32>
    %277 = arith.addi %0, %276 : vector<1x256xi32>
    %c0_i32_112 = arith.constant 0 : i32
    %278 = vector.broadcast %c0_i32_112 : i32 to vector<1x256xi32>
    %279 = arith.cmpi sge, %277, %278 : vector<1x256xi32>
    %c-2_i32_113 = arith.constant -2 : i32
    %280 = vector.broadcast %c-2_i32_113 : i32 to vector<1x256xi32>
    %281 = arith.addi %0, %280 : vector<1x256xi32>
    %c16_i32_114 = arith.constant 16 : i32
    %282 = vector.broadcast %c16_i32_114 : i32 to vector<1x256xi32>
    %283 = arith.cmpi slt, %281, %282 : vector<1x256xi32>
    %284 = arith.andi %279, %283 : vector<1x256xi1>
    %285 = arith.extui %284 : vector<1x256xi1> to vector<1x256xi32>
    %286 = arith.sitofp %285 : vector<1x256xi32> to vector<1x256xf32>
    %287 = vector.broadcast %286 : vector<1x256xf32> to vector<16x256xf32>
    %288 = arith.mulf %275, %287 : vector<16x256xf32>
    %c160 = arith.constant 160 : index
    %c0_115 = arith.constant 0 : index
    %289 = vector.load %arg14[%c160, %c0_115] : memref<400x256xf32, #tpu.memory_space<vmem>>, vector<16x256xf32>
    tpu.vector_store %arg14[%c160, %c0_115], %288 {strides = array<i32>} : memref<400x256xf32, #tpu.memory_space<vmem>>, vector<16x256xf32>,
    %cst_116 = arith.constant 0.000000e+00 : f32
    %290 = vector.broadcast %cst_116 : f32 to vector<16x1xf32>
    %291 = vector.extract_strided_slice %10 {offsets = [0, 0], sizes = [16, 255], strides = [1, 1]} : vector<16x256xf32> to vector<16x255xf32>
    %292 = tpu.concatenate %290, %291 in 1 : vector<16x1xf32>, vector<16x255xf32> -> vector<16x256xf32>
    %c-1_i32_117 = arith.constant -1 : i32
    %293 = vector.broadcast %c-1_i32_117 : i32 to vector<1x256xi32>
    %294 = arith.addi %0, %293 : vector<1x256xi32>
    %c0_i32_118 = arith.constant 0 : i32
    %295 = vector.broadcast %c0_i32_118 : i32 to vector<1x256xi32>
    %296 = arith.cmpi sge, %294, %295 : vector<1x256xi32>
    %c-1_i32_119 = arith.constant -1 : i32
    %297 = vector.broadcast %c-1_i32_119 : i32 to vector<1x256xi32>
    %298 = arith.addi %0, %297 : vector<1x256xi32>
    %c16_i32_120 = arith.constant 16 : i32
    %299 = vector.broadcast %c16_i32_120 : i32 to vector<1x256xi32>
    %300 = arith.cmpi slt, %298, %299 : vector<1x256xi32>
    %301 = arith.andi %296, %300 : vector<1x256xi1>
    %302 = arith.extui %301 : vector<1x256xi1> to vector<1x256xi32>
    %303 = arith.sitofp %302 : vector<1x256xi32> to vector<1x256xf32>
    %304 = vector.broadcast %303 : vector<1x256xf32> to vector<16x256xf32>
    %305 = arith.mulf %292, %304 : vector<16x256xf32>
    %c176 = arith.constant 176 : index
    %c0_121 = arith.constant 0 : index
    %306 = vector.load %arg14[%c176, %c0_121] : memref<400x256xf32, #tpu.memory_space<vmem>>, vector<16x256xf32>
    tpu.vector_store %arg14[%c176, %c0_121], %305 {strides = array<i32>} : memref<400x256xf32, #tpu.memory_space<vmem>>, vector<16x256xf32>,
    %c192 = arith.constant 192 : index
    %c0_122 = arith.constant 0 : index
    %307 = vector.load %arg14[%c192, %c0_122] : memref<400x256xf32, #tpu.memory_space<vmem>>, vector<16x256xf32>
    tpu.vector_store %arg14[%c192, %c0_122], %10 {strides = array<i32>} : memref<400x256xf32, #tpu.memory_space<vmem>>, vector<16x256xf32>,
    %308 = vector.extract_strided_slice %10 {offsets = [0, 1], sizes = [16, 255], strides = [1, 1]} : vector<16x256xf32> to vector<16x255xf32>
    %cst_123 = arith.constant 0.000000e+00 : f32
    %309 = vector.broadcast %cst_123 : f32 to vector<16x1xf32>
    %310 = tpu.concatenate %308, %309 in 1 : vector<16x255xf32>, vector<16x1xf32> -> vector<16x256xf32>
    %c1_i32_124 = arith.constant 1 : i32
    %311 = vector.broadcast %c1_i32_124 : i32 to vector<1x256xi32>
    %312 = arith.addi %0, %311 : vector<1x256xi32>
    %c0_i32_125 = arith.constant 0 : i32
    %313 = vector.broadcast %c0_i32_125 : i32 to vector<1x256xi32>
    %314 = arith.cmpi sge, %312, %313 : vector<1x256xi32>
    %c1_i32_126 = arith.constant 1 : i32
    %315 = vector.broadcast %c1_i32_126 : i32 to vector<1x256xi32>
    %316 = arith.addi %0, %315 : vector<1x256xi32>
    %c16_i32_127 = arith.constant 16 : i32
    %317 = vector.broadcast %c16_i32_127 : i32 to vector<1x256xi32>
    %318 = arith.cmpi slt, %316, %317 : vector<1x256xi32>
    %319 = arith.andi %314, %318 : vector<1x256xi1>
    %320 = arith.extui %319 : vector<1x256xi1> to vector<1x256xi32>
    %321 = arith.sitofp %320 : vector<1x256xi32> to vector<1x256xf32>
    %322 = vector.broadcast %321 : vector<1x256xf32> to vector<16x256xf32>
    %323 = arith.mulf %310, %322 : vector<16x256xf32>
    %c208 = arith.constant 208 : index
    %c0_128 = arith.constant 0 : index
    %324 = vector.load %arg14[%c208, %c0_128] : memref<400x256xf32, #tpu.memory_space<vmem>>, vector<16x256xf32>
    tpu.vector_store %arg14[%c208, %c0_128], %323 {strides = array<i32>} : memref<400x256xf32, #tpu.memory_space<vmem>>, vector<16x256xf32>,
    %325 = vector.extract_strided_slice %10 {offsets = [0, 2], sizes = [16, 254], strides = [1, 1]} : vector<16x256xf32> to vector<16x254xf32>
    %cst_129 = arith.constant 0.000000e+00 : f32
    %326 = vector.broadcast %cst_129 : f32 to vector<16x2xf32>
    %327 = tpu.concatenate %325, %326 in 1 : vector<16x254xf32>, vector<16x2xf32> -> vector<16x256xf32>
    %c2_i32_130 = arith.constant 2 : i32
    %328 = vector.broadcast %c2_i32_130 : i32 to vector<1x256xi32>
    %329 = arith.addi %0, %328 : vector<1x256xi32>
    %c0_i32_131 = arith.constant 0 : i32
    %330 = vector.broadcast %c0_i32_131 : i32 to vector<1x256xi32>
    %331 = arith.cmpi sge, %329, %330 : vector<1x256xi32>
    %c2_i32_132 = arith.constant 2 : i32
    %332 = vector.broadcast %c2_i32_132 : i32 to vector<1x256xi32>
    %333 = arith.addi %0, %332 : vector<1x256xi32>
    %c16_i32_133 = arith.constant 16 : i32
    %334 = vector.broadcast %c16_i32_133 : i32 to vector<1x256xi32>
    %335 = arith.cmpi slt, %333, %334 : vector<1x256xi32>
    %336 = arith.andi %331, %335 : vector<1x256xi1>
    %337 = arith.extui %336 : vector<1x256xi1> to vector<1x256xi32>
    %338 = arith.sitofp %337 : vector<1x256xi32> to vector<1x256xf32>
    %339 = vector.broadcast %338 : vector<1x256xf32> to vector<16x256xf32>
    %340 = arith.mulf %327, %339 : vector<16x256xf32>
    %c224 = arith.constant 224 : index
    %c0_134 = arith.constant 0 : index
    %341 = vector.load %arg14[%c224, %c0_134] : memref<400x256xf32, #tpu.memory_space<vmem>>, vector<16x256xf32>
    tpu.vector_store %arg14[%c224, %c0_134], %340 {strides = array<i32>} : memref<400x256xf32, #tpu.memory_space<vmem>>, vector<16x256xf32>,
    %342 = vector.extract_strided_slice %10 {offsets = [0, 14], sizes = [16, 242], strides = [1, 1]} : vector<16x256xf32> to vector<16x242xf32>
    %cst_135 = arith.constant 0.000000e+00 : f32
    %343 = vector.broadcast %cst_135 : f32 to vector<16x14xf32>
    %344 = tpu.concatenate %342, %343 in 1 : vector<16x242xf32>, vector<16x14xf32> -> vector<16x256xf32>
    %c-2_i32_136 = arith.constant -2 : i32
    %345 = vector.broadcast %c-2_i32_136 : i32 to vector<1x256xi32>
    %346 = arith.addi %0, %345 : vector<1x256xi32>
    %c0_i32_137 = arith.constant 0 : i32
    %347 = vector.broadcast %c0_i32_137 : i32 to vector<1x256xi32>
    %348 = arith.cmpi sge, %346, %347 : vector<1x256xi32>
    %c-2_i32_138 = arith.constant -2 : i32
    %349 = vector.broadcast %c-2_i32_138 : i32 to vector<1x256xi32>
    %350 = arith.addi %0, %349 : vector<1x256xi32>
    %c16_i32_139 = arith.constant 16 : i32
    %351 = vector.broadcast %c16_i32_139 : i32 to vector<1x256xi32>
    %352 = arith.cmpi slt, %350, %351 : vector<1x256xi32>
    %353 = arith.andi %348, %352 : vector<1x256xi1>
    %354 = arith.extui %353 : vector<1x256xi1> to vector<1x256xi32>
    %355 = arith.sitofp %354 : vector<1x256xi32> to vector<1x256xf32>
    %356 = vector.broadcast %355 : vector<1x256xf32> to vector<16x256xf32>
    %357 = arith.mulf %344, %356 : vector<16x256xf32>
    %c240 = arith.constant 240 : index
    %c0_140 = arith.constant 0 : index
    %358 = vector.load %arg14[%c240, %c0_140] : memref<400x256xf32, #tpu.memory_space<vmem>>, vector<16x256xf32>
    tpu.vector_store %arg14[%c240, %c0_140], %357 {strides = array<i32>} : memref<400x256xf32, #tpu.memory_space<vmem>>, vector<16x256xf32>,
    %359 = vector.extract_strided_slice %10 {offsets = [0, 15], sizes = [16, 241], strides = [1, 1]} : vector<16x256xf32> to vector<16x241xf32>
    %cst_141 = arith.constant 0.000000e+00 : f32
    %360 = vector.broadcast %cst_141 : f32 to vector<16x15xf32>
    %361 = tpu.concatenate %359, %360 in 1 : vector<16x241xf32>, vector<16x15xf32> -> vector<16x256xf32>
    %c-1_i32_142 = arith.constant -1 : i32
    %362 = vector.broadcast %c-1_i32_142 : i32 to vector<1x256xi32>
    %363 = arith.addi %0, %362 : vector<1x256xi32>
    %c0_i32_143 = arith.constant 0 : i32
    %364 = vector.broadcast %c0_i32_143 : i32 to vector<1x256xi32>
    %365 = arith.cmpi sge, %363, %364 : vector<1x256xi32>
    %c-1_i32_144 = arith.constant -1 : i32
    %366 = vector.broadcast %c-1_i32_144 : i32 to vector<1x256xi32>
    %367 = arith.addi %0, %366 : vector<1x256xi32>
    %c16_i32_145 = arith.constant 16 : i32
    %368 = vector.broadcast %c16_i32_145 : i32 to vector<1x256xi32>
    %369 = arith.cmpi slt, %367, %368 : vector<1x256xi32>
    %370 = arith.andi %365, %369 : vector<1x256xi1>
    %371 = arith.extui %370 : vector<1x256xi1> to vector<1x256xi32>
    %372 = arith.sitofp %371 : vector<1x256xi32> to vector<1x256xf32>
    %373 = vector.broadcast %372 : vector<1x256xf32> to vector<16x256xf32>
    %374 = arith.mulf %361, %373 : vector<16x256xf32>
    %c256 = arith.constant 256 : index
    %c0_146 = arith.constant 0 : index
    %375 = vector.load %arg14[%c256, %c0_146] : memref<400x256xf32, #tpu.memory_space<vmem>>, vector<16x256xf32>
    tpu.vector_store %arg14[%c256, %c0_146], %374 {strides = array<i32>} : memref<400x256xf32, #tpu.memory_space<vmem>>, vector<16x256xf32>,
    %376 = vector.extract_strided_slice %10 {offsets = [0, 16], sizes = [16, 240], strides = [1, 1]} : vector<16x256xf32> to vector<16x240xf32>
    %cst_147 = arith.constant 0.000000e+00 : f32
    %377 = vector.broadcast %cst_147 : f32 to vector<16x16xf32>
    %378 = tpu.concatenate %376, %377 in 1 : vector<16x240xf32>, vector<16x16xf32> -> vector<16x256xf32>
    %c272 = arith.constant 272 : index
    %c0_148 = arith.constant 0 : index
    %379 = vector.load %arg14[%c272, %c0_148] : memref<400x256xf32, #tpu.memory_space<vmem>>, vector<16x256xf32>
    tpu.vector_store %arg14[%c272, %c0_148], %378 {strides = array<i32>} : memref<400x256xf32, #tpu.memory_space<vmem>>, vector<16x256xf32>,
    %380 = vector.extract_strided_slice %10 {offsets = [0, 17], sizes = [16, 239], strides = [1, 1]} : vector<16x256xf32> to vector<16x239xf32>
    %cst_149 = arith.constant 0.000000e+00 : f32
    %381 = vector.broadcast %cst_149 : f32 to vector<16x17xf32>
    %382 = tpu.concatenate %380, %381 in 1 : vector<16x239xf32>, vector<16x17xf32> -> vector<16x256xf32>
    %c1_i32_150 = arith.constant 1 : i32
    %383 = vector.broadcast %c1_i32_150 : i32 to vector<1x256xi32>
    %384 = arith.addi %0, %383 : vector<1x256xi32>
    %c0_i32_151 = arith.constant 0 : i32
    %385 = vector.broadcast %c0_i32_151 : i32 to vector<1x256xi32>
    %386 = arith.cmpi sge, %384, %385 : vector<1x256xi32>
    %c1_i32_152 = arith.constant 1 : i32
    %387 = vector.broadcast %c1_i32_152 : i32 to vector<1x256xi32>
    %388 = arith.addi %0, %387 : vector<1x256xi32>
    %c16_i32_153 = arith.constant 16 : i32
    %389 = vector.broadcast %c16_i32_153 : i32 to vector<1x256xi32>
    %390 = arith.cmpi slt, %388, %389 : vector<1x256xi32>
    %391 = arith.andi %386, %390 : vector<1x256xi1>
    %392 = arith.extui %391 : vector<1x256xi1> to vector<1x256xi32>
    %393 = arith.sitofp %392 : vector<1x256xi32> to vector<1x256xf32>
    %394 = vector.broadcast %393 : vector<1x256xf32> to vector<16x256xf32>
    %395 = arith.mulf %382, %394 : vector<16x256xf32>
    %c288 = arith.constant 288 : index
    %c0_154 = arith.constant 0 : index
    %396 = vector.load %arg14[%c288, %c0_154] : memref<400x256xf32, #tpu.memory_space<vmem>>, vector<16x256xf32>
    tpu.vector_store %arg14[%c288, %c0_154], %395 {strides = array<i32>} : memref<400x256xf32, #tpu.memory_space<vmem>>, vector<16x256xf32>,
    %397 = vector.extract_strided_slice %10 {offsets = [0, 18], sizes = [16, 238], strides = [1, 1]} : vector<16x256xf32> to vector<16x238xf32>
    %cst_155 = arith.constant 0.000000e+00 : f32
    %398 = vector.broadcast %cst_155 : f32 to vector<16x18xf32>
    %399 = tpu.concatenate %397, %398 in 1 : vector<16x238xf32>, vector<16x18xf32> -> vector<16x256xf32>
    %c2_i32_156 = arith.constant 2 : i32
    %400 = vector.broadcast %c2_i32_156 : i32 to vector<1x256xi32>
    %401 = arith.addi %0, %400 : vector<1x256xi32>
    %c0_i32_157 = arith.constant 0 : i32
    %402 = vector.broadcast %c0_i32_157 : i32 to vector<1x256xi32>
    %403 = arith.cmpi sge, %401, %402 : vector<1x256xi32>
    %c2_i32_158 = arith.constant 2 : i32
    %404 = vector.broadcast %c2_i32_158 : i32 to vector<1x256xi32>
    %405 = arith.addi %0, %404 : vector<1x256xi32>
    %c16_i32_159 = arith.constant 16 : i32
    %406 = vector.broadcast %c16_i32_159 : i32 to vector<1x256xi32>
    %407 = arith.cmpi slt, %405, %406 : vector<1x256xi32>
    %408 = arith.andi %403, %407 : vector<1x256xi1>
    %409 = arith.extui %408 : vector<1x256xi1> to vector<1x256xi32>
    %410 = arith.sitofp %409 : vector<1x256xi32> to vector<1x256xf32>
    %411 = vector.broadcast %410 : vector<1x256xf32> to vector<16x256xf32>
    %412 = arith.mulf %399, %411 : vector<16x256xf32>
    %c304 = arith.constant 304 : index
    %c0_160 = arith.constant 0 : index
    %413 = vector.load %arg14[%c304, %c0_160] : memref<400x256xf32, #tpu.memory_space<vmem>>, vector<16x256xf32>
    tpu.vector_store %arg14[%c304, %c0_160], %412 {strides = array<i32>} : memref<400x256xf32, #tpu.memory_space<vmem>>, vector<16x256xf32>,
    %414 = vector.extract_strided_slice %10 {offsets = [0, 30], sizes = [16, 226], strides = [1, 1]} : vector<16x256xf32> to vector<16x226xf32>
    %cst_161 = arith.constant 0.000000e+00 : f32
    %415 = vector.broadcast %cst_161 : f32 to vector<16x30xf32>
    %416 = tpu.concatenate %414, %415 in 1 : vector<16x226xf32>, vector<16x30xf32> -> vector<16x256xf32>
    %c-2_i32_162 = arith.constant -2 : i32
    %417 = vector.broadcast %c-2_i32_162 : i32 to vector<1x256xi32>
    %418 = arith.addi %0, %417 : vector<1x256xi32>
    %c0_i32_163 = arith.constant 0 : i32
    %419 = vector.broadcast %c0_i32_163 : i32 to vector<1x256xi32>
    %420 = arith.cmpi sge, %418, %419 : vector<1x256xi32>
    %c-2_i32_164 = arith.constant -2 : i32
    %421 = vector.broadcast %c-2_i32_164 : i32 to vector<1x256xi32>
    %422 = arith.addi %0, %421 : vector<1x256xi32>
    %c16_i32_165 = arith.constant 16 : i32
    %423 = vector.broadcast %c16_i32_165 : i32 to vector<1x256xi32>
    %424 = arith.cmpi slt, %422, %423 : vector<1x256xi32>
    %425 = arith.andi %420, %424 : vector<1x256xi1>
    %426 = arith.extui %425 : vector<1x256xi1> to vector<1x256xi32>
    %427 = arith.sitofp %426 : vector<1x256xi32> to vector<1x256xf32>
    %428 = vector.broadcast %427 : vector<1x256xf32> to vector<16x256xf32>
    %429 = arith.mulf %416, %428 : vector<16x256xf32>
    %c320 = arith.constant 320 : index
    %c0_166 = arith.constant 0 : index
    %430 = vector.load %arg14[%c320, %c0_166] : memref<400x256xf32, #tpu.memory_space<vmem>>, vector<16x256xf32>
    tpu.vector_store %arg14[%c320, %c0_166], %429 {strides = array<i32>} : memref<400x256xf32, #tpu.memory_space<vmem>>, vector<16x256xf32>,
    %431 = vector.extract_strided_slice %10 {offsets = [0, 31], sizes = [16, 225], strides = [1, 1]} : vector<16x256xf32> to vector<16x225xf32>
    %cst_167 = arith.constant 0.000000e+00 : f32
    %432 = vector.broadcast %cst_167 : f32 to vector<16x31xf32>
    %433 = tpu.concatenate %431, %432 in 1 : vector<16x225xf32>, vector<16x31xf32> -> vector<16x256xf32>
    %c-1_i32_168 = arith.constant -1 : i32
    %434 = vector.broadcast %c-1_i32_168 : i32 to vector<1x256xi32>
    %435 = arith.addi %0, %434 : vector<1x256xi32>
    %c0_i32_169 = arith.constant 0 : i32
    %436 = vector.broadcast %c0_i32_169 : i32 to vector<1x256xi32>
    %437 = arith.cmpi sge, %435, %436 : vector<1x256xi32>
    %c-1_i32_170 = arith.constant -1 : i32
    %438 = vector.broadcast %c-1_i32_170 : i32 to vector<1x256xi32>
    %439 = arith.addi %0, %438 : vector<1x256xi32>
    %c16_i32_171 = arith.constant 16 : i32
    %440 = vector.broadcast %c16_i32_171 : i32 to vector<1x256xi32>
    %441 = arith.cmpi slt, %439, %440 : vector<1x256xi32>
    %442 = arith.andi %437, %441 : vector<1x256xi1>
    %443 = arith.extui %442 : vector<1x256xi1> to vector<1x256xi32>
    %444 = arith.sitofp %443 : vector<1x256xi32> to vector<1x256xf32>
    %445 = vector.broadcast %444 : vector<1x256xf32> to vector<16x256xf32>
    %446 = arith.mulf %433, %445 : vector<16x256xf32>
    %c336 = arith.constant 336 : index
    %c0_172 = arith.constant 0 : index
    %447 = vector.load %arg14[%c336, %c0_172] : memref<400x256xf32, #tpu.memory_space<vmem>>, vector<16x256xf32>
    tpu.vector_store %arg14[%c336, %c0_172], %446 {strides = array<i32>} : memref<400x256xf32, #tpu.memory_space<vmem>>, vector<16x256xf32>,
    %448 = vector.extract_strided_slice %10 {offsets = [0, 32], sizes = [16, 224], strides = [1, 1]} : vector<16x256xf32> to vector<16x224xf32>
    %cst_173 = arith.constant 0.000000e+00 : f32
    %449 = vector.broadcast %cst_173 : f32 to vector<16x32xf32>
    %450 = tpu.concatenate %448, %449 in 1 : vector<16x224xf32>, vector<16x32xf32> -> vector<16x256xf32>
    %c352 = arith.constant 352 : index
    %c0_174 = arith.constant 0 : index
    %451 = vector.load %arg14[%c352, %c0_174] : memref<400x256xf32, #tpu.memory_space<vmem>>, vector<16x256xf32>
    tpu.vector_store %arg14[%c352, %c0_174], %450 {strides = array<i32>} : memref<400x256xf32, #tpu.memory_space<vmem>>, vector<16x256xf32>,
    %452 = vector.extract_strided_slice %10 {offsets = [0, 33], sizes = [16, 223], strides = [1, 1]} : vector<16x256xf32> to vector<16x223xf32>
    %cst_175 = arith.constant 0.000000e+00 : f32
    %453 = vector.broadcast %cst_175 : f32 to vector<16x33xf32>
    %454 = tpu.concatenate %452, %453 in 1 : vector<16x223xf32>, vector<16x33xf32> -> vector<16x256xf32>
    %c1_i32_176 = arith.constant 1 : i32
    %455 = vector.broadcast %c1_i32_176 : i32 to vector<1x256xi32>
    %456 = arith.addi %0, %455 : vector<1x256xi32>
    %c0_i32_177 = arith.constant 0 : i32
    %457 = vector.broadcast %c0_i32_177 : i32 to vector<1x256xi32>
    %458 = arith.cmpi sge, %456, %457 : vector<1x256xi32>
    %c1_i32_178 = arith.constant 1 : i32
    %459 = vector.broadcast %c1_i32_178 : i32 to vector<1x256xi32>
    %460 = arith.addi %0, %459 : vector<1x256xi32>
    %c16_i32_179 = arith.constant 16 : i32
    %461 = vector.broadcast %c16_i32_179 : i32 to vector<1x256xi32>
    %462 = arith.cmpi slt, %460, %461 : vector<1x256xi32>
    %463 = arith.andi %458, %462 : vector<1x256xi1>
    %464 = arith.extui %463 : vector<1x256xi1> to vector<1x256xi32>
    %465 = arith.sitofp %464 : vector<1x256xi32> to vector<1x256xf32>
    %466 = vector.broadcast %465 : vector<1x256xf32> to vector<16x256xf32>
    %467 = arith.mulf %454, %466 : vector<16x256xf32>
    %c368 = arith.constant 368 : index
    %c0_180 = arith.constant 0 : index
    %468 = vector.load %arg14[%c368, %c0_180] : memref<400x256xf32, #tpu.memory_space<vmem>>, vector<16x256xf32>
    tpu.vector_store %arg14[%c368, %c0_180], %467 {strides = array<i32>} : memref<400x256xf32, #tpu.memory_space<vmem>>, vector<16x256xf32>,
    %469 = vector.extract_strided_slice %10 {offsets = [0, 34], sizes = [16, 222], strides = [1, 1]} : vector<16x256xf32> to vector<16x222xf32>
    %cst_181 = arith.constant 0.000000e+00 : f32
    %470 = vector.broadcast %cst_181 : f32 to vector<16x34xf32>
    %471 = tpu.concatenate %469, %470 in 1 : vector<16x222xf32>, vector<16x34xf32> -> vector<16x256xf32>
    %c2_i32_182 = arith.constant 2 : i32
    %472 = vector.broadcast %c2_i32_182 : i32 to vector<1x256xi32>
    %473 = arith.addi %0, %472 : vector<1x256xi32>
    %c0_i32_183 = arith.constant 0 : i32
    %474 = vector.broadcast %c0_i32_183 : i32 to vector<1x256xi32>
    %475 = arith.cmpi sge, %473, %474 : vector<1x256xi32>
    %c2_i32_184 = arith.constant 2 : i32
    %476 = vector.broadcast %c2_i32_184 : i32 to vector<1x256xi32>
    %477 = arith.addi %0, %476 : vector<1x256xi32>
    %c16_i32_185 = arith.constant 16 : i32
    %478 = vector.broadcast %c16_i32_185 : i32 to vector<1x256xi32>
    %479 = arith.cmpi slt, %477, %478 : vector<1x256xi32>
    %480 = arith.andi %475, %479 : vector<1x256xi1>
    %481 = arith.extui %480 : vector<1x256xi1> to vector<1x256xi32>
    %482 = arith.sitofp %481 : vector<1x256xi32> to vector<1x256xf32>
    %483 = vector.broadcast %482 : vector<1x256xf32> to vector<16x256xf32>
    %484 = arith.mulf %471, %483 : vector<16x256xf32>
    %c384 = arith.constant 384 : index
    %c0_186 = arith.constant 0 : index
    %485 = vector.load %arg14[%c384, %c0_186] : memref<400x256xf32, #tpu.memory_space<vmem>>, vector<16x256xf32>
    tpu.vector_store %arg14[%c384, %c0_186], %484 {strides = array<i32>} : memref<400x256xf32, #tpu.memory_space<vmem>>, vector<16x256xf32>,
    %c0_187 = arith.constant 0 : index
    %c0_188 = arith.constant 0 : index
    %486 = vector.load %arg14[%c0_187, %c0_188] : memref<400x256xf32, #tpu.memory_space<vmem>>, vector<400x256xf32>
    %c0_189 = arith.constant 0 : index
    %c0_190 = arith.constant 0 : index
    %487 = vector.load %arg7[%c0_189, %c0_190] : memref<24x400xf32, #tpu.memory_space<vmem>>, vector<24x400xf32>
    %cst_191 = arith.constant dense<0.000000e+00> : vector<24x256xf32>
    %488 = tpu.matmul %487, %486, %cst_191 {dimension_numbers = #tpu.dot_dimension_numbers<[1], [0], [0], [1], [0, 0, 1, 1], [], []>} : vector<24x400xf32>, vector<400x256xf32>, vector<24x256xf32> -> vector<24x256xf32>
    %489 = vector.broadcast %128 : vector<24x1xf32> to vector<24x256xf32>
    %490 = arith.addf %488, %489 : vector<24x256xf32>
    %c0_192 = arith.constant 0 : index
    %c0_193 = arith.constant 0 : index
    %491 = vector.load %arg10[%c0_192, %c0_193] : memref<24x1xf32, #tpu.memory_space<vmem>>, vector<24x1xf32>
    %cst_194 = arith.constant 0.000000e+00 : f32
    %492 = vector.broadcast %cst_194 : f32 to vector<16x17xf32>
    %493 = vector.extract_strided_slice %9 {offsets = [0, 0], sizes = [16, 239], strides = [1, 1]} : vector<16x256xf32> to vector<16x239xf32>
    %494 = tpu.concatenate %492, %493 in 1 : vector<16x17xf32>, vector<16x239xf32> -> vector<16x256xf32>
    %c-1_i32_195 = arith.constant -1 : i32
    %495 = vector.broadcast %c-1_i32_195 : i32 to vector<1x256xi32>
    %496 = arith.addi %0, %495 : vector<1x256xi32>
    %c0_i32_196 = arith.constant 0 : i32
    %497 = vector.broadcast %c0_i32_196 : i32 to vector<1x256xi32>
    %498 = arith.cmpi sge, %496, %497 : vector<1x256xi32>
    %c-1_i32_197 = arith.constant -1 : i32
    %499 = vector.broadcast %c-1_i32_197 : i32 to vector<1x256xi32>
    %500 = arith.addi %0, %499 : vector<1x256xi32>
    %c16_i32_198 = arith.constant 16 : i32
    %501 = vector.broadcast %c16_i32_198 : i32 to vector<1x256xi32>
    %502 = arith.cmpi slt, %500, %501 : vector<1x256xi32>
    %503 = arith.andi %498, %502 : vector<1x256xi1>
    %504 = arith.extui %503 : vector<1x256xi1> to vector<1x256xi32>
    %505 = arith.sitofp %504 : vector<1x256xi32> to vector<1x256xf32>
    %506 = vector.broadcast %505 : vector<1x256xf32> to vector<16x256xf32>
    %507 = arith.mulf %494, %506 : vector<16x256xf32>
    %c0_199 = arith.constant 0 : index
    %c0_200 = arith.constant 0 : index
    %508 = vector.load %arg14[%c0_199, %c0_200] : memref<400x256xf32, #tpu.memory_space<vmem>>, vector<16x256xf32>
    tpu.vector_store %arg14[%c0_199, %c0_200], %507 {strides = array<i32>} : memref<400x256xf32, #tpu.memory_space<vmem>>, vector<16x256xf32>,
    %cst_201 = arith.constant 0.000000e+00 : f32
    %509 = vector.broadcast %cst_201 : f32 to vector<16x16xf32>
    %510 = vector.extract_strided_slice %9 {offsets = [0, 0], sizes = [16, 240], strides = [1, 1]} : vector<16x256xf32> to vector<16x240xf32>
    %511 = tpu.concatenate %509, %510 in 1 : vector<16x16xf32>, vector<16x240xf32> -> vector<16x256xf32>
    %c16_202 = arith.constant 16 : index
    %c0_203 = arith.constant 0 : index
    %512 = vector.load %arg14[%c16_202, %c0_203] : memref<400x256xf32, #tpu.memory_space<vmem>>, vector<16x256xf32>
    tpu.vector_store %arg14[%c16_202, %c0_203], %511 {strides = array<i32>} : memref<400x256xf32, #tpu.memory_space<vmem>>, vector<16x256xf32>,
    %cst_204 = arith.constant 0.000000e+00 : f32
    %513 = vector.broadcast %cst_204 : f32 to vector<16x15xf32>
    %514 = vector.extract_strided_slice %9 {offsets = [0, 0], sizes = [16, 241], strides = [1, 1]} : vector<16x256xf32> to vector<16x241xf32>
    %515 = tpu.concatenate %513, %514 in 1 : vector<16x15xf32>, vector<16x241xf32> -> vector<16x256xf32>
    %c1_i32_205 = arith.constant 1 : i32
    %516 = vector.broadcast %c1_i32_205 : i32 to vector<1x256xi32>
    %517 = arith.addi %0, %516 : vector<1x256xi32>
    %c0_i32_206 = arith.constant 0 : i32
    %518 = vector.broadcast %c0_i32_206 : i32 to vector<1x256xi32>
    %519 = arith.cmpi sge, %517, %518 : vector<1x256xi32>
    %c1_i32_207 = arith.constant 1 : i32
    %520 = vector.broadcast %c1_i32_207 : i32 to vector<1x256xi32>
    %521 = arith.addi %0, %520 : vector<1x256xi32>
    %c16_i32_208 = arith.constant 16 : i32
    %522 = vector.broadcast %c16_i32_208 : i32 to vector<1x256xi32>
    %523 = arith.cmpi slt, %521, %522 : vector<1x256xi32>
    %524 = arith.andi %519, %523 : vector<1x256xi1>
    %525 = arith.extui %524 : vector<1x256xi1> to vector<1x256xi32>
    %526 = arith.sitofp %525 : vector<1x256xi32> to vector<1x256xf32>
    %527 = vector.broadcast %526 : vector<1x256xf32> to vector<16x256xf32>
    %528 = arith.mulf %515, %527 : vector<16x256xf32>
    %c32_209 = arith.constant 32 : index
    %c0_210 = arith.constant 0 : index
    %529 = vector.load %arg14[%c32_209, %c0_210] : memref<400x256xf32, #tpu.memory_space<vmem>>, vector<16x256xf32>
    tpu.vector_store %arg14[%c32_209, %c0_210], %528 {strides = array<i32>} : memref<400x256xf32, #tpu.memory_space<vmem>>, vector<16x256xf32>,
    %cst_211 = arith.constant 0.000000e+00 : f32
    %530 = vector.broadcast %cst_211 : f32 to vector<16x1xf32>
    %531 = vector.extract_strided_slice %9 {offsets = [0, 0], sizes = [16, 255], strides = [1, 1]} : vector<16x256xf32> to vector<16x255xf32>
    %532 = tpu.concatenate %530, %531 in 1 : vector<16x1xf32>, vector<16x255xf32> -> vector<16x256xf32>
    %c-1_i32_212 = arith.constant -1 : i32
    %533 = vector.broadcast %c-1_i32_212 : i32 to vector<1x256xi32>
    %534 = arith.addi %0, %533 : vector<1x256xi32>
    %c0_i32_213 = arith.constant 0 : i32
    %535 = vector.broadcast %c0_i32_213 : i32 to vector<1x256xi32>
    %536 = arith.cmpi sge, %534, %535 : vector<1x256xi32>
    %c-1_i32_214 = arith.constant -1 : i32
    %537 = vector.broadcast %c-1_i32_214 : i32 to vector<1x256xi32>
    %538 = arith.addi %0, %537 : vector<1x256xi32>
    %c16_i32_215 = arith.constant 16 : i32
    %539 = vector.broadcast %c16_i32_215 : i32 to vector<1x256xi32>
    %540 = arith.cmpi slt, %538, %539 : vector<1x256xi32>
    %541 = arith.andi %536, %540 : vector<1x256xi1>
    %542 = arith.extui %541 : vector<1x256xi1> to vector<1x256xi32>
    %543 = arith.sitofp %542 : vector<1x256xi32> to vector<1x256xf32>
    %544 = vector.broadcast %543 : vector<1x256xf32> to vector<16x256xf32>
    %545 = arith.mulf %532, %544 : vector<16x256xf32>
    %c48_216 = arith.constant 48 : index
    %c0_217 = arith.constant 0 : index
    %546 = vector.load %arg14[%c48_216, %c0_217] : memref<400x256xf32, #tpu.memory_space<vmem>>, vector<16x256xf32>
    tpu.vector_store %arg14[%c48_216, %c0_217], %545 {strides = array<i32>} : memref<400x256xf32, #tpu.memory_space<vmem>>, vector<16x256xf32>,
    %c64_218 = arith.constant 64 : index
    %c0_219 = arith.constant 0 : index
    %547 = vector.load %arg14[%c64_218, %c0_219] : memref<400x256xf32, #tpu.memory_space<vmem>>, vector<16x256xf32>
    tpu.vector_store %arg14[%c64_218, %c0_219], %9 {strides = array<i32>} : memref<400x256xf32, #tpu.memory_space<vmem>>, vector<16x256xf32>,
    %548 = vector.extract_strided_slice %9 {offsets = [0, 1], sizes = [16, 255], strides = [1, 1]} : vector<16x256xf32> to vector<16x255xf32>
    %cst_220 = arith.constant 0.000000e+00 : f32
    %549 = vector.broadcast %cst_220 : f32 to vector<16x1xf32>
    %550 = tpu.concatenate %548, %549 in 1 : vector<16x255xf32>, vector<16x1xf32> -> vector<16x256xf32>
    %c1_i32_221 = arith.constant 1 : i32
    %551 = vector.broadcast %c1_i32_221 : i32 to vector<1x256xi32>
    %552 = arith.addi %0, %551 : vector<1x256xi32>
    %c0_i32_222 = arith.constant 0 : i32
    %553 = vector.broadcast %c0_i32_222 : i32 to vector<1x256xi32>
    %554 = arith.cmpi sge, %552, %553 : vector<1x256xi32>
    %c1_i32_223 = arith.constant 1 : i32
    %555 = vector.broadcast %c1_i32_223 : i32 to vector<1x256xi32>
    %556 = arith.addi %0, %555 : vector<1x256xi32>
    %c16_i32_224 = arith.constant 16 : i32
    %557 = vector.broadcast %c16_i32_224 : i32 to vector<1x256xi32>
    %558 = arith.cmpi slt, %556, %557 : vector<1x256xi32>
    %559 = arith.andi %554, %558 : vector<1x256xi1>
    %560 = arith.extui %559 : vector<1x256xi1> to vector<1x256xi32>
    %561 = arith.sitofp %560 : vector<1x256xi32> to vector<1x256xf32>
    %562 = vector.broadcast %561 : vector<1x256xf32> to vector<16x256xf32>
    %563 = arith.mulf %550, %562 : vector<16x256xf32>
    %c80_225 = arith.constant 80 : index
    %c0_226 = arith.constant 0 : index
    %564 = vector.load %arg14[%c80_225, %c0_226] : memref<400x256xf32, #tpu.memory_space<vmem>>, vector<16x256xf32>
    tpu.vector_store %arg14[%c80_225, %c0_226], %563 {strides = array<i32>} : memref<400x256xf32, #tpu.memory_space<vmem>>, vector<16x256xf32>,
    %565 = vector.extract_strided_slice %9 {offsets = [0, 15], sizes = [16, 241], strides = [1, 1]} : vector<16x256xf32> to vector<16x241xf32>
    %cst_227 = arith.constant 0.000000e+00 : f32
    %566 = vector.broadcast %cst_227 : f32 to vector<16x15xf32>
    %567 = tpu.concatenate %565, %566 in 1 : vector<16x241xf32>, vector<16x15xf32> -> vector<16x256xf32>
    %c-1_i32_228 = arith.constant -1 : i32
    %568 = vector.broadcast %c-1_i32_228 : i32 to vector<1x256xi32>
    %569 = arith.addi %0, %568 : vector<1x256xi32>
    %c0_i32_229 = arith.constant 0 : i32
    %570 = vector.broadcast %c0_i32_229 : i32 to vector<1x256xi32>
    %571 = arith.cmpi sge, %569, %570 : vector<1x256xi32>
    %c-1_i32_230 = arith.constant -1 : i32
    %572 = vector.broadcast %c-1_i32_230 : i32 to vector<1x256xi32>
    %573 = arith.addi %0, %572 : vector<1x256xi32>
    %c16_i32_231 = arith.constant 16 : i32
    %574 = vector.broadcast %c16_i32_231 : i32 to vector<1x256xi32>
    %575 = arith.cmpi slt, %573, %574 : vector<1x256xi32>
    %576 = arith.andi %571, %575 : vector<1x256xi1>
    %577 = arith.extui %576 : vector<1x256xi1> to vector<1x256xi32>
    %578 = arith.sitofp %577 : vector<1x256xi32> to vector<1x256xf32>
    %579 = vector.broadcast %578 : vector<1x256xf32> to vector<16x256xf32>
    %580 = arith.mulf %567, %579 : vector<16x256xf32>
    %c96_232 = arith.constant 96 : index
    %c0_233 = arith.constant 0 : index
    %581 = vector.load %arg14[%c96_232, %c0_233] : memref<400x256xf32, #tpu.memory_space<vmem>>, vector<16x256xf32>
    tpu.vector_store %arg14[%c96_232, %c0_233], %580 {strides = array<i32>} : memref<400x256xf32, #tpu.memory_space<vmem>>, vector<16x256xf32>,
    %582 = vector.extract_strided_slice %9 {offsets = [0, 16], sizes = [16, 240], strides = [1, 1]} : vector<16x256xf32> to vector<16x240xf32>
    %cst_234 = arith.constant 0.000000e+00 : f32
    %583 = vector.broadcast %cst_234 : f32 to vector<16x16xf32>
    %584 = tpu.concatenate %582, %583 in 1 : vector<16x240xf32>, vector<16x16xf32> -> vector<16x256xf32>
    %c112_235 = arith.constant 112 : index
    %c0_236 = arith.constant 0 : index
    %585 = vector.load %arg14[%c112_235, %c0_236] : memref<400x256xf32, #tpu.memory_space<vmem>>, vector<16x256xf32>
    tpu.vector_store %arg14[%c112_235, %c0_236], %584 {strides = array<i32>} : memref<400x256xf32, #tpu.memory_space<vmem>>, vector<16x256xf32>,
    %586 = vector.extract_strided_slice %9 {offsets = [0, 17], sizes = [16, 239], strides = [1, 1]} : vector<16x256xf32> to vector<16x239xf32>
    %cst_237 = arith.constant 0.000000e+00 : f32
    %587 = vector.broadcast %cst_237 : f32 to vector<16x17xf32>
    %588 = tpu.concatenate %586, %587 in 1 : vector<16x239xf32>, vector<16x17xf32> -> vector<16x256xf32>
    %c1_i32_238 = arith.constant 1 : i32
    %589 = vector.broadcast %c1_i32_238 : i32 to vector<1x256xi32>
    %590 = arith.addi %0, %589 : vector<1x256xi32>
    %c0_i32_239 = arith.constant 0 : i32
    %591 = vector.broadcast %c0_i32_239 : i32 to vector<1x256xi32>
    %592 = arith.cmpi sge, %590, %591 : vector<1x256xi32>
    %c1_i32_240 = arith.constant 1 : i32
    %593 = vector.broadcast %c1_i32_240 : i32 to vector<1x256xi32>
    %594 = arith.addi %0, %593 : vector<1x256xi32>
    %c16_i32_241 = arith.constant 16 : i32
    %595 = vector.broadcast %c16_i32_241 : i32 to vector<1x256xi32>
    %596 = arith.cmpi slt, %594, %595 : vector<1x256xi32>
    %597 = arith.andi %592, %596 : vector<1x256xi1>
    %598 = arith.extui %597 : vector<1x256xi1> to vector<1x256xi32>
    %599 = arith.sitofp %598 : vector<1x256xi32> to vector<1x256xf32>
    %600 = vector.broadcast %599 : vector<1x256xf32> to vector<16x256xf32>
    %601 = arith.mulf %588, %600 : vector<16x256xf32>
    %c128_242 = arith.constant 128 : index
    %c0_243 = arith.constant 0 : index
    %602 = vector.load %arg14[%c128_242, %c0_243] : memref<400x256xf32, #tpu.memory_space<vmem>>, vector<16x256xf32>
    tpu.vector_store %arg14[%c128_242, %c0_243], %601 {strides = array<i32>} : memref<400x256xf32, #tpu.memory_space<vmem>>, vector<16x256xf32>,
    %c0_244 = arith.constant 0 : index
    %c0_245 = arith.constant 0 : index
    %603 = vector.load %arg14[%c0_244, %c0_245] : memref<400x256xf32, #tpu.memory_space<vmem>>, vector<144x256xf32>
    %c0_246 = arith.constant 0 : index
    %c0_247 = arith.constant 0 : index
    %604 = vector.load %arg9[%c0_246, %c0_247] : memref<24x144xf32, #tpu.memory_space<vmem>>, vector<24x144xf32>
    %cst_248 = arith.constant dense<0.000000e+00> : vector<24x256xf32>
    %605 = tpu.matmul %604, %603, %cst_248 {dimension_numbers = #tpu.dot_dimension_numbers<[1], [0], [0], [1], [0, 0, 1, 1], [], []>} : vector<24x144xf32>, vector<144x256xf32>, vector<24x256xf32> -> vector<24x256xf32>
    %606 = vector.broadcast %491 : vector<24x1xf32> to vector<24x256xf32>
    %607 = arith.addf %605, %606 : vector<24x256xf32>
    %c0_249 = arith.constant 0 : index
    %c0_250 = arith.constant 0 : index
    %608 = vector.load %arg12[%c0_249, %c0_250] : memref<24x1xf32, #tpu.memory_space<vmem>>, vector<24x1xf32>
    %cst_251 = arith.constant 0.000000e+00 : f32
    %609 = vector.broadcast %cst_251 : f32 to vector<24x17xf32>
    %610 = vector.extract_strided_slice %607 {offsets = [0, 0], sizes = [24, 239], strides = [1, 1]} : vector<24x256xf32> to vector<24x239xf32>
    %611 = tpu.concatenate %609, %610 in 1 : vector<24x17xf32>, vector<24x239xf32> -> vector<24x256xf32>
    %c-1_i32_252 = arith.constant -1 : i32
    %612 = vector.broadcast %c-1_i32_252 : i32 to vector<1x256xi32>
    %613 = arith.addi %0, %612 : vector<1x256xi32>
    %c0_i32_253 = arith.constant 0 : i32
    %614 = vector.broadcast %c0_i32_253 : i32 to vector<1x256xi32>
    %615 = arith.cmpi sge, %613, %614 : vector<1x256xi32>
    %c-1_i32_254 = arith.constant -1 : i32
    %616 = vector.broadcast %c-1_i32_254 : i32 to vector<1x256xi32>
    %617 = arith.addi %0, %616 : vector<1x256xi32>
    %c16_i32_255 = arith.constant 16 : i32
    %618 = vector.broadcast %c16_i32_255 : i32 to vector<1x256xi32>
    %619 = arith.cmpi slt, %617, %618 : vector<1x256xi32>
    %620 = arith.andi %615, %619 : vector<1x256xi1>
    %621 = arith.extui %620 : vector<1x256xi1> to vector<1x256xi32>
    %622 = arith.sitofp %621 : vector<1x256xi32> to vector<1x256xf32>
    %623 = vector.broadcast %622 : vector<1x256xf32> to vector<24x256xf32>
    %624 = arith.mulf %611, %623 : vector<24x256xf32>
    %c0_256 = arith.constant 0 : index
    %c0_257 = arith.constant 0 : index
    %625 = vector.load %arg14[%c0_256, %c0_257] : memref<400x256xf32, #tpu.memory_space<vmem>>, vector<24x256xf32>
    tpu.vector_store %arg14[%c0_256, %c0_257], %624 {strides = array<i32>} : memref<400x256xf32, #tpu.memory_space<vmem>>, vector<24x256xf32>,
    %cst_258 = arith.constant 0.000000e+00 : f32
    %626 = vector.broadcast %cst_258 : f32 to vector<24x16xf32>
    %627 = vector.extract_strided_slice %607 {offsets = [0, 0], sizes = [24, 240], strides = [1, 1]} : vector<24x256xf32> to vector<24x240xf32>
    %628 = tpu.concatenate %626, %627 in 1 : vector<24x16xf32>, vector<24x240xf32> -> vector<24x256xf32>
    %c24_259 = arith.constant 24 : index
    %c0_260 = arith.constant 0 : index
    %629 = vector.load %arg14[%c24_259, %c0_260] : memref<400x256xf32, #tpu.memory_space<vmem>>, vector<24x256xf32>
    tpu.vector_store %arg14[%c24_259, %c0_260], %628 {strides = array<i32>} : memref<400x256xf32, #tpu.memory_space<vmem>>, vector<24x256xf32>,
    %cst_261 = arith.constant 0.000000e+00 : f32
    %630 = vector.broadcast %cst_261 : f32 to vector<24x15xf32>
    %631 = vector.extract_strided_slice %607 {offsets = [0, 0], sizes = [24, 241], strides = [1, 1]} : vector<24x256xf32> to vector<24x241xf32>
    %632 = tpu.concatenate %630, %631 in 1 : vector<24x15xf32>, vector<24x241xf32> -> vector<24x256xf32>
    %c1_i32_262 = arith.constant 1 : i32
    %633 = vector.broadcast %c1_i32_262 : i32 to vector<1x256xi32>
    %634 = arith.addi %0, %633 : vector<1x256xi32>
    %c0_i32_263 = arith.constant 0 : i32
    %635 = vector.broadcast %c0_i32_263 : i32 to vector<1x256xi32>
    %636 = arith.cmpi sge, %634, %635 : vector<1x256xi32>
    %c1_i32_264 = arith.constant 1 : i32
    %637 = vector.broadcast %c1_i32_264 : i32 to vector<1x256xi32>
    %638 = arith.addi %0, %637 : vector<1x256xi32>
    %c16_i32_265 = arith.constant 16 : i32
    %639 = vector.broadcast %c16_i32_265 : i32 to vector<1x256xi32>
    %640 = arith.cmpi slt, %638, %639 : vector<1x256xi32>
    %641 = arith.andi %636, %640 : vector<1x256xi1>
    %642 = arith.extui %641 : vector<1x256xi1> to vector<1x256xi32>
    %643 = arith.sitofp %642 : vector<1x256xi32> to vector<1x256xf32>
    %644 = vector.broadcast %643 : vector<1x256xf32> to vector<24x256xf32>
    %645 = arith.mulf %632, %644 : vector<24x256xf32>
    %c48_266 = arith.constant 48 : index
    %c0_267 = arith.constant 0 : index
    %646 = vector.load %arg14[%c48_266, %c0_267] : memref<400x256xf32, #tpu.memory_space<vmem>>, vector<24x256xf32>
    tpu.vector_store %arg14[%c48_266, %c0_267], %645 {strides = array<i32>} : memref<400x256xf32, #tpu.memory_space<vmem>>, vector<24x256xf32>,
    %cst_268 = arith.constant 0.000000e+00 : f32
    %647 = vector.broadcast %cst_268 : f32 to vector<24x1xf32>
    %648 = vector.extract_strided_slice %607 {offsets = [0, 0], sizes = [24, 255], strides = [1, 1]} : vector<24x256xf32> to vector<24x255xf32>
    %649 = tpu.concatenate %647, %648 in 1 : vector<24x1xf32>, vector<24x255xf32> -> vector<24x256xf32>
    %c-1_i32_269 = arith.constant -1 : i32
    %650 = vector.broadcast %c-1_i32_269 : i32 to vector<1x256xi32>
    %651 = arith.addi %0, %650 : vector<1x256xi32>
    %c0_i32_270 = arith.constant 0 : i32
    %652 = vector.broadcast %c0_i32_270 : i32 to vector<1x256xi32>
    %653 = arith.cmpi sge, %651, %652 : vector<1x256xi32>
    %c-1_i32_271 = arith.constant -1 : i32
    %654 = vector.broadcast %c-1_i32_271 : i32 to vector<1x256xi32>
    %655 = arith.addi %0, %654 : vector<1x256xi32>
    %c16_i32_272 = arith.constant 16 : i32
    %656 = vector.broadcast %c16_i32_272 : i32 to vector<1x256xi32>
    %657 = arith.cmpi slt, %655, %656 : vector<1x256xi32>
    %658 = arith.andi %653, %657 : vector<1x256xi1>
    %659 = arith.extui %658 : vector<1x256xi1> to vector<1x256xi32>
    %660 = arith.sitofp %659 : vector<1x256xi32> to vector<1x256xf32>
    %661 = vector.broadcast %660 : vector<1x256xf32> to vector<24x256xf32>
    %662 = arith.mulf %649, %661 : vector<24x256xf32>
    %c72 = arith.constant 72 : index
    %c0_273 = arith.constant 0 : index
    %663 = vector.load %arg14[%c72, %c0_273] : memref<400x256xf32, #tpu.memory_space<vmem>>, vector<24x256xf32>
    tpu.vector_store %arg14[%c72, %c0_273], %662 {strides = array<i32>} : memref<400x256xf32, #tpu.memory_space<vmem>>, vector<24x256xf32>,
    %c96_274 = arith.constant 96 : index
    %c0_275 = arith.constant 0 : index
    %664 = vector.load %arg14[%c96_274, %c0_275] : memref<400x256xf32, #tpu.memory_space<vmem>>, vector<24x256xf32>
    tpu.vector_store %arg14[%c96_274, %c0_275], %607 {strides = array<i32>} : memref<400x256xf32, #tpu.memory_space<vmem>>, vector<24x256xf32>,
    %665 = vector.extract_strided_slice %607 {offsets = [0, 1], sizes = [24, 255], strides = [1, 1]} : vector<24x256xf32> to vector<24x255xf32>
    %cst_276 = arith.constant 0.000000e+00 : f32
    %666 = vector.broadcast %cst_276 : f32 to vector<24x1xf32>
    %667 = tpu.concatenate %665, %666 in 1 : vector<24x255xf32>, vector<24x1xf32> -> vector<24x256xf32>
    %c1_i32_277 = arith.constant 1 : i32
    %668 = vector.broadcast %c1_i32_277 : i32 to vector<1x256xi32>
    %669 = arith.addi %0, %668 : vector<1x256xi32>
    %c0_i32_278 = arith.constant 0 : i32
    %670 = vector.broadcast %c0_i32_278 : i32 to vector<1x256xi32>
    %671 = arith.cmpi sge, %669, %670 : vector<1x256xi32>
    %c1_i32_279 = arith.constant 1 : i32
    %672 = vector.broadcast %c1_i32_279 : i32 to vector<1x256xi32>
    %673 = arith.addi %0, %672 : vector<1x256xi32>
    %c16_i32_280 = arith.constant 16 : i32
    %674 = vector.broadcast %c16_i32_280 : i32 to vector<1x256xi32>
    %675 = arith.cmpi slt, %673, %674 : vector<1x256xi32>
    %676 = arith.andi %671, %675 : vector<1x256xi1>
    %677 = arith.extui %676 : vector<1x256xi1> to vector<1x256xi32>
    %678 = arith.sitofp %677 : vector<1x256xi32> to vector<1x256xf32>
    %679 = vector.broadcast %678 : vector<1x256xf32> to vector<24x256xf32>
    %680 = arith.mulf %667, %679 : vector<24x256xf32>
    %c120 = arith.constant 120 : index
    %c0_281 = arith.constant 0 : index
    %681 = vector.load %arg14[%c120, %c0_281] : memref<400x256xf32, #tpu.memory_space<vmem>>, vector<24x256xf32>
    tpu.vector_store %arg14[%c120, %c0_281], %680 {strides = array<i32>} : memref<400x256xf32, #tpu.memory_space<vmem>>, vector<24x256xf32>,
    %682 = vector.extract_strided_slice %607 {offsets = [0, 15], sizes = [24, 241], strides = [1, 1]} : vector<24x256xf32> to vector<24x241xf32>
    %cst_282 = arith.constant 0.000000e+00 : f32
    %683 = vector.broadcast %cst_282 : f32 to vector<24x15xf32>
    %684 = tpu.concatenate %682, %683 in 1 : vector<24x241xf32>, vector<24x15xf32> -> vector<24x256xf32>
    %c-1_i32_283 = arith.constant -1 : i32
    %685 = vector.broadcast %c-1_i32_283 : i32 to vector<1x256xi32>
    %686 = arith.addi %0, %685 : vector<1x256xi32>
    %c0_i32_284 = arith.constant 0 : i32
    %687 = vector.broadcast %c0_i32_284 : i32 to vector<1x256xi32>
    %688 = arith.cmpi sge, %686, %687 : vector<1x256xi32>
    %c-1_i32_285 = arith.constant -1 : i32
    %689 = vector.broadcast %c-1_i32_285 : i32 to vector<1x256xi32>
    %690 = arith.addi %0, %689 : vector<1x256xi32>
    %c16_i32_286 = arith.constant 16 : i32
    %691 = vector.broadcast %c16_i32_286 : i32 to vector<1x256xi32>
    %692 = arith.cmpi slt, %690, %691 : vector<1x256xi32>
    %693 = arith.andi %688, %692 : vector<1x256xi1>
    %694 = arith.extui %693 : vector<1x256xi1> to vector<1x256xi32>
    %695 = arith.sitofp %694 : vector<1x256xi32> to vector<1x256xf32>
    %696 = vector.broadcast %695 : vector<1x256xf32> to vector<24x256xf32>
    %697 = arith.mulf %684, %696 : vector<24x256xf32>
    %c144_287 = arith.constant 144 : index
    %c0_288 = arith.constant 0 : index
    %698 = vector.load %arg14[%c144_287, %c0_288] : memref<400x256xf32, #tpu.memory_space<vmem>>, vector<24x256xf32>
    tpu.vector_store %arg14[%c144_287, %c0_288], %697 {strides = array<i32>} : memref<400x256xf32, #tpu.memory_space<vmem>>, vector<24x256xf32>,
    %699 = vector.extract_strided_slice %607 {offsets = [0, 16], sizes = [24, 240], strides = [1, 1]} : vector<24x256xf32> to vector<24x240xf32>
    %cst_289 = arith.constant 0.000000e+00 : f32
    %700 = vector.broadcast %cst_289 : f32 to vector<24x16xf32>
    %701 = tpu.concatenate %699, %700 in 1 : vector<24x240xf32>, vector<24x16xf32> -> vector<24x256xf32>
    %c168 = arith.constant 168 : index
    %c0_290 = arith.constant 0 : index
    %702 = vector.load %arg14[%c168, %c0_290] : memref<400x256xf32, #tpu.memory_space<vmem>>, vector<24x256xf32>
    tpu.vector_store %arg14[%c168, %c0_290], %701 {strides = array<i32>} : memref<400x256xf32, #tpu.memory_space<vmem>>, vector<24x256xf32>,
    %703 = vector.extract_strided_slice %607 {offsets = [0, 17], sizes = [24, 239], strides = [1, 1]} : vector<24x256xf32> to vector<24x239xf32>
    %cst_291 = arith.constant 0.000000e+00 : f32
    %704 = vector.broadcast %cst_291 : f32 to vector<24x17xf32>
    %705 = tpu.concatenate %703, %704 in 1 : vector<24x239xf32>, vector<24x17xf32> -> vector<24x256xf32>
    %c1_i32_292 = arith.constant 1 : i32
    %706 = vector.broadcast %c1_i32_292 : i32 to vector<1x256xi32>
    %707 = arith.addi %0, %706 : vector<1x256xi32>
    %c0_i32_293 = arith.constant 0 : i32
    %708 = vector.broadcast %c0_i32_293 : i32 to vector<1x256xi32>
    %709 = arith.cmpi sge, %707, %708 : vector<1x256xi32>
    %c1_i32_294 = arith.constant 1 : i32
    %710 = vector.broadcast %c1_i32_294 : i32 to vector<1x256xi32>
    %711 = arith.addi %0, %710 : vector<1x256xi32>
    %c16_i32_295 = arith.constant 16 : i32
    %712 = vector.broadcast %c16_i32_295 : i32 to vector<1x256xi32>
    %713 = arith.cmpi slt, %711, %712 : vector<1x256xi32>
    %714 = arith.andi %709, %713 : vector<1x256xi1>
    %715 = arith.extui %714 : vector<1x256xi1> to vector<1x256xi32>
    %716 = arith.sitofp %715 : vector<1x256xi32> to vector<1x256xf32>
    %717 = vector.broadcast %716 : vector<1x256xf32> to vector<24x256xf32>
    %718 = arith.mulf %705, %717 : vector<24x256xf32>
    %c192_296 = arith.constant 192 : index
    %c0_297 = arith.constant 0 : index
    %719 = vector.load %arg14[%c192_296, %c0_297] : memref<400x256xf32, #tpu.memory_space<vmem>>, vector<24x256xf32>
    tpu.vector_store %arg14[%c192_296, %c0_297], %718 {strides = array<i32>} : memref<400x256xf32, #tpu.memory_space<vmem>>, vector<24x256xf32>,
    %c0_298 = arith.constant 0 : index
    %c0_299 = arith.constant 0 : index
    %720 = vector.load %arg14[%c0_298, %c0_299] : memref<400x256xf32, #tpu.memory_space<vmem>>, vector<216x256xf32>
    %c0_300 = arith.constant 0 : index
    %c0_301 = arith.constant 0 : index
    %721 = vector.load %arg11[%c0_300, %c0_301] : memref<24x216xf32, #tpu.memory_space<vmem>>, vector<24x216xf32>
    %cst_302 = arith.constant dense<0.000000e+00> : vector<24x256xf32>
    %722 = tpu.matmul %721, %720, %cst_302 {dimension_numbers = #tpu.dot_dimension_numbers<[1], [0], [0], [1], [0, 0, 1, 1], [], []>} : vector<24x216xf32>, vector<216x256xf32>, vector<24x256xf32> -> vector<24x256xf32>
    %723 = vector.broadcast %608 : vector<24x1xf32> to vector<24x256xf32>
    %724 = arith.addf %722, %723 : vector<24x256xf32>
    %c0_303 = arith.constant 0 : index
    %c0_304 = arith.constant 0 : index
    %c0_305 = arith.constant 0 : index
    %725 = vector.load %arg13[%c0_303, %c0_304, %c0_305] : memref<1x88x256xf32, #tpu.memory_space<vmem>>, vector<1x24x256xf32>
    %726 = vector.shape_cast %725 : vector<1x24x256xf32> to vector<24x256xf32>
    %727 = vector.shape_cast %127 : vector<24x256xf32> to vector<1x24x256xf32>
    tpu.vector_store %arg13[%c0_303, %c0_304, %c0_305], %727 {strides = array<i32>} : memref<1x88x256xf32, #tpu.memory_space<vmem>>, vector<1x24x256xf32>,
    %c0_306 = arith.constant 0 : index
    %c24_307 = arith.constant 24 : index
    %c0_308 = arith.constant 0 : index
    %728 = vector.load %arg13[%c0_306, %c24_307, %c0_308] : memref<1x88x256xf32, #tpu.memory_space<vmem>>, vector<1x16x256xf32>
    %729 = vector.shape_cast %728 : vector<1x16x256xf32> to vector<16x256xf32>
    %730 = vector.shape_cast %8 : vector<16x256xf32> to vector<1x16x256xf32>
    tpu.vector_store %arg13[%c0_306, %c24_307, %c0_308], %730 {strides = array<i32>} : memref<1x88x256xf32, #tpu.memory_space<vmem>>, vector<1x16x256xf32>,
    %c0_309 = arith.constant 0 : index
    %c40_310 = arith.constant 40 : index
    %c0_311 = arith.constant 0 : index
    %731 = vector.load %arg13[%c0_309, %c40_310, %c0_311] : memref<1x88x256xf32, #tpu.memory_space<vmem>>, vector<1x24x256xf32>
    %732 = vector.shape_cast %731 : vector<1x24x256xf32> to vector<24x256xf32>
    %733 = vector.shape_cast %490 : vector<24x256xf32> to vector<1x24x256xf32>
    tpu.vector_store %arg13[%c0_309, %c40_310, %c0_311], %733 {strides = array<i32>} : memref<1x88x256xf32, #tpu.memory_space<vmem>>, vector<1x24x256xf32>,
    %c0_312 = arith.constant 0 : index
    %c64_313 = arith.constant 64 : index
    %c0_314 = arith.constant 0 : index
    %734 = vector.load %arg13[%c0_312, %c64_313, %c0_314] : memref<1x88x256xf32, #tpu.memory_space<vmem>>, vector<1x24x256xf32>
    %735 = vector.shape_cast %734 : vector<1x24x256xf32> to vector<24x256xf32>
    %736 = vector.shape_cast %724 : vector<24x256xf32> to vector<1x24x256xf32>
    tpu.vector_store %arg13[%c0_312, %c64_313, %c0_314], %736 {strides = array<i32>} : memref<1x88x256xf32, #tpu.memory_space<vmem>>, vector<1x24x256xf32>,
    return
  }
  func.func @transform_0(%arg0: i32) -> (i32, i32) {
    %c0_i32 = arith.constant 0 : i32
    %c0_i32_0 = arith.constant 0 : i32
    %c0_i32_1 = arith.constant 0 : i32
    return %c0_i32, %c0_i32_0 : i32, i32
  }
  func.func @transform_1(%arg0: i32) -> (i32, i32, i32) {
    %c0_i32 = arith.constant 0 : i32
    %c0_i32_0 = arith.constant 0 : i32
    %c0_i32_1 = arith.constant 0 : i32
    return %arg0, %c0_i32, %c0_i32_0 : i32, i32, i32
  }
  func.func @transform_2(%arg0: i32) -> (i32, i32) {
    %c0_i32 = arith.constant 0 : i32
    %c0_i32_0 = arith.constant 0 : i32
    %c0_i32_1 = arith.constant 0 : i32
    return %c0_i32, %c0_i32_0 : i32, i32
  }
  func.func @transform_3(%arg0: i32) -> (i32, i32) {
    %c0_i32 = arith.constant 0 : i32
    %c0_i32_0 = arith.constant 0 : i32
    %c0_i32_1 = arith.constant 0 : i32
    return %c0_i32, %c0_i32_0 : i32, i32
  }
  func.func @transform_4(%arg0: i32) -> (i32, i32) {
    %c0_i32 = arith.constant 0 : i32
    %c0_i32_0 = arith.constant 0 : i32
    %c0_i32_1 = arith.constant 0 : i32
    return %c0_i32, %c0_i32_0 : i32, i32
  }
  func.func @transform_5(%arg0: i32) -> (i32, i32) {
    %c0_i32 = arith.constant 0 : i32
    %c0_i32_0 = arith.constant 0 : i32
    %c0_i32_1 = arith.constant 0 : i32
    return %c0_i32, %c0_i32_0 : i32, i32
  }
  func.func @transform_6(%arg0: i32) -> (i32, i32) {
    %c0_i32 = arith.constant 0 : i32
    %c0_i32_0 = arith.constant 0 : i32
    %c0_i32_1 = arith.constant 0 : i32
    return %c0_i32, %c0_i32_0 : i32, i32
  }
  func.func @transform_7(%arg0: i32) -> (i32, i32) {
    %c0_i32 = arith.constant 0 : i32
    %c0_i32_0 = arith.constant 0 : i32
    %c0_i32_1 = arith.constant 0 : i32
    return %c0_i32, %c0_i32_0 : i32, i32
  }
  func.func @transform_8(%arg0: i32) -> (i32, i32) {
    %c0_i32 = arith.constant 0 : i32
    %c0_i32_0 = arith.constant 0 : i32
    %c0_i32_1 = arith.constant 0 : i32
    return %c0_i32, %c0_i32_0 : i32, i32
  }
  func.func @transform_9(%arg0: i32) -> (i32, i32) {
    %c0_i32 = arith.constant 0 : i32
    %c0_i32_0 = arith.constant 0 : i32
    %c0_i32_1 = arith.constant 0 : i32
    return %c0_i32, %c0_i32_0 : i32, i32
  }
  func.func @transform_10(%arg0: i32) -> (i32, i32) {
    %c0_i32 = arith.constant 0 : i32
    %c0_i32_0 = arith.constant 0 : i32
    %c0_i32_1 = arith.constant 0 : i32
    return %c0_i32, %c0_i32_0 : i32, i32
  }
  func.func @transform_11(%arg0: i32) -> (i32, i32) {
    %c0_i32 = arith.constant 0 : i32
    %c0_i32_0 = arith.constant 0 : i32
    %c0_i32_1 = arith.constant 0 : i32
    return %c0_i32, %c0_i32_0 : i32, i32
  }
  func.func @transform_12(%arg0: i32) -> (i32, i32, i32) {
    %c0_i32 = arith.constant 0 : i32
    %c0_i32_0 = arith.constant 0 : i32
    %c0_i32_1 = arith.constant 0 : i32
    return %arg0, %c0_i32, %c0_i32_0 : i32, i32, i32
  }
}

</mosaic_0001>

<llo_original>
// kernel: inception_a.1
$region0: #{inception_a.1}
  #allocation0 [shape = 'u32[]', space=smem, size = 0x4, offset = 0x4, fixed_abs, tag = 'smem constant byte address 0x4 - core index']
  #allocation1 [shape = 'u32[144,128]{1,0:T(1,128)}', space=vmem, size = 0x12000, scoped, tag = 'internal scratch']
  #allocation2 [shape = 'f32[400,256]{1,0:T(8,128)}', space=vmem, size = 0x64000, scoped, tag = 'scratch operand']
  %s0 = inlined_call_operand.vmem [shape: s32[1,256], index: 0, kind: input, shape index: {}]
  %s1 = inlined_call_operand.vmem [shape: f32[2,8,256], index: 1, kind: input, shape index: {}]
  %s2 = inlined_call_operand.vmem [shape: f32[48,8], index: 2, kind: input, shape index: {}]
  %s3 = inlined_call_operand.vmem [shape: f32[48,1], index: 3, kind: input, shape index: {}]
  %s4 = inlined_call_operand.vmem [shape: f32[24,72], index: 4, kind: input, shape index: {}]
  %s5 = inlined_call_operand.vmem [shape: f32[24,1], index: 5, kind: input, shape index: {}]
  %s6 = inlined_call_operand.vmem [shape: f32[24,400], index: 6, kind: input, shape index: {}]
  %s7 = inlined_call_operand.vmem [shape: f32[24,1], index: 7, kind: input, shape index: {}]
  %s8 = inlined_call_operand.vmem [shape: f32[24,144], index: 8, kind: input, shape index: {}]
  %s9 = inlined_call_operand.vmem [shape: f32[24,1], index: 9, kind: input, shape index: {}]
  %s10 = inlined_call_operand.vmem [shape: f32[24,216], index: 10, kind: input, shape index: {}]
  %s11 = inlined_call_operand.vmem [shape: f32[24,1], index: 11, kind: input, shape index: {}]
  %s12 = inlined_call_operand.vmem [shape: f32[2,88,256], index: 12, kind: output, shape index: {}]
  %s13 = sld [smem:[#allocation0]]
  $region81: #{inception_a.1} parent=0
    _
  %s15 = ssub.s32 1, %s13
  %s16 = scalar_select 0, %s15, %s13
  loop: start=0, step=1, limit=4
  $region2: #{inception_a.1} parent=0 // loop_pre_header
    _
  $region3: #{inception_a.1} parent=0 // loop_header
    %s18 = sphi 0, %s22
    %p19 = scmp.ge.s32.totalorder %s18, 4
    %s26 = sphi 0, %s26
    %s28 = sphi 0, %s26
    %s29 = sphi 0, %s28
    %s43 = sphi 0, %s29
    %s49 = sphi 0, %s51
    %s52 = sphi 0, %s49
    %s53 = sphi 0, %s52
    %s69 = sphi 0, %s53
    %s73 = sphi 0, %s73
    %s75 = sphi 0, %s73
    %s76 = sphi 0, %s75
    %s90 = sphi 0, %s76
    %s94 = sphi 0, %s94
    %s96 = sphi 0, %s94
    %s97 = sphi 0, %s96
    %s111 = sphi 0, %s97
    %s115 = sphi 0, %s115
    %s117 = sphi 0, %s115
    %s118 = sphi 0, %s117
    %s132 = sphi 0, %s118
    %s136 = sphi 0, %s136
    %s138 = sphi 0, %s136
    %s139 = sphi 0, %s138
    %s153 = sphi 0, %s139
    %s157 = sphi 0, %s157
    %s159 = sphi 0, %s157
    %s160 = sphi 0, %s159
    %s174 = sphi 0, %s160
    %s178 = sphi 0, %s178
    %s180 = sphi 0, %s178
    %s181 = sphi 0, %s180
    %s195 = sphi 0, %s181
    %s199 = sphi 0, %s199
    %s201 = sphi 0, %s199
    %s202 = sphi 0, %s201
    %s216 = sphi 0, %s202
    %s220 = sphi 0, %s220
    %s222 = sphi 0, %s220
    %s223 = sphi 0, %s222
    %s237 = sphi 0, %s223
    %s241 = sphi 0, %s241
    %s243 = sphi 0, %s241
    %s244 = sphi 0, %s243
    %s258 = sphi 0, %s244
    %s262 = sphi 0, %s262
    %s264 = sphi 0, %s262
    %s265 = sphi 0, %s264
    %s279 = sphi 0, %s265
    %s285 = sphi 0, %s287
    %s288 = sphi 0, %s285
    %s289 = sphi 0, %s288
    %s305 = sphi 0, %s289
  $region4: #{inception_a.1} parent=0 // loop_header_branch
    %21 = sbr.rel (%p19) target = $region8
  $region5: #{inception_a.1} parent=0 // loop_body
    %s23 = ssub.s32 %s18, 1
    %s24 = ssub.s32 %s18, 2
    %s25 = sadd.s32 %s18, 1
    %s27 = sadd.s32 %s26, 1
    %p30 = scmp.eq.s32.totalorder %s18, 1
    %p31 = scmp.ne.s32.totalorder %s26, %s28
    %p32 = scmp.eq.s32.totalorder %s18, 0
    %p33 = por %p31, %p32
    %p34 = scmp.ne.s32.totalorder %s26, %s28
    %p35 = scmp.eq.s32.totalorder %s23, 1
    %p36 = por %p34, %p35
    %p37 = scmp.ne.s32.totalorder %s28, %s29
    %p38 = scmp.eq.s32.totalorder %s23, 0
    %p39 = por %p37, %p38
    %p40 = scmp.ne.s32.totalorder %s28, %s29
    %p41 = scmp.eq.s32.totalorder %s24, 1
    %p42 = por %p40, %p41
    %p44 = scmp.ne.s32.totalorder %s29, %s43
    %p45 = scmp.eq.s32.totalorder %s24, 0
    %p46 = por %p44, %p45
    %s47 = ssub.s32 %s18, %s25
    %p48 = scmp.eq.s32.totalorder %s47, 0
    %s50 = sadd.s32 %s49, 1
    %s51 = scalar_select %p48, %s49, %s50
    %p54 = pneg %p48
    %p55 = scmp.eq.s32.totalorder %s18, 1
    %p56 = por %p54, %p55
    %p57 = scmp.ne.s32.totalorder %s49, %s52
    %p58 = scmp.eq.s32.totalorder %s18, 0
    %p59 = por %p57, %p58
    %p60 = scmp.ne.s32.totalorder %s49, %s52
    %p61 = scmp.eq.s32.totalorder %s23, 1
    %p62 = por %p60, %p61
    %p63 = scmp.ne.s32.totalorder %s52, %s53
    %p64 = scmp.eq.s32.totalorder %s23, 0
    %p65 = por %p63, %p64
    %p66 = scmp.ne.s32.totalorder %s52, %s53
    %p67 = scmp.eq.s32.totalorder %s24, 1
    %p68 = por %p66, %p67
    %p70 = scmp.ne.s32.totalorder %s53, %s69
    %p71 = scmp.eq.s32.totalorder %s24, 0
    %p72 = por %p70, %p71
    %s74 = sadd.s32 %s73, 1
    %p77 = scmp.eq.s32.totalorder %s18, 1
    %p78 = scmp.ne.s32.totalorder %s73, %s75
    %p79 = scmp.eq.s32.totalorder %s18, 0
    %p80 = por %p78, %p79
    %p81 = scmp.ne.s32.totalorder %s73, %s75
    %p82 = scmp.eq.s32.totalorder %s23, 1
    %p83 = por %p81, %p82
    %p84 = scmp.ne.s32.totalorder %s75, %s76
    %p85 = scmp.eq.s32.totalorder %s23, 0
    %p86 = por %p84, %p85
    %p87 = scmp.ne.s32.totalorder %s75, %s76
    %p88 = scmp.eq.s32.totalorder %s24, 1
    %p89 = por %p87, %p88
    %p91 = scmp.ne.s32.totalorder %s76, %s90
    %p92 = scmp.eq.s32.totalorder %s24, 0
    %p93 = por %p91, %p92
    %s95 = sadd.s32 %s94, 1
    %p98 = scmp.eq.s32.totalorder %s18, 1
    %p99 = scmp.ne.s32.totalorder %s94, %s96
    %p100 = scmp.eq.s32.totalorder %s18, 0
    %p101 = por %p99, %p100
    %p102 = scmp.ne.s32.totalorder %s94, %s96
    %p103 = scmp.eq.s32.totalorder %s23, 1
    %p104 = por %p102, %p103
    %p105 = scmp.ne.s32.totalorder %s96, %s97
    %p106 = scmp.eq.s32.totalorder %s23, 0
    %p107 = por %p105, %p106
    %p108 = scmp.ne.s32.totalorder %s96, %s97
    %p109 = scmp.eq.s32.totalorder %s24, 1
    %p110 = por %p108, %p109
    %p112 = scmp.ne.s32.totalorder %s97, %s111
    %p113 = scmp.eq.s32.totalorder %s24, 0
    %p114 = por %p112, %p113
    %s116 = sadd.s32 %s115, 1
    %p119 = scmp.eq.s32.totalorder %s18, 1
    %p120 = scmp.ne.s32.totalorder %s115, %s117
    %p121 = scmp.eq.s32.totalorder %s18, 0
    %p122 = por %p120, %p121
    %p123 = scmp.ne.s32.totalorder %s115, %s117
    %p124 = scmp.eq.s32.totalorder %s23, 1
    %p125 = por %p123, %p124
    %p126 = scmp.ne.s32.totalorder %s117, %s118
    %p127 = scmp.eq.s32.totalorder %s23, 0
    %p128 = por %p126, %p127
    %p129 = scmp.ne.s32.totalorder %s117, %s118
    %p130 = scmp.eq.s32.totalorder %s24, 1
    %p131 = por %p129, %p130
    %p133 = scmp.ne.s32.totalorder %s118, %s132
    %p134 = scmp.eq.s32.totalorder %s24, 0
    %p135 = por %p133, %p134
    %s137 = sadd.s32 %s136, 1
    %p140 = scmp.eq.s32.totalorder %s18, 1
    %p141 = scmp.ne.s32.totalorder %s136, %s138
    %p142 = scmp.eq.s32.totalorder %s18, 0
    %p143 = por %p141, %p142
    %p144 = scmp.ne.s32.totalorder %s136, %s138
    %p145 = scmp.eq.s32.totalorder %s23, 1
    %p146 = por %p144, %p145
    %p147 = scmp.ne.s32.totalorder %s138, %s139
    %p148 = scmp.eq.s32.totalorder %s23, 0
    %p149 = por %p147, %p148
    %p150 = scmp.ne.s32.totalorder %s138, %s139
    %p151 = scmp.eq.s32.totalorder %s24, 1
    %p152 = por %p150, %p151
    %p154 = scmp.ne.s32.totalorder %s139, %s153
    %p155 = scmp.eq.s32.totalorder %s24, 0
    %p156 = por %p154, %p155
    %s158 = sadd.s32 %s157, 1
    %p161 = scmp.eq.s32.totalorder %s18, 1
    %p162 = scmp.ne.s32.totalorder %s157, %s159
    %p163 = scmp.eq.s32.totalorder %s18, 0
    %p164 = por %p162, %p163
    %p165 = scmp.ne.s32.totalorder %s157, %s159
    %p166 = scmp.eq.s32.totalorder %s23, 1
    %p167 = por %p165, %p166
    %p168 = scmp.ne.s32.totalorder %s159, %s160
    %p169 = scmp.eq.s32.totalorder %s23, 0
    %p170 = por %p168, %p169
    %p171 = scmp.ne.s32.totalorder %s159, %s160
    %p172 = scmp.eq.s32.totalorder %s24, 1
    %p173 = por %p171, %p172
    %p175 = scmp.ne.s32.totalorder %s160, %s174
    %p176 = scmp.eq.s32.totalorder %s24, 0
    %p177 = por %p175, %p176
    %s179 = sadd.s32 %s178, 1
    %p182 = scmp.eq.s32.totalorder %s18, 1
    %p183 = scmp.ne.s32.totalorder %s178, %s180
    %p184 = scmp.eq.s32.totalorder %s18, 0
    %p185 = por %p183, %p184
    %p186 = scmp.ne.s32.totalorder %s178, %s180
    %p187 = scmp.eq.s32.totalorder %s23, 1
    %p188 = por %p186, %p187
    %p189 = scmp.ne.s32.totalorder %s180, %s181
    %p190 = scmp.eq.s32.totalorder %s23, 0
    %p191 = por %p189, %p190
    %p192 = scmp.ne.s32.totalorder %s180, %s181
    %p193 = scmp.eq.s32.totalorder %s24, 1
    %p194 = por %p192, %p193
    %p196 = scmp.ne.s32.totalorder %s181, %s195
    %p197 = scmp.eq.s32.totalorder %s24, 0
    %p198 = por %p196, %p197
    %s200 = sadd.s32 %s199, 1
    %p203 = scmp.eq.s32.totalorder %s18, 1
    %p204 = scmp.ne.s32.totalorder %s199, %s201
    %p205 = scmp.eq.s32.totalorder %s18, 0
    %p206 = por %p204, %p205
    %p207 = scmp.ne.s32.totalorder %s199, %s201
    %p208 = scmp.eq.s32.totalorder %s23, 1
    %p209 = por %p207, %p208
    %p210 = scmp.ne.s32.totalorder %s201, %s202
    %p211 = scmp.eq.s32.totalorder %s23, 0
    %p212 = por %p210, %p211
    %p213 = scmp.ne.s32.totalorder %s201, %s202
    %p214 = scmp.eq.s32.totalorder %s24, 1
    %p215 = por %p213, %p214
    %p217 = scmp.ne.s32.totalorder %s202, %s216
    %p218 = scmp.eq.s32.totalorder %s24, 0
    %p219 = por %p217, %p218
    %s221 = sadd.s32 %s220, 1
    %p224 = scmp.eq.s32.totalorder %s18, 1
    %p225 = scmp.ne.s32.totalorder %s220, %s222
    %p226 = scmp.eq.s32.totalorder %s18, 0
    %p227 = por %p225, %p226
    %p228 = scmp.ne.s32.totalorder %s220, %s222
    %p229 = scmp.eq.s32.totalorder %s23, 1
    %p230 = por %p228, %p229
    %p231 = scmp.ne.s32.totalorder %s222, %s223
    %p232 = scmp.eq.s32.totalorder %s23, 0
    %p233 = por %p231, %p232
    %p234 = scmp.ne.s32.totalorder %s222, %s223
    %p235 = scmp.eq.s32.totalorder %s24, 1
    %p236 = por %p234, %p235
    %p238 = scmp.ne.s32.totalorder %s223, %s237
    %p239 = scmp.eq.s32.totalorder %s24, 0
    %p240 = por %p238, %p239
    %s242 = sadd.s32 %s241, 1
    %p245 = scmp.eq.s32.totalorder %s18, 1
    %p246 = scmp.ne.s32.totalorder %s241, %s243
    %p247 = scmp.eq.s32.totalorder %s18, 0
    %p248 = por %p246, %p247
    %p249 = scmp.ne.s32.totalorder %s241, %s243
    %p250 = scmp.eq.s32.totalorder %s23, 1
    %p251 = por %p249, %p250
    %p252 = scmp.ne.s32.totalorder %s243, %s244
    %p253 = scmp.eq.s32.totalorder %s23, 0
    %p254 = por %p252, %p253
    %p255 = scmp.ne.s32.totalorder %s243, %s244
    %p256 = scmp.eq.s32.totalorder %s24, 1
    %p257 = por %p255, %p256
    %p259 = scmp.ne.s32.totalorder %s244, %s258
    %p260 = scmp.eq.s32.totalorder %s24, 0
    %p261 = por %p259, %p260
    %s263 = sadd.s32 %s262, 1
    %p266 = scmp.eq.s32.totalorder %s18, 1
    %p267 = scmp.ne.s32.totalorder %s262, %s264
    %p268 = scmp.eq.s32.totalorder %s18, 0
    %p269 = por %p267, %p268
    %p270 = scmp.ne.s32.totalorder %s262, %s264
    %p271 = scmp.eq.s32.totalorder %s23, 1
    %p272 = por %p270, %p271
    %p273 = scmp.ne.s32.totalorder %s264, %s265
    %p274 = scmp.eq.s32.totalorder %s23, 0
    %p275 = por %p273, %p274
    %p276 = scmp.ne.s32.totalorder %s264, %s265
    %p277 = scmp.eq.s32.totalorder %s24, 1
    %p278 = por %p276, %p277
    %p280 = scmp.ne.s32.totalorder %s265, %s279
    %p281 = scmp.eq.s32.totalorder %s24, 0
    %p282 = por %p280, %p281
    %s283 = ssub.s32 %s18, %s25
    %p284 = scmp.eq.s32.totalorder %s283, 0
    %s286 = sadd.s32 %s285, 1
    %s287 = scalar_select %p284, %s285, %s286
    %p290 = pneg %p284
    %p291 = scmp.eq.s32.totalorder %s18, 1
    %p292 = por %p290, %p291
    %p293 = scmp.ne.s32.totalorder %s285, %s288
    %p294 = scmp.eq.s32.totalorder %s18, 0
    %p295 = por %p293, %p294
    %p296 = scmp.ne.s32.totalorder %s285, %s288
    %p297 = scmp.eq.s32.totalorder %s23, 1
    %p298 = por %p296, %p297
    %p299 = scmp.ne.s32.totalorder %s288, %s289
    %p300 = scmp.eq.s32.totalorder %s23, 0
    %p301 = por %p299, %p300
    %p302 = scmp.ne.s32.totalorder %s288, %s289
    %p303 = scmp.eq.s32.totalorder %s24, 1
    %p304 = por %p302, %p303
    %p306 = scmp.ne.s32.totalorder %s289, %s305
    %p307 = scmp.eq.s32.totalorder %s24, 0
    %p308 = por %p306, %p307
    %p309 = scmp.le.s32.totalorder 1, %s18
    %p310 = scmp.lt.s32.totalorder %s18, 3
    %p311 = pnand %p309, %p310
    %p312 = pneg %p311
    // Predicated region
    $region9: #{inception_a.1} parent=5 // pred_check
      _
    $region10: #{inception_a.1} parent=5 // pred_check_branch
      %314 = sbr.rel (%p311) target = $region12
    $region11: #{inception_a.1} parent=5 // pred_region
      %s315 = ssub.s32 %s18, 1
      // Predicated region
      $region13: #{inception_a.1} parent=11 // pred_check
        %p316 = pneg %p39
      $region14: #{inception_a.1} parent=11 // pred_check_branch
        %318 = sbr.rel (%p316) target = $region16
      $region15: #{inception_a.1} parent=11 // pred_region
        _
      $region16: #{inception_a.1} parent=11 // pred_fallthru
        _
      // Predicated region
      $region17: #{inception_a.1} parent=11 // pred_check
        %p319 = pneg %p86
      $region18: #{inception_a.1} parent=11 // pred_check_branch
        %321 = sbr.rel (%p319) target = $region20
      $region19: #{inception_a.1} parent=11 // pred_region
        _
      $region20: #{inception_a.1} parent=11 // pred_fallthru
        _
      // Predicated region
      $region21: #{inception_a.1} parent=11 // pred_check
        %p322 = pneg %p107
      $region22: #{inception_a.1} parent=11 // pred_check_branch
        %324 = sbr.rel (%p322) target = $region24
      $region23: #{inception_a.1} parent=11 // pred_region
        _
      $region24: #{inception_a.1} parent=11 // pred_fallthru
        _
      // Predicated region
      $region25: #{inception_a.1} parent=11 // pred_check
        %p325 = pneg %p128
      $region26: #{inception_a.1} parent=11 // pred_check_branch
        %327 = sbr.rel (%p325) target = $region28
      $region27: #{inception_a.1} parent=11 // pred_region
        _
      $region28: #{inception_a.1} parent=11 // pred_fallthru
        _
      // Predicated region
      $region29: #{inception_a.1} parent=11 // pred_check
        %p328 = pneg %p149
      $region30: #{inception_a.1} parent=11 // pred_check_branch
        %330 = sbr.rel (%p328) target = $region32
      $region31: #{inception_a.1} parent=11 // pred_region
        _
      $region32: #{inception_a.1} parent=11 // pred_fallthru
        _
      // Predicated region
      $region33: #{inception_a.1} parent=11 // pred_check
        %p331 = pneg %p170
      $region34: #{inception_a.1} parent=11 // pred_check_branch
        %333 = sbr.rel (%p331) target = $region36
      $region35: #{inception_a.1} parent=11 // pred_region
        _
      $region36: #{inception_a.1} parent=11 // pred_fallthru
        _
      // Predicated region
      $region37: #{inception_a.1} parent=11 // pred_check
        %p334 = pneg %p191
      $region38: #{inception_a.1} parent=11 // pred_check_branch
        %336 = sbr.rel (%p334) target = $region40
      $region39: #{inception_a.1} parent=11 // pred_region
        _
      $region40: #{inception_a.1} parent=11 // pred_fallthru
        _
      // Predicated region
      $region41: #{inception_a.1} parent=11 // pred_check
        %p337 = pneg %p212
      $region42: #{inception_a.1} parent=11 // pred_check_branch
        %339 = sbr.rel (%p337) target = $region44
      $region43: #{inception_a.1} parent=11 // pred_region
        _
      $region44: #{inception_a.1} parent=11 // pred_fallthru
        _
      // Predicated region
      $region45: #{inception_a.1} parent=11 // pred_check
        %p340 = pneg %p233
      $region46: #{inception_a.1} parent=11 // pred_check_branch
        %342 = sbr.rel (%p340) target = $region48
      $region47: #{inception_a.1} parent=11 // pred_region
        _
      $region48: #{inception_a.1} parent=11 // pred_fallthru
        _
      // Predicated region
      $region49: #{inception_a.1} parent=11 // pred_check
        %p343 = pneg %p254
      $region50: #{inception_a.1} parent=11 // pred_check_branch
        %345 = sbr.rel (%p343) target = $region52
      $region51: #{inception_a.1} parent=11 // pred_region
        _
      $region52: #{inception_a.1} parent=11 // pred_fallthru
        _
      // Predicated region
      $region53: #{inception_a.1} parent=11 // pred_check
        %p346 = pneg %p275
      $region54: #{inception_a.1} parent=11 // pred_check_branch
        %348 = sbr.rel (%p346) target = $region56
      $region55: #{inception_a.1} parent=11 // pred_region
        _
      $region56: #{inception_a.1} parent=11 // pred_fallthru
        _
    $region12: #{inception_a.1} parent=5 // pred_fallthru
      _
    %p349 = scmp.lt.s32.totalorder %s18, 2
    // Predicated region
    $region57: #{inception_a.1} parent=5 // pred_check
      %p350 = pneg %p349
    $region58: #{inception_a.1} parent=5 // pred_check_branch
      %352 = sbr.rel (%p350) target = $region60
    $region59: #{inception_a.1} parent=5 // pred_region
      // Predicated region
      $region61: #{inception_a.1} parent=59 // pred_check
        %p353 = pneg %p59
      $region62: #{inception_a.1} parent=59 // pred_check_branch
        %355 = sbr.rel (%p353) target = $region64
      $region63: #{inception_a.1} parent=59 // pred_region
        %p356 = scmp.lt.s32.totalorder %s18, 1
        %s357 = scalar_select %p356, %s18, 1
        %s358 = smul.addr %s357, 2
        %s359 = smul.addr %s358, 8
        %s360 = scalar_lea.vmem %s1, %s359
      $region64: #{inception_a.1} parent=59 // pred_fallthru
        _
    $region60: #{inception_a.1} parent=5 // pred_fallthru
      _
    %p361 = scmp.le.s32.totalorder 1, %s18
    %p362 = scmp.lt.s32.totalorder %s18, 3
    %p363 = pnand %p361, %p362
    %p364 = pneg %p363
    // Predicated region
    $region65: #{inception_a.1} parent=5 // pred_check
      _
    $region66: #{inception_a.1} parent=5 // pred_check_branch
      %366 = sbr.rel (%p363) target = $region68
    $region67: #{inception_a.1} parent=5 // pred_region
      %s367 = ssub.s32 %s18, 1
      %p368 = pneg %p39
      %p369 = pneg %p36
      %p370 = scmp.lt.s32.totalorder %s23, 1
      %s371 = scalar_select %p370, %s23, 1
      %s372 = smul.addr %s371, 2
      %s373 = smul.addr %s372, 8
      %s374 = scalar_lea.vmem %s1, %s373
      %p375 = pneg %p65
      %p376 = pneg %p62
      %p377 = pneg %p86
      %p378 = pneg %p83
      %p379 = pneg %p107
      %p380 = pneg %p104
      %p381 = pneg %p128
      %p382 = pneg %p125
      %p383 = pneg %p149
      %p384 = pneg %p146
      %p385 = pneg %p170
      %p386 = pneg %p167
      %p387 = pneg %p191
      %p388 = pneg %p188
      %p389 = pneg %p212
      %p390 = pneg %p209
      %p391 = pneg %p233
      %p392 = pneg %p230
      %p393 = pneg %p254
      %p394 = pneg %p251
      %p395 = pneg %p275
      %p396 = pneg %p272
      %p397 = pneg %p301
      %p398 = pneg %p298
      %p399 = scmp.lt.s32.totalorder %s23, 1
      %s400 = scalar_select %p399, %s23, 1
      %s401 = smul.addr %s400, 22
      %s402 = smul.addr %s401, 8
      %s403 = scalar_lea.vmem %s12, %s402
      %p404 = scmp.lt.s32.totalorder %s23, 1
      %s405 = scalar_select %p404, %s23, 1
      %s406 = smul.addr %s405, 2
      %s407 = smul.addr %s406, 8
      %s408 = scalar_lea.vmem %s1, %s407
      %p409 = scmp.lt.s32.totalorder %s23, 1
      %s410 = scalar_select %p409, %s23, 1
      %s411 = smul.addr %s410, 22
      %s412 = smul.addr %s411, 8
      %s413 = scalar_lea.vmem %s12, %s412
      %v414 = vld [vmem:[%s0] sm:$0x3]
      %v415 = vld [vmem:[%s408] sm:$0xff]
      %v416 = vld [vmem:[%s408 + $0x8] sm:$0xff]
      %v417 = vld [vmem:[%s2] sm:$0xff]
      %v418 = vld [vmem:[%s2 + $0x8] sm:$0xff]
      %v419 = vld [vmem:[%s2 + $0x10] sm:$0xff]
      %v420 = vld [vmem:[%s2 + $0x18] sm:$0xff]
      %v421 = vld [vmem:[%s2 + $0x20] sm:$0xff]
      %v422 = vld [vmem:[%s2 + $0x28] sm:$0xff]
      %v423 = vld [vmem:[%s3] sm:$0xff]
      %v424 = vld [vmem:[%s3 + $0x8] sm:$0xff]
      %v425 = vld [vmem:[%s3 + $0x10] sm:$0xff]
      %v426 = vld [vmem:[%s3 + $0x18] sm:$0xff]
      %v427 = vld [vmem:[%s3 + $0x20] sm:$0xff]
      %v428 = vld [vmem:[%s3 + $0x28] sm:$0xff]
      %430 = vset.pattern.permute.xlu0 0
      %431 = vperm.xlu0 %430, %v423
      %v432 = vpop.permute.xlu0 %431
      %435 = vset.pattern.permute.xlu0 0
      %436 = vperm.xlu0 %435, %v424
      %v437 = vpop.permute.xlu0 %436
      %440 = vset.pattern.permute.xlu0 0
      %441 = vperm.xlu0 %440, %v425
      %v442 = vpop.permute.xlu0 %441
      %445 = vset.pattern.permute.xlu0 0
      %446 = vperm.xlu0 %445, %v426
      %v447 = vpop.permute.xlu0 %446
      %450 = vset.pattern.permute.xlu0 0
      %451 = vperm.xlu0 %450, %v427
      %v452 = vpop.permute.xlu0 %451
      %455 = vset.pattern.permute.xlu0 0
      %456 = vperm.xlu0 %455, %v428
      %v457 = vpop.permute.xlu0 %456
      %vm459 = vcmask 64512
      %v461 = vsel %vm459, %v417, 0
      %v464 = vsel %vm459, %v418, 0
      %v467 = vsel %vm459, %v419, 0
      %v470 = vsel %vm459, %v420, 0
      %v473 = vsel %vm459, %v421, 0
      %v476 = vsel %vm459, %v422, 0
      %478 = vmatprep.subr.mxu0 %v416
      %479 = vmatpush1.msra.mxu0 %v415
      %480 = vmatprep.subr.mxu0 0.0
      %481 = vmatpush1.msra.mxu0 0.0
      %482 = vmatprep.subr.mxu0 0.0
      %483 = vmatpush1.msra.mxu0 0.0
      %484 = vmatprep.subr.mxu0 0.0
      %485 = vmatpush1.msra.mxu0 0.0
      %486 = vmatprep.subr.mxu0 0.0
      %487 = vmatpush1.msra.mxu0 0.0
      %488 = vmatprep.subr.mxu0 0.0
      %489 = vmatpush1.msra.mxu0 0.0
      %490 = vmatprep.subr.mxu0 0.0
      %491 = vmatpush1.msra.mxu0 0.0
      %492 = vmatprep.subr.mxu0 0.0
      %493 = vmatpush1.msra.mxu0 0.0
      %494 = vmatprep.subr.mxu0 0.0
      %495 = vmatpush1.msra.mxu0 0.0
      %496 = vmatprep.subr.mxu0 0.0
      %497 = vmatpush1.msra.mxu0 0.0
      %498 = vmatprep.subr.mxu0 0.0
      %499 = vmatpush1.msra.mxu0 0.0
      %500 = vmatprep.subr.mxu0 0.0
      %501 = vmatpush1.msra.mxu0 0.0
      %502 = vmatprep.subr.mxu0 0.0
      %503 = vmatpush1.msra.mxu0 0.0
      %504 = vmatprep.subr.mxu0 0.0
      %505 = vmatpush1.msra.mxu0 0.0
      %506 = vmatprep.subr.mxu0 0.0
      %507 = vmatpush1.msra.mxu0 0.0
      %508 = vmatprep.subr.mxu0 0.0
      %509 = vmatpush1.msra.mxu0 0.0
      %510 = vmatprep.subr.mxu0 0.0
      %511 = vmatpush1.msra.mxu0 0.0
      %512 = vmatprep.subr.mxu0 0.0
      %513 = vmatpush1.msra.mxu0 0.0
      %514 = vmatprep.subr.mxu0 0.0
      %515 = vmatpush1.msra.mxu0 0.0
      %516 = vmatprep.subr.mxu0 0.0
      %517 = vmatpush1.msra.mxu0 0.0
      %518 = vmatprep.subr.mxu0 0.0
      %519 = vmatpush1.msra.mxu0 0.0
      %520 = vmatprep.subr.mxu0 0.0
      %521 = vmatpush1.msra.mxu0 0.0
      %522 = vmatprep.subr.mxu0 0.0
      %523 = vmatpush1.msra.mxu0 0.0
      %524 = vmatprep.subr.mxu0 0.0
      %525 = vmatpush1.msra.mxu0 0.0
      %526 = vmatprep.subr.mxu0 0.0
      %527 = vmatpush1.msra.mxu0 0.0
      %528 = vmatprep.subr.mxu0 0.0
      %529 = vmatpush1.msra.mxu0 0.0
      %530 = vmatprep.subr.mxu0 0.0
      %531 = vmatpush1.msra.mxu0 0.0
      %532 = vmatprep.subr.mxu0 0.0
      %533 = vmatpush1.msra.mxu0 0.0
      %534 = vmatprep.subr.mxu0 0.0
      %535 = vmatpush1.msra.mxu0 0.0
      %536 = vmatprep.subr.mxu0 0.0
      %537 = vmatpush1.msra.mxu0 0.0
      %538 = vmatprep.subr.mxu0 0.0
      %539 = vmatpush1.msra.mxu0 0.0
      %540 = vmatprep.subr.mxu0 0.0
      %541 = vmatpush1.msra.mxu0 0.0
      %542 = vmatprep.mubr.f32.mxu0 0.0
      %543 = vmatmul.mubr.f32.gmra.mrb[0].mxu0 %v461
      %v544 = vpop.f32.mrb[0].mxu0
      %v545 = vadd.f32 %v432, %v544
      %v546 = vpop.f32.mrb[0].mxu0
      %v547 = vadd.f32 %v432, %v546
      %548 = vmatprep.mubr.f32.mxu0 0.0
      %549 = vmatmul.mubr.f32.gmra.mrb[0].mxu0 %v464
      %v550 = vpop.f32.mrb[0].mxu0
      %v551 = vadd.f32 %v437, %v550
      %v552 = vpop.f32.mrb[0].mxu0
      %v553 = vadd.f32 %v437, %v552
      %554 = vmatprep.mubr.f32.mxu0 0.0
      %555 = vmatmul.mubr.f32.gmra.mrb[0].mxu0 %v467
      %v556 = vpop.f32.mrb[0].mxu0
      %v557 = vadd.f32 %v442, %v556
      %v558 = vpop.f32.mrb[0].mxu0
      %v559 = vadd.f32 %v442, %v558
      %560 = vmatprep.mubr.f32.mxu0 0.0
      %561 = vmatmul.mubr.f32.gmra.mrb[0].mxu0 %v470
      %v562 = vpop.f32.mrb[0].mxu0
      %v563 = vadd.f32 %v447, %v562
      %v564 = vpop.f32.mrb[0].mxu0
      %v565 = vadd.f32 %v447, %v564
      %566 = vmatprep.mubr.f32.mxu0 0.0
      %567 = vmatmul.mubr.f32.gmra.mrb[0].mxu0 %v473
      %v568 = vpop.f32.mrb[0].mxu0
      %v569 = vadd.f32 %v452, %v568
      %v570 = vpop.f32.mrb[0].mxu0
      %v571 = vadd.f32 %v452, %v570
      %572 = vmatprep.mubr.f32.mxu0 0.0
      %573 = vmatmul.mubr.f32.gmra.mrb[0].mxu0 %v476
      %v574 = vpop.f32.mrb[0].mxu0
      %v575 = vadd.f32 %v457, %v574
      %v576 = vpop.f32.mrb[0].mxu0
      %v577 = vadd.f32 %v457, %v576
      %578 = vdwg.mxu0
      %v579 = vld [vmem:[%s5] sm:$0xff]
      %v580 = vld [vmem:[%s5 + $0x8] sm:$0xff]
      %v581 = vld [vmem:[%s5 + $0x10] sm:$0xff]
      %584 = vrot.lane.b32.xlu0 %v415, 17
      %v585 = vpop.permute.xlu0 %584
      %586 = vrot.lane.b32.xlu0 %v416, 17
      %v587 = vpop.permute.xlu0 %586
      %vm588 = vcmask 138240
      %v589 = vsel %vm588, %v585, %v587
      %v592 = vsel %vm588, 0.0, %v585
      %v593 = vadd.s32 %v414, 4294967295
      %vm594 = vcmp.ge.s32.totalorder %v593, 0
      %vm595 = vcmp.lt.s32.totalorder %v593, 16
      %vm596 = vmand %vm594, %vm595
      %v597 = vsel %vm596, 1, 0
      %v598 = vcvt.s32.f32 %v597
      %v600 = vlaneseq
      %v601 = vshrl.u32 %v600, 7
      %v602 = vsub.s32 0, %v601
      %v603 = vrot.slane %v598, %v602
      %v604 = vlaneseq
      %v605 = vshrl.u32 %v604, 7
      %v606 = vsub.s32 1, %v605
      %v607 = vrot.slane %v598, %v606
      %v610 = vmul.f32 %v592, %v603
      %v611 = vmul.f32 %v589, %v607
      %612 = vst [vmem:[#allocation2] sm:$0xff] %v610
      %613 = vst [vmem:[#allocation2 + $0x8] sm:$0xff] %v611
      %614 = vrot.lane.b32.xlu0 %v415, 16
      %v615 = vpop.permute.xlu0 %614
      %616 = vrot.lane.b32.xlu0 %v416, 16
      %v617 = vpop.permute.xlu0 %616
      %vm618 = vcmask 130048
      %v619 = vsel %vm618, %v615, %v617
      %v622 = vsel %vm618, 0.0, %v615
      %623 = vst [vmem:[#allocation2 + $0x10] sm:$0xff] %v622
      %624 = vst [vmem:[#allocation2 + $0x18] sm:$0xff] %v619
      %625 = vrot.lane.b32.xlu0 %v415, 15
      %v626 = vpop.permute.xlu0 %625
      %627 = vrot.lane.b32.xlu0 %v416, 15
      %v628 = vpop.permute.xlu0 %627
      %vm629 = vcmask 121856
      %v630 = vsel %vm629, %v626, %v628
      %v633 = vsel %vm629, 0.0, %v626
      %v634 = vadd.s32 %v414, 1
      %vm635 = vcmp.ge.s32.totalorder %v634, 0
      %vm636 = vcmp.lt.s32.totalorder %v634, 16
      %vm637 = vmand %vm635, %vm636
      %v638 = vsel %vm637, 1, 0
      %v639 = vcvt.s32.f32 %v638
      %v641 = vlaneseq
      %v642 = vshrl.u32 %v641, 7
      %v643 = vsub.s32 0, %v642
      %v644 = vrot.slane %v639, %v643
      %v645 = vlaneseq
      %v646 = vshrl.u32 %v645, 7
      %v647 = vsub.s32 1, %v646
      %v648 = vrot.slane %v639, %v647
      %v651 = vmul.f32 %v633, %v644
      %v652 = vmul.f32 %v630, %v648
      %653 = vst [vmem:[#allocation2 + $0x20] sm:$0xff] %v651
      %654 = vst [vmem:[#allocation2 + $0x28] sm:$0xff] %v652
      %655 = vrot.lane.b32.xlu0 %v415, 1
      %v656 = vpop.permute.xlu0 %655
      %657 = vrot.lane.b32.xlu0 %v416, 1
      %v658 = vpop.permute.xlu0 %657
      %vm659 = vcmask 7168
      %v660 = vsel %vm659, %v656, %v658
      %v663 = vsel %vm659, 0.0, %v656
      %v664 = vmul.f32 %v663, %v603
      %v665 = vmul.f32 %v660, %v607
      %666 = vst [vmem:[#allocation2 + $0x30] sm:$0xff] %v664
      %667 = vst [vmem:[#allocation2 + $0x38] sm:$0xff] %v665
      %668 = vst [vmem:[#allocation2 + $0x40] sm:$0xff] %v415
      %669 = vst [vmem:[#allocation2 + $0x48] sm:$0xff] %v416
      %670 = vrot.lane.b32.xlu0 %v415, 127
      %v671 = vpop.permute.xlu0 %670
      %672 = vrot.lane.b32.xlu0 %v416, 127
      %v673 = vpop.permute.xlu0 %672
      %vm674 = vcmask 1039360
      %v675 = vsel %vm674, %v671, %v673
      %v678 = vsel %vm674, %v673, 0.0
      %v679 = vmul.f32 %v675, %v644
      %v680 = vmul.f32 %v678, %v648
      %681 = vst [vmem:[#allocation2 + $0x50] sm:$0xff] %v679
      %682 = vst [vmem:[#allocation2 + $0x58] sm:$0xff] %v680
      %683 = vrot.lane.b32.xlu0 %v415, 113
      %v684 = vpop.permute.xlu0 %683
      %685 = vrot.lane.b32.xlu0 %v416, 113
      %v686 = vpop.permute.xlu0 %685
      %vm687 = vcmask 924672
      %v688 = vsel %vm687, %v684, %v686
      %v691 = vsel %vm687, %v686, 0.0
      %v692 = vmul.f32 %v688, %v603
      %v693 = vmul.f32 %v691, %v607
      %694 = vst [vmem:[#allocation2 + $0x60] sm:$0xff] %v692
      %695 = vst [vmem:[#allocation2 + $0x68] sm:$0xff] %v693
      %696 = vrot.lane.b32.xlu0 %v415, 112
      %v697 = vpop.permute.xlu0 %696
      %698 = vrot.lane.b32.xlu0 %v416, 112
      %v699 = vpop.permute.xlu0 %698
      %vm700 = vcmask 916480
      %v701 = vsel %vm700, %v697, %v699
      %v704 = vsel %vm700, %v699, 0.0
      %705 = vst [vmem:[#allocation2 + $0x70] sm:$0xff] %v701
      %706 = vst [vmem:[#allocation2 + $0x78] sm:$0xff] %v704
      %707 = vrot.lane.b32.xlu0 %v415, 111
      %v708 = vpop.permute.xlu0 %707
      %709 = vrot.lane.b32.xlu0 %v416, 111
      %v710 = vpop.permute.xlu0 %709
      %vm711 = vcmask 908288
      %v712 = vsel %vm711, %v708, %v710
      %v715 = vsel %vm711, %v710, 0.0
      %v716 = vmul.f32 %v712, %v644
      %v717 = vmul.f32 %v715, %v648
      %718 = vst [vmem:[#allocation2 + $0x80] sm:$0xff] %v716
      %719 = vst [vmem:[#allocation2 + $0x88] sm:$0xff] %v717
      %v720 = vld [vmem:[#allocation2] sm:$0xff]
      %v721 = vld [vmem:[#allocation2 + $0x8] sm:$0xff]
      %v722 = vld [vmem:[#allocation2 + $0x10] sm:$0xff]
      %v723 = vld [vmem:[#allocation2 + $0x18] sm:$0xff]
      %v724 = vld [vmem:[#allocation2 + $0x20] sm:$0xff]
      %v725 = vld [vmem:[#allocation2 + $0x28] sm:$0xff]
      %v726 = vld [vmem:[#allocation2 + $0x30] sm:$0xff]
      %v727 = vld [vmem:[#allocation2 + $0x38] sm:$0xff]
      %v728 = vld [vmem:[#allocation2 + $0x40] sm:$0xff]
      %v729 = vld [vmem:[#allocation2 + $0x48] sm:$0xff]
      %v730 = vld [vmem:[#allocation2 + $0x50] sm:$0xff]
      %v731 = vld [vmem:[#allocation2 + $0x58] sm:$0xff]
      %v732 = vld [vmem:[#allocation2 + $0x60] sm:$0xff]
      %v733 = vld [vmem:[#allocation2 + $0x68] sm:$0xff]
      %v734 = vld [vmem:[#allocation2 + $0x70] sm:$0xff]
      %v735 = vld [vmem:[#allocation2 + $0x78] sm:$0xff]
      %v736 = vld [vmem:[#allocation2 + $0x80] sm:$0xff]
      %v737 = vld [vmem:[#allocation2 + $0x88] sm:$0xff]
      %v738 = vld [vmem:[%s4] sm:$0xff]
      %v739 = vld [vmem:[%s4 + $0x8] sm:$0xff]
      %v740 = vld [vmem:[%s4 + $0x10] sm:$0xff]
      %742 = vset.pattern.permute.xlu0 0
      %743 = vperm.xlu0 %742, %v579
      %v744 = vpop.permute.xlu0 %743
      %747 = vset.pattern.permute.xlu0 0
      %748 = vperm.xlu0 %747, %v580
      %v749 = vpop.permute.xlu0 %748
      %752 = vset.pattern.permute.xlu0 0
      %753 = vperm.xlu0 %752, %v581
      %v754 = vpop.permute.xlu0 %753
      %vm756 = vcmask 588800
      %v758 = vsel %vm756, %v738, 0
      %v761 = vsel %vm756, %v739, 0
      %v764 = vsel %vm756, %v740, 0
      %766 = vmatprep.subr.mxu0 %v721
      %767 = vmatpush1.msra.mxu0 %v720
      %768 = vmatprep.subr.mxu0 %v723
      %769 = vmatpush1.msra.mxu0 %v722
      %770 = vmatprep.subr.mxu0 %v725
      %771 = vmatpush1.msra.mxu0 %v724
      %772 = vmatprep.subr.mxu0 %v727
      %773 = vmatpush1.msra.mxu0 %v726
      %774 = vmatprep.subr.mxu0 %v729
      %775 = vmatpush1.msra.mxu0 %v728
      %776 = vmatprep.subr.mxu0 %v731
      %777 = vmatpush1.msra.mxu0 %v730
      %778 = vmatprep.subr.mxu0 %v733
      %779 = vmatpush1.msra.mxu0 %v732
      %780 = vmatprep.subr.mxu0 %v735
      %781 = vmatpush1.msra.mxu0 %v734
      %782 = vmatprep.subr.mxu0 %v737
      %783 = vmatpush1.msra.mxu0 %v736
      %784 = vmatprep.subr.mxu0 0.0
      %785 = vmatpush1.msra.mxu0 0.0
      %786 = vmatprep.subr.mxu0 0.0
      %787 = vmatpush1.msra.mxu0 0.0
      %788 = vmatprep.subr.mxu0 0.0
      %789 = vmatpush1.msra.mxu0 0.0
      %790 = vmatprep.subr.mxu0 0.0
      %791 = vmatpush1.msra.mxu0 0.0
      %792 = vmatprep.subr.mxu0 0.0
      %793 = vmatpush1.msra.mxu0 0.0
      %794 = vmatprep.subr.mxu0 0.0
      %795 = vmatpush1.msra.mxu0 0.0
      %796 = vmatprep.subr.mxu0 0.0
      %797 = vmatpush1.msra.mxu0 0.0
      %798 = vmatprep.subr.mxu0 0.0
      %799 = vmatpush1.msra.mxu0 0.0
      %800 = vmatprep.subr.mxu0 0.0
      %801 = vmatpush1.msra.mxu0 0.0
      %802 = vmatprep.subr.mxu0 0.0
      %803 = vmatpush1.msra.mxu0 0.0
      %804 = vmatprep.subr.mxu0 0.0
      %805 = vmatpush1.msra.mxu0 0.0
      %806 = vmatprep.subr.mxu0 0.0
      %807 = vmatpush1.msra.mxu0 0.0
      %808 = vmatprep.subr.mxu0 0.0
      %809 = vmatpush1.msra.mxu0 0.0
      %810 = vmatprep.subr.mxu0 0.0
      %811 = vmatpush1.msra.mxu0 0.0
      %812 = vmatprep.subr.mxu0 0.0
      %813 = vmatpush1.msra.mxu0 0.0
      %814 = vmatprep.subr.mxu0 0.0
      %815 = vmatpush1.msra.mxu0 0.0
      %816 = vmatprep.subr.mxu0 0.0
      %817 = vmatpush1.msra.mxu0 0.0
      %818 = vmatprep.subr.mxu0 0.0
      %819 = vmatpush1.msra.mxu0 0.0
      %820 = vmatprep.subr.mxu0 0.0
      %821 = vmatpush1.msra.mxu0 0.0
      %822 = vmatprep.subr.mxu0 0.0
      %823 = vmatpush1.msra.mxu0 0.0
      %824 = vmatprep.subr.mxu0 0.0
      %825 = vmatpush1.msra.mxu0 0.0
      %826 = vmatprep.subr.mxu0 0.0
      %827 = vmatpush1.msra.mxu0 0.0
      %828 = vmatprep.subr.mxu0 0.0
      %829 = vmatpush1.msra.mxu0 0.0
      %830 = vmatprep.mubr.f32.mxu0 0.0
      %831 = vmatmul.mubr.f32.gmra.mrb[0].mxu0 %v758
      %v832 = vpop.f32.mrb[0].mxu0
      %v833 = vadd.f32 %v744, %v832
      %v834 = vpop.f32.mrb[0].mxu0
      %v835 = vadd.f32 %v744, %v834
      %836 = vmatprep.mubr.f32.mxu0 0.0
      %837 = vmatmul.mubr.f32.gmra.mrb[0].mxu0 %v761
      %v838 = vpop.f32.mrb[0].mxu0
      %v839 = vadd.f32 %v749, %v838
      %v840 = vpop.f32.mrb[0].mxu0
      %v841 = vadd.f32 %v749, %v840
      %842 = vmatprep.mubr.f32.mxu0 0.0
      %843 = vmatmul.mubr.f32.gmra.mrb[0].mxu0 %v764
      %v844 = vpop.f32.mrb[0].mxu0
      %v845 = vadd.f32 %v754, %v844
      %v846 = vpop.f32.mrb[0].mxu0
      %v847 = vadd.f32 %v754, %v846
      %848 = vdwg.mxu0
      %v849 = vld [vmem:[%s7] sm:$0xff]
      %v850 = vld [vmem:[%s7 + $0x8] sm:$0xff]
      %v851 = vld [vmem:[%s7 + $0x10] sm:$0xff]
      %856 = vrot.lane.b32.xlu0 %v569, 34
      %v857 = vpop.permute.xlu0 %856
      %858 = vrot.lane.b32.xlu0 %v571, 34
      %v859 = vpop.permute.xlu0 %858
      %860 = vrot.lane.b32.xlu0 %v575, 34
      %v861 = vpop.permute.xlu0 %860
      %862 = vrot.lane.b32.xlu0 %v577, 34
      %v863 = vpop.permute.xlu0 %862
      %vm864 = vcmask 277504
      %v865 = vsel %vm864, %v857, %v859
      %v866 = vsel %vm864, %v861, %v863
      %v871 = vsel %vm864, 0.0, %v857
      %v872 = vsel %vm864, 0.0, %v861
      %v873 = vadd.s32 %v414, 4294967294
      %vm874 = vcmp.ge.s32.totalorder %v873, 0
      %vm875 = vcmp.lt.s32.totalorder %v873, 16
      %vm876 = vmand %vm874, %vm875
      %v877 = vsel %vm876, 1, 0
      %v878 = vcvt.s32.f32 %v877
      %v880 = vlaneseq
      %v881 = vshrl.u32 %v880, 7
      %v882 = vsub.s32 0, %v881
      %v883 = vrot.slane %v878, %v882
      %v884 = vlaneseq
      %v885 = vshrl.u32 %v884, 7
      %v886 = vsub.s32 1, %v885
      %v887 = vrot.slane %v878, %v886
      %v890 = vmul.f32 %v871, %v883
      %v891 = vmul.f32 %v865, %v887
      %v892 = vmul.f32 %v872, %v883
      %v893 = vmul.f32 %v866, %v887
      %894 = vst [vmem:[#allocation2] sm:$0xff] %v890
      %895 = vst [vmem:[#allocation2 + $0x8] sm:$0xff] %v891
      %896 = vst [vmem:[#allocation2 + $0x10] sm:$0xff] %v892
      %897 = vst [vmem:[#allocation2 + $0x18] sm:$0xff] %v893
      %898 = vrot.lane.b32.xlu0 %v569, 33
      %v899 = vpop.permute.xlu0 %898
      %900 = vrot.lane.b32.xlu0 %v571, 33
      %v901 = vpop.permute.xlu0 %900
      %902 = vrot.lane.b32.xlu0 %v575, 33
      %v903 = vpop.permute.xlu0 %902
      %904 = vrot.lane.b32.xlu0 %v577, 33
      %v905 = vpop.permute.xlu0 %904
      %vm906 = vcmask 269312
      %v907 = vsel %vm906, %v899, %v901
      %v908 = vsel %vm906, %v903, %v905
      %v913 = vsel %vm906, 0.0, %v899
      %v914 = vsel %vm906, 0.0, %v903
      %v915 = vmul.f32 %v913, %v603
      %v916 = vmul.f32 %v907, %v607
      %v917 = vmul.f32 %v914, %v603
      %v918 = vmul.f32 %v908, %v607
      %919 = vst [vmem:[#allocation2 + $0x20] sm:$0xff] %v915
      %920 = vst [vmem:[#allocation2 + $0x28] sm:$0xff] %v916
      %921 = vst [vmem:[#allocation2 + $0x30] sm:$0xff] %v917
      %922 = vst [vmem:[#allocation2 + $0x38] sm:$0xff] %v918
      %923 = vrot.lane.b32.xlu0 %v569, 32
      %v924 = vpop.permute.xlu0 %923
      %925 = vrot.lane.b32.xlu0 %v571, 32
      %v926 = vpop.permute.xlu0 %925
      %927 = vrot.lane.b32.xlu0 %v575, 32
      %v928 = vpop.permute.xlu0 %927
      %929 = vrot.lane.b32.xlu0 %v577, 32
      %v930 = vpop.permute.xlu0 %929
      %vm931 = vcmask 261120
      %v932 = vsel %vm931, %v924, %v926
      %v933 = vsel %vm931, %v928, %v930
      %v938 = vsel %vm931, 0.0, %v924
      %v939 = vsel %vm931, 0.0, %v928
      %940 = vst [vmem:[#allocation2 + $0x40] sm:$0xff] %v938
      %941 = vst [vmem:[#allocation2 + $0x48] sm:$0xff] %v932
      %942 = vst [vmem:[#allocation2 + $0x50] sm:$0xff] %v939
      %943 = vst [vmem:[#allocation2 + $0x58] sm:$0xff] %v933
      %944 = vrot.lane.b32.xlu0 %v569, 31
      %v945 = vpop.permute.xlu0 %944
      %946 = vrot.lane.b32.xlu0 %v571, 31
      %v947 = vpop.permute.xlu0 %946
      %948 = vrot.lane.b32.xlu0 %v575, 31
      %v949 = vpop.permute.xlu0 %948
      %950 = vrot.lane.b32.xlu0 %v577, 31
      %v951 = vpop.permute.xlu0 %950
      %vm952 = vcmask 252928
      %v953 = vsel %vm952, %v945, %v947
      %v954 = vsel %vm952, %v949, %v951
      %v959 = vsel %vm952, 0.0, %v945
      %v960 = vsel %vm952, 0.0, %v949
      %v961 = vmul.f32 %v959, %v644
      %v962 = vmul.f32 %v953, %v648
      %v963 = vmul.f32 %v960, %v644
      %v964 = vmul.f32 %v954, %v648
      %965 = vst [vmem:[#allocation2 + $0x60] sm:$0xff] %v961
      %966 = vst [vmem:[#allocation2 + $0x68] sm:$0xff] %v962
      %967 = vst [vmem:[#allocation2 + $0x70] sm:$0xff] %v963
      %968 = vst [vmem:[#allocation2 + $0x78] sm:$0xff] %v964
      %969 = vrot.lane.b32.xlu0 %v569, 30
      %v970 = vpop.permute.xlu0 %969
      %971 = vrot.lane.b32.xlu0 %v571, 30
      %v972 = vpop.permute.xlu0 %971
      %973 = vrot.lane.b32.xlu0 %v575, 30
      %v974 = vpop.permute.xlu0 %973
      %975 = vrot.lane.b32.xlu0 %v577, 30
      %v976 = vpop.permute.xlu0 %975
      %vm977 = vcmask 244736
      %v978 = vsel %vm977, %v970, %v972
      %v979 = vsel %vm977, %v974, %v976
      %v984 = vsel %vm977, 0.0, %v970
      %v985 = vsel %vm977, 0.0, %v974
      %v986 = vadd.s32 %v414, 2
      %vm987 = vcmp.ge.s32.totalorder %v986, 0
      %vm988 = vcmp.lt.s32.totalorder %v986, 16
      %vm989 = vmand %vm987, %vm988
      %v990 = vsel %vm989, 1, 0
      %v991 = vcvt.s32.f32 %v990
      %v993 = vlaneseq
      %v994 = vshrl.u32 %v993, 7
      %v995 = vsub.s32 0, %v994
      %v996 = vrot.slane %v991, %v995
      %v997 = vlaneseq
      %v998 = vshrl.u32 %v997, 7
      %v999 = vsub.s32 1, %v998
      %v1000 = vrot.slane %v991, %v999
      %v1003 = vmul.f32 %v984, %v996
      %v1004 = vmul.f32 %v978, %v1000
      %v1005 = vmul.f32 %v985, %v996
      %v1006 = vmul.f32 %v979, %v1000
      %1007 = vst [vmem:[#allocation2 + $0x80] sm:$0xff] %v1003
      %1008 = vst [vmem:[#allocation2 + $0x88] sm:$0xff] %v1004
      %1009 = vst [vmem:[#allocation2 + $0x90] sm:$0xff] %v1005
      %1010 = vst [vmem:[#allocation2 + $0x98] sm:$0xff] %v1006
      %1011 = vrot.lane.b32.xlu0 %v569, 18
      %v1012 = vpop.permute.xlu0 %1011
      %1013 = vrot.lane.b32.xlu0 %v571, 18
      %v1014 = vpop.permute.xlu0 %1013
      %1015 = vrot.lane.b32.xlu0 %v575, 18
      %v1016 = vpop.permute.xlu0 %1015
      %1017 = vrot.lane.b32.xlu0 %v577, 18
      %v1018 = vpop.permute.xlu0 %1017
      %vm1019 = vcmask 146432
      %v1020 = vsel %vm1019, %v1012, %v1014
      %v1021 = vsel %vm1019, %v1016, %v1018
      %v1026 = vsel %vm1019, 0.0, %v1012
      %v1027 = vsel %vm1019, 0.0, %v1016
      %v1028 = vmul.f32 %v1026, %v883
      %v1029 = vmul.f32 %v1020, %v887
      %v1030 = vmul.f32 %v1027, %v883
      %v1031 = vmul.f32 %v1021, %v887
      %1032 = vst [vmem:[#allocation2 + $0xa0] sm:$0xff] %v1028
      %1033 = vst [vmem:[#allocation2 + $0xa8] sm:$0xff] %v1029
      %1034 = vst [vmem:[#allocation2 + $0xb0] sm:$0xff] %v1030
      %1035 = vst [vmem:[#allocation2 + $0xb8] sm:$0xff] %v1031
      %1036 = vrot.lane.b32.xlu0 %v569, 17
      %v1037 = vpop.permute.xlu0 %1036
      %1038 = vrot.lane.b32.xlu0 %v571, 17
      %v1039 = vpop.permute.xlu0 %1038
      %1040 = vrot.lane.b32.xlu0 %v575, 17
      %v1041 = vpop.permute.xlu0 %1040
      %1042 = vrot.lane.b32.xlu0 %v577, 17
      %v1043 = vpop.permute.xlu0 %1042
      %v1044 = vsel %vm588, %v1037, %v1039
      %v1045 = vsel %vm588, %v1041, %v1043
      %v1050 = vsel %vm588, 0.0, %v1037
      %v1051 = vsel %vm588, 0.0, %v1041
      %v1052 = vmul.f32 %v1050, %v603
      %v1053 = vmul.f32 %v1044, %v607
      %v1054 = vmul.f32 %v1051, %v603
      %v1055 = vmul.f32 %v1045, %v607
      %1056 = vst [vmem:[#allocation2 + $0xc0] sm:$0xff] %v1052
      %1057 = vst [vmem:[#allocation2 + $0xc8] sm:$0xff] %v1053
      %1058 = vst [vmem:[#allocation2 + $0xd0] sm:$0xff] %v1054
      %1059 = vst [vmem:[#allocation2 + $0xd8] sm:$0xff] %v1055
      %1060 = vrot.lane.b32.xlu0 %v569, 16
      %v1061 = vpop.permute.xlu0 %1060
      %1062 = vrot.lane.b32.xlu0 %v571, 16
      %v1063 = vpop.permute.xlu0 %1062
      %1064 = vrot.lane.b32.xlu0 %v575, 16
      %v1065 = vpop.permute.xlu0 %1064
      %1066 = vrot.lane.b32.xlu0 %v577, 16
      %v1067 = vpop.permute.xlu0 %1066
      %v1068 = vsel %vm618, %v1061, %v1063
      %v1069 = vsel %vm618, %v1065, %v1067
      %v1074 = vsel %vm618, 0.0, %v1061
      %v1075 = vsel %vm618, 0.0, %v1065
      %1076 = vst [vmem:[#allocation2 + $0xe0] sm:$0xff] %v1074
      %1077 = vst [vmem:[#allocation2 + $0xe8] sm:$0xff] %v1068
      %1078 = vst [vmem:[#allocation2 + $0xf0] sm:$0xff] %v1075
      %1079 = vst [vmem:[#allocation2 + $0xf8] sm:$0xff] %v1069
      %1080 = vrot.lane.b32.xlu0 %v569, 15
      %v1081 = vpop.permute.xlu0 %1080
      %1082 = vrot.lane.b32.xlu0 %v571, 15
      %v1083 = vpop.permute.xlu0 %1082
      %1084 = vrot.lane.b32.xlu0 %v575, 15
      %v1085 = vpop.permute.xlu0 %1084
      %1086 = vrot.lane.b32.xlu0 %v577, 15
      %v1087 = vpop.permute.xlu0 %1086
      %v1088 = vsel %vm629, %v1081, %v1083
      %v1089 = vsel %vm629, %v1085, %v1087
      %v1094 = vsel %vm629, 0.0, %v1081
      %v1095 = vsel %vm629, 0.0, %v1085
      %v1096 = vmul.f32 %v1094, %v644
      %v1097 = vmul.f32 %v1088, %v648
      %v1098 = vmul.f32 %v1095, %v644
      %v1099 = vmul.f32 %v1089, %v648
      %1100 = vst [vmem:[#allocation2 + $0x100] sm:$0xff] %v1096
      %1101 = vst [vmem:[#allocation2 + $0x108] sm:$0xff] %v1097
      %1102 = vst [vmem:[#allocation2 + $0x110] sm:$0xff] %v1098
      %1103 = vst [vmem:[#allocation2 + $0x118] sm:$0xff] %v1099
      %1104 = vrot.lane.b32.xlu0 %v569, 14
      %v1105 = vpop.permute.xlu0 %1104
      %1106 = vrot.lane.b32.xlu0 %v571, 14
      %v1107 = vpop.permute.xlu0 %1106
      %1108 = vrot.lane.b32.xlu0 %v575, 14
      %v1109 = vpop.permute.xlu0 %1108
      %1110 = vrot.lane.b32.xlu0 %v577, 14
      %v1111 = vpop.permute.xlu0 %1110
      %vm1112 = vcmask 113664
      %v1113 = vsel %vm1112, %v1105, %v1107
      %v1114 = vsel %vm1112, %v1109, %v1111
      %v1119 = vsel %vm1112, 0.0, %v1105
      %v1120 = vsel %vm1112, 0.0, %v1109
      %v1121 = vmul.f32 %v1119, %v996
      %v1122 = vmul.f32 %v1113, %v1000
      %v1123 = vmul.f32 %v1120, %v996
      %v1124 = vmul.f32 %v1114, %v1000
      %1125 = vst [vmem:[#allocation2 + $0x120] sm:$0xff] %v1121
      %1126 = vst [vmem:[#allocation2 + $0x128] sm:$0xff] %v1122
      %1127 = vst [vmem:[#allocation2 + $0x130] sm:$0xff] %v1123
      %1128 = vst [vmem:[#allocation2 + $0x138] sm:$0xff] %v1124
      %1129 = vrot.lane.b32.xlu0 %v569, 2
      %v1130 = vpop.permute.xlu0 %1129
      %1131 = vrot.lane.b32.xlu0 %v571, 2
      %v1132 = vpop.permute.xlu0 %1131
      %1133 = vrot.lane.b32.xlu0 %v575, 2
      %v1134 = vpop.permute.xlu0 %1133
      %1135 = vrot.lane.b32.xlu0 %v577, 2
      %v1136 = vpop.permute.xlu0 %1135
      %vm1137 = vcmask 15360
      %v1138 = vsel %vm1137, %v1130, %v1132
      %v1139 = vsel %vm1137, %v1134, %v1136
      %v1144 = vsel %vm1137, 0.0, %v1130
      %v1145 = vsel %vm1137, 0.0, %v1134
      %v1146 = vmul.f32 %v1144, %v883
      %v1147 = vmul.f32 %v1138, %v887
      %v1148 = vmul.f32 %v1145, %v883
      %v1149 = vmul.f32 %v1139, %v887
      %1150 = vst [vmem:[#allocation2 + $0x140] sm:$0xff] %v1146
      %1151 = vst [vmem:[#allocation2 + $0x148] sm:$0xff] %v1147
      %1152 = vst [vmem:[#allocation2 + $0x150] sm:$0xff] %v1148
      %1153 = vst [vmem:[#allocation2 + $0x158] sm:$0xff] %v1149
      %1154 = vrot.lane.b32.xlu0 %v569, 1
      %v1155 = vpop.permute.xlu0 %1154
      %1156 = vrot.lane.b32.xlu0 %v571, 1
      %v1157 = vpop.permute.xlu0 %1156
      %1158 = vrot.lane.b32.xlu0 %v575, 1
      %v1159 = vpop.permute.xlu0 %1158
      %1160 = vrot.lane.b32.xlu0 %v577, 1
      %v1161 = vpop.permute.xlu0 %1160
      %v1162 = vsel %vm659, %v1155, %v1157
      %v1163 = vsel %vm659, %v1159, %v1161
      %v1168 = vsel %vm659, 0.0, %v1155
      %v1169 = vsel %vm659, 0.0, %v1159
      %v1170 = vmul.f32 %v1168, %v603
      %v1171 = vmul.f32 %v1162, %v607
      %v1172 = vmul.f32 %v1169, %v603
      %v1173 = vmul.f32 %v1163, %v607
      %1174 = vst [vmem:[#allocation2 + $0x160] sm:$0xff] %v1170
      %1175 = vst [vmem:[#allocation2 + $0x168] sm:$0xff] %v1171
      %1176 = vst [vmem:[#allocation2 + $0x170] sm:$0xff] %v1172
      %1177 = vst [vmem:[#allocation2 + $0x178] sm:$0xff] %v1173
      %1178 = vst [vmem:[#allocation2 + $0x180] sm:$0xff] %v569
      %1179 = vst [vmem:[#allocation2 + $0x188] sm:$0xff] %v571
      %1180 = vst [vmem:[#allocation2 + $0x190] sm:$0xff] %v575
      %1181 = vst [vmem:[#allocation2 + $0x198] sm:$0xff] %v577
      %1182 = vrot.lane.b32.xlu0 %v569, 127
      %v1183 = vpop.permute.xlu0 %1182
      %1184 = vrot.lane.b32.xlu0 %v571, 127
      %v1185 = vpop.permute.xlu0 %1184
      %1186 = vrot.lane.b32.xlu0 %v575, 127
      %v1187 = vpop.permute.xlu0 %1186
      %1188 = vrot.lane.b32.xlu0 %v577, 127
      %v1189 = vpop.permute.xlu0 %1188
      %v1190 = vsel %vm674, %v1183, %v1185
      %v1191 = vsel %vm674, %v1187, %v1189
      %v1196 = vsel %vm674, %v1185, 0.0
      %v1197 = vsel %vm674, %v1189, 0.0
      %v1198 = vmul.f32 %v1190, %v644
      %v1199 = vmul.f32 %v1196, %v648
      %v1200 = vmul.f32 %v1191, %v644
      %v1201 = vmul.f32 %v1197, %v648
      %1202 = vst [vmem:[#allocation2 + $0x1a0] sm:$0xff] %v1198
      %1203 = vst [vmem:[#allocation2 + $0x1a8] sm:$0xff] %v1199
      %1204 = vst [vmem:[#allocation2 + $0x1b0] sm:$0xff] %v1200
      %1205 = vst [vmem:[#allocation2 + $0x1b8] sm:$0xff] %v1201
      %1206 = vrot.lane.b32.xlu0 %v569, 126
      %v1207 = vpop.permute.xlu0 %1206
      %1208 = vrot.lane.b32.xlu0 %v571, 126
      %v1209 = vpop.permute.xlu0 %1208
      %1210 = vrot.lane.b32.xlu0 %v575, 126
      %v1211 = vpop.permute.xlu0 %1210
      %1212 = vrot.lane.b32.xlu0 %v577, 126
      %v1213 = vpop.permute.xlu0 %1212
      %vm1214 = vcmask 1031168
      %v1215 = vsel %vm1214, %v1207, %v1209
      %v1216 = vsel %vm1214, %v1211, %v1213
      %v1221 = vsel %vm1214, %v1209, 0.0
      %v1222 = vsel %vm1214, %v1213, 0.0
      %v1223 = vmul.f32 %v1215, %v996
      %v1224 = vmul.f32 %v1221, %v1000
      %v1225 = vmul.f32 %v1216, %v996
      %v1226 = vmul.f32 %v1222, %v1000
      %1227 = vst [vmem:[#allocation2 + $0x1c0] sm:$0xff] %v1223
      %1228 = vst [vmem:[#allocation2 + $0x1c8] sm:$0xff] %v1224
      %1229 = vst [vmem:[#allocation2 + $0x1d0] sm:$0xff] %v1225
      %1230 = vst [vmem:[#allocation2 + $0x1d8] sm:$0xff] %v1226
      %1231 = vrot.lane.b32.xlu0 %v569, 114
      %v1232 = vpop.permute.xlu0 %1231
      %1233 = vrot.lane.b32.xlu0 %v571, 114
      %v1234 = vpop.permute.xlu0 %1233
      %1235 = vrot.lane.b32.xlu0 %v575, 114
      %v1236 = vpop.permute.xlu0 %1235
      %1237 = vrot.lane.b32.xlu0 %v577, 114
      %v1238 = vpop.permute.xlu0 %1237
      %vm1239 = vcmask 932864
      %v1240 = vsel %vm1239, %v1232, %v1234
      %v1241 = vsel %vm1239, %v1236, %v1238
      %v1246 = vsel %vm1239, %v1234, 0.0
      %v1247 = vsel %vm1239, %v1238, 0.0
      %v1248 = vmul.f32 %v1240, %v883
      %v1249 = vmul.f32 %v1246, %v887
      %v1250 = vmul.f32 %v1241, %v883
      %v1251 = vmul.f32 %v1247, %v887
      %1252 = vst [vmem:[#allocation2 + $0x1e0] sm:$0xff] %v1248
      %1253 = vst [vmem:[#allocation2 + $0x1e8] sm:$0xff] %v1249
      %1254 = vst [vmem:[#allocation2 + $0x1f0] sm:$0xff] %v1250
      %1255 = vst [vmem:[#allocation2 + $0x1f8] sm:$0xff] %v1251
      %1256 = vrot.lane.b32.xlu0 %v569, 113
      %v1257 = vpop.permute.xlu0 %1256
      %1258 = vrot.lane.b32.xlu0 %v571, 113
      %v1259 = vpop.permute.xlu0 %1258
      %1260 = vrot.lane.b32.xlu0 %v575, 113
      %v1261 = vpop.permute.xlu0 %1260
      %1262 = vrot.lane.b32.xlu0 %v577, 113
      %v1263 = vpop.permute.xlu0 %1262
      %v1264 = vsel %vm687, %v1257, %v1259
      %v1265 = vsel %vm687, %v1261, %v1263
      %v1270 = vsel %vm687, %v1259, 0.0
      %v1271 = vsel %vm687, %v1263, 0.0
      %v1272 = vmul.f32 %v1264, %v603
      %v1273 = vmul.f32 %v1270, %v607
      %v1274 = vmul.f32 %v1265, %v603
      %v1275 = vmul.f32 %v1271, %v607
      %1276 = vst [vmem:[#allocation2 + $0x200] sm:$0xff] %v1272
      %1277 = vst [vmem:[#allocation2 + $0x208] sm:$0xff] %v1273
      %1278 = vst [vmem:[#allocation2 + $0x210] sm:$0xff] %v1274
      %1279 = vst [vmem:[#allocation2 + $0x218] sm:$0xff] %v1275
      %1280 = vrot.lane.b32.xlu0 %v569, 112
      %v1281 = vpop.permute.xlu0 %1280
      %1282 = vrot.lane.b32.xlu0 %v571, 112
      %v1283 = vpop.permute.xlu0 %1282
      %1284 = vrot.lane.b32.xlu0 %v575, 112
      %v1285 = vpop.permute.xlu0 %1284
      %1286 = vrot.lane.b32.xlu0 %v577, 112
      %v1287 = vpop.permute.xlu0 %1286
      %v1288 = vsel %vm700, %v1281, %v1283
      %v1289 = vsel %vm700, %v1285, %v1287
      %v1294 = vsel %vm700, %v1283, 0.0
      %v1295 = vsel %vm700, %v1287, 0.0
      %1296 = vst [vmem:[#allocation2 + $0x220] sm:$0xff] %v1288
      %1297 = vst [vmem:[#allocation2 + $0x228] sm:$0xff] %v1294
      %1298 = vst [vmem:[#allocation2 + $0x230] sm:$0xff] %v1289
      %1299 = vst [vmem:[#allocation2 + $0x238] sm:$0xff] %v1295
      %1300 = vrot.lane.b32.xlu0 %v569, 111
      %v1301 = vpop.permute.xlu0 %1300
      %1302 = vrot.lane.b32.xlu0 %v571, 111
      %v1303 = vpop.permute.xlu0 %1302
      %1304 = vrot.lane.b32.xlu0 %v575, 111
      %v1305 = vpop.permute.xlu0 %1304
      %1306 = vrot.lane.b32.xlu0 %v577, 111
      %v1307 = vpop.permute.xlu0 %1306
      %v1308 = vsel %vm711, %v1301, %v1303
      %v1309 = vsel %vm711, %v1305, %v1307
      %v1314 = vsel %vm711, %v1303, 0.0
      %v1315 = vsel %vm711, %v1307, 0.0
      %v1316 = vmul.f32 %v1308, %v644
      %v1317 = vmul.f32 %v1314, %v648
      %v1318 = vmul.f32 %v1309, %v644
      %v1319 = vmul.f32 %v1315, %v648
      %1320 = vst [vmem:[#allocation2 + $0x240] sm:$0xff] %v1316
      %1321 = vst [vmem:[#allocation2 + $0x248] sm:$0xff] %v1317
      %1322 = vst [vmem:[#allocation2 + $0x250] sm:$0xff] %v1318
      %1323 = vst [vmem:[#allocation2 + $0x258] sm:$0xff] %v1319
      %1324 = vrot.lane.b32.xlu0 %v569, 110
      %v1325 = vpop.permute.xlu0 %1324
      %1326 = vrot.lane.b32.xlu0 %v571, 110
      %v1327 = vpop.permute.xlu0 %1326
      %1328 = vrot.lane.b32.xlu0 %v575, 110
      %v1329 = vpop.permute.xlu0 %1328
      %1330 = vrot.lane.b32.xlu0 %v577, 110
      %v1331 = vpop.permute.xlu0 %1330
      %vm1332 = vcmask 900096
      %v1333 = vsel %vm1332, %v1325, %v1327
      %v1334 = vsel %vm1332, %v1329, %v1331
      %v1339 = vsel %vm1332, %v1327, 0.0
      %v1340 = vsel %vm1332, %v1331, 0.0
      %v1341 = vmul.f32 %v1333, %v996
      %v1342 = vmul.f32 %v1339, %v1000
      %v1343 = vmul.f32 %v1334, %v996
      %v1344 = vmul.f32 %v1340, %v1000
      %1345 = vst [vmem:[#allocation2 + $0x260] sm:$0xff] %v1341
      %1346 = vst [vmem:[#allocation2 + $0x268] sm:$0xff] %v1342
      %1347 = vst [vmem:[#allocation2 + $0x270] sm:$0xff] %v1343
      %1348 = vst [vmem:[#allocation2 + $0x278] sm:$0xff] %v1344
      %1349 = vrot.lane.b32.xlu0 %v569, 98
      %v1350 = vpop.permute.xlu0 %1349
      %1351 = vrot.lane.b32.xlu0 %v571, 98
      %v1352 = vpop.permute.xlu0 %1351
      %1353 = vrot.lane.b32.xlu0 %v575, 98
      %v1354 = vpop.permute.xlu0 %1353
      %1355 = vrot.lane.b32.xlu0 %v577, 98
      %v1356 = vpop.permute.xlu0 %1355
      %vm1357 = vcmask 801792
      %v1358 = vsel %vm1357, %v1350, %v1352
      %v1359 = vsel %vm1357, %v1354, %v1356
      %v1364 = vsel %vm1357, %v1352, 0.0
      %v1365 = vsel %vm1357, %v1356, 0.0
      %v1366 = vmul.f32 %v1358, %v883
      %v1367 = vmul.f32 %v1364, %v887
      %v1368 = vmul.f32 %v1359, %v883
      %v1369 = vmul.f32 %v1365, %v887
      %1370 = vst [vmem:[#allocation2 + $0x280] sm:$0xff] %v1366
      %1371 = vst [vmem:[#allocation2 + $0x288] sm:$0xff] %v1367
      %1372 = vst [vmem:[#allocation2 + $0x290] sm:$0xff] %v1368
      %1373 = vst [vmem:[#allocation2 + $0x298] sm:$0xff] %v1369
      %1374 = vrot.lane.b32.xlu0 %v569, 97
      %v1375 = vpop.permute.xlu0 %1374
      %1376 = vrot.lane.b32.xlu0 %v571, 97
      %v1377 = vpop.permute.xlu0 %1376
      %1378 = vrot.lane.b32.xlu0 %v575, 97
      %v1379 = vpop.permute.xlu0 %1378
      %1380 = vrot.lane.b32.xlu0 %v577, 97
      %v1381 = vpop.permute.xlu0 %1380
      %vm1382 = vcmask 793600
      %v1383 = vsel %vm1382, %v1375, %v1377
      %v1384 = vsel %vm1382, %v1379, %v1381
      %v1389 = vsel %vm1382, %v1377, 0.0
      %v1390 = vsel %vm1382, %v1381, 0.0
      %v1391 = vmul.f32 %v1383, %v603
      %v1392 = vmul.f32 %v1389, %v607
      %v1393 = vmul.f32 %v1384, %v603
      %v1394 = vmul.f32 %v1390, %v607
      %1395 = vst [vmem:[#allocation2 + $0x2a0] sm:$0xff] %v1391
      %1396 = vst [vmem:[#allocation2 + $0x2a8] sm:$0xff] %v1392
      %1397 = vst [vmem:[#allocation2 + $0x2b0] sm:$0xff] %v1393
      %1398 = vst [vmem:[#allocation2 + $0x2b8] sm:$0xff] %v1394
      %1399 = vrot.lane.b32.xlu0 %v569, 96
      %v1400 = vpop.permute.xlu0 %1399
      %1401 = vrot.lane.b32.xlu0 %v571, 96
      %v1402 = vpop.permute.xlu0 %1401
      %1403 = vrot.lane.b32.xlu0 %v575, 96
      %v1404 = vpop.permute.xlu0 %1403
      %1405 = vrot.lane.b32.xlu0 %v577, 96
      %v1406 = vpop.permute.xlu0 %1405
      %vm1407 = vcmask 785408
      %v1408 = vsel %vm1407, %v1400, %v1402
      %v1409 = vsel %vm1407, %v1404, %v1406
      %v1414 = vsel %vm1407, %v1402, 0.0
      %v1415 = vsel %vm1407, %v1406, 0.0
      %1416 = vst [vmem:[#allocation2 + $0x2c0] sm:$0xff] %v1408
      %1417 = vst [vmem:[#allocation2 + $0x2c8] sm:$0xff] %v1414
      %1418 = vst [vmem:[#allocation2 + $0x2d0] sm:$0xff] %v1409
      %1419 = vst [vmem:[#allocation2 + $0x2d8] sm:$0xff] %v1415
      %1420 = vrot.lane.b32.xlu0 %v569, 95
      %v1421 = vpop.permute.xlu0 %1420
      %1422 = vrot.lane.b32.xlu0 %v571, 95
      %v1423 = vpop.permute.xlu0 %1422
      %1424 = vrot.lane.b32.xlu0 %v575, 95
      %v1425 = vpop.permute.xlu0 %1424
      %1426 = vrot.lane.b32.xlu0 %v577, 95
      %v1427 = vpop.permute.xlu0 %1426
      %vm1428 = vcmask 777216
      %v1429 = vsel %vm1428, %v1421, %v1423
      %v1430 = vsel %vm1428, %v1425, %v1427
      %v1435 = vsel %vm1428, %v1423, 0.0
      %v1436 = vsel %vm1428, %v1427, 0.0
      %v1437 = vmul.f32 %v1429, %v644
      %v1438 = vmul.f32 %v1435, %v648
      %v1439 = vmul.f32 %v1430, %v644
      %v1440 = vmul.f32 %v1436, %v648
      %1441 = vst [vmem:[#allocation2 + $0x2e0] sm:$0xff] %v1437
      %1442 = vst [vmem:[#allocation2 + $0x2e8] sm:$0xff] %v1438
      %1443 = vst [vmem:[#allocation2 + $0x2f0] sm:$0xff] %v1439
      %1444 = vst [vmem:[#allocation2 + $0x2f8] sm:$0xff] %v1440
      %1445 = vrot.lane.b32.xlu0 %v569, 94
      %v1446 = vpop.permute.xlu0 %1445
      %1447 = vrot.lane.b32.xlu0 %v571, 94
      %v1448 = vpop.permute.xlu0 %1447
      %1449 = vrot.lane.b32.xlu0 %v575, 94
      %v1450 = vpop.permute.xlu0 %1449
      %1451 = vrot.lane.b32.xlu0 %v577, 94
      %v1452 = vpop.permute.xlu0 %1451
      %vm1453 = vcmask 769024
      %v1454 = vsel %vm1453, %v1446, %v1448
      %v1455 = vsel %vm1453, %v1450, %v1452
      %v1460 = vsel %vm1453, %v1448, 0.0
      %v1461 = vsel %vm1453, %v1452, 0.0
      %v1462 = vmul.f32 %v1454, %v996
      %v1463 = vmul.f32 %v1460, %v1000
      %v1464 = vmul.f32 %v1455, %v996
      %v1465 = vmul.f32 %v1461, %v1000
      %1466 = vst [vmem:[#allocation2 + $0x300] sm:$0xff] %v1462
      %1467 = vst [vmem:[#allocation2 + $0x308] sm:$0xff] %v1463
      %1468 = vst [vmem:[#allocation2 + $0x310] sm:$0xff] %v1464
      %1469 = vst [vmem:[#allocation2 + $0x318] sm:$0xff] %v1465
      %v1470 = vld [vmem:[#allocation2] sm:$0xff]
      %v1471 = vld [vmem:[#allocation2 + $0x8] sm:$0xff]
      %v1472 = vld [vmem:[#allocation2 + $0x10] sm:$0xff]
      %v1473 = vld [vmem:[#allocation2 + $0x18] sm:$0xff]
      %v1474 = vld [vmem:[#allocation2 + $0x20] sm:$0xff]
      %v1475 = vld [vmem:[#allocation2 + $0x28] sm:$0xff]
      %v1476 = vld [vmem:[#allocation2 + $0x30] sm:$0xff]
      %v1477 = vld [vmem:[#allocation2 + $0x38] sm:$0xff]
      %v1478 = vld [vmem:[#allocation2 + $0x40] sm:$0xff]
      %v1479 = vld [vmem:[#allocation2 + $0x48] sm:$0xff]
      %v1480 = vld [vmem:[#allocation2 + $0x50] sm:$0xff]
      %v1481 = vld [vmem:[#allocation2 + $0x58] sm:$0xff]
      %v1482 = vld [vmem:[#allocation2 + $0x60] sm:$0xff]
      %v1483 = vld [vmem:[#allocation2 + $0x68] sm:$0xff]
      %v1484 = vld [vmem:[#allocation2 + $0x70] sm:$0xff]
      %v1485 = vld [vmem:[#allocation2 + $0x78] sm:$0xff]
      %v1486 = vld [vmem:[#allocation2 + $0x80] sm:$0xff]
      %v1487 = vld [vmem:[#allocation2 + $0x88] sm:$0xff]
      %v1488 = vld [vmem:[#allocation2 + $0x90] sm:$0xff]
      %v1489 = vld [vmem:[#allocation2 + $0x98] sm:$0xff]
      %v1490 = vld [vmem:[#allocation2 + $0xa0] sm:$0xff]
      %v1491 = vld [vmem:[#allocation2 + $0xa8] sm:$0xff]
      %v1492 = vld [vmem:[#allocation2 + $0xb0] sm:$0xff]
      %v1493 = vld [vmem:[#allocation2 + $0xb8] sm:$0xff]
      %v1494 = vld [vmem:[#allocation2 + $0xc0] sm:$0xff]
      %v1495 = vld [vmem:[#allocation2 + $0xc8] sm:$0xff]
      %v1496 = vld [vmem:[#allocation2 + $0xd0] sm:$0xff]
      %v1497 = vld [vmem:[#allocation2 + $0xd8] sm:$0xff]
      %v1498 = vld [vmem:[#allocation2 + $0xe0] sm:$0xff]
      %v1499 = vld [vmem:[#allocation2 + $0xe8] sm:$0xff]
      %v1500 = vld [vmem:[#allocation2 + $0xf0] sm:$0xff]
      %v1501 = vld [vmem:[#allocation2 + $0xf8] sm:$0xff]
      %v1502 = vld [vmem:[#allocation2 + $0x100] sm:$0xff]
      %v1503 = vld [vmem:[#allocation2 + $0x108] sm:$0xff]
      %v1504 = vld [vmem:[#allocation2 + $0x110] sm:$0xff]
      %v1505 = vld [vmem:[#allocation2 + $0x118] sm:$0xff]
      %v1506 = vld [vmem:[#allocation2 + $0x120] sm:$0xff]
      %v1507 = vld [vmem:[#allocation2 + $0x128] sm:$0xff]
      %v1508 = vld [vmem:[#allocation2 + $0x130] sm:$0xff]
      %v1509 = vld [vmem:[#allocation2 + $0x138] sm:$0xff]
      %v1510 = vld [vmem:[#allocation2 + $0x140] sm:$0xff]
      %v1511 = vld [vmem:[#allocation2 + $0x148] sm:$0xff]
      %v1512 = vld [vmem:[#allocation2 + $0x150] sm:$0xff]
      %v1513 = vld [vmem:[#allocation2 + $0x158] sm:$0xff]
      %v1514 = vld [vmem:[#allocation2 + $0x160] sm:$0xff]
      %v1515 = vld [vmem:[#allocation2 + $0x168] sm:$0xff]
      %v1516 = vld [vmem:[#allocation2 + $0x170] sm:$0xff]
      %v1517 = vld [vmem:[#allocation2 + $0x178] sm:$0xff]
      %v1518 = vld [vmem:[#allocation2 + $0x180] sm:$0xff]
      %v1519 = vld [vmem:[#allocation2 + $0x188] sm:$0xff]
      %v1520 = vld [vmem:[#allocation2 + $0x190] sm:$0xff]
      %v1521 = vld [vmem:[#allocation2 + $0x198] sm:$0xff]
      %v1522 = vld [vmem:[#allocation2 + $0x1a0] sm:$0xff]
      %v1523 = vld [vmem:[#allocation2 + $0x1a8] sm:$0xff]
      %v1524 = vld [vmem:[#allocation2 + $0x1b0] sm:$0xff]
      %v1525 = vld [vmem:[#allocation2 + $0x1b8] sm:$0xff]
      %v1526 = vld [vmem:[#allocation2 + $0x1c0] sm:$0xff]
      %v1527 = vld [vmem:[#allocation2 + $0x1c8] sm:$0xff]
      %v1528 = vld [vmem:[#allocation2 + $0x1d0] sm:$0xff]
      %v1529 = vld [vmem:[#allocation2 + $0x1d8] sm:$0xff]
      %v1530 = vld [vmem:[#allocation2 + $0x1e0] sm:$0xff]
      %v1531 = vld [vmem:[#allocation2 + $0x1e8] sm:$0xff]
      %v1532 = vld [vmem:[#allocation2 + $0x1f0] sm:$0xff]
      %v1533 = vld [vmem:[#allocation2 + $0x1f8] sm:$0xff]
      %v1534 = vld [vmem:[#allocation2 + $0x200] sm:$0xff]
      %v1535 = vld [vmem:[#allocation2 + $0x208] sm:$0xff]
      %v1536 = vld [vmem:[#allocation2 + $0x210] sm:$0xff]
      %v1537 = vld [vmem:[#allocation2 + $0x218] sm:$0xff]
      %v1538 = vld [vmem:[#allocation2 + $0x220] sm:$0xff]
      %v1539 = vld [vmem:[#allocation2 + $0x228] sm:$0xff]
      %v1540 = vld [vmem:[#allocation2 + $0x230] sm:$0xff]
      %v1541 = vld [vmem:[#allocation2 + $0x238] sm:$0xff]
      %v1542 = vld [vmem:[#allocation2 + $0x240] sm:$0xff]
      %v1543 = vld [vmem:[#allocation2 + $0x248] sm:$0xff]
      %v1544 = vld [vmem:[#allocation2 + $0x250] sm:$0xff]
      %v1545 = vld [vmem:[#allocation2 + $0x258] sm:$0xff]
      %v1546 = vld [vmem:[#allocation2 + $0x260] sm:$0xff]
      %v1547 = vld [vmem:[#allocation2 + $0x268] sm:$0xff]
      %v1548 = vld [vmem:[#allocation2 + $0x270] sm:$0xff]
      %v1549 = vld [vmem:[#allocation2 + $0x278] sm:$0xff]
      %v1550 = vld [vmem:[#allocation2 + $0x280] sm:$0xff]
      %v1551 = vld [vmem:[#allocation2 + $0x288] sm:$0xff]
      %v1552 = vld [vmem:[#allocation2 + $0x290] sm:$0xff]
      %v1553 = vld [vmem:[#allocation2 + $0x298] sm:$0xff]
      %v1554 = vld [vmem:[#allocation2 + $0x2a0] sm:$0xff]
      %v1555 = vld [vmem:[#allocation2 + $0x2a8] sm:$0xff]
      %v1556 = vld [vmem:[#allocation2 + $0x2b0] sm:$0xff]
      %v1557 = vld [vmem:[#allocation2 + $0x2b8] sm:$0xff]
      %v1558 = vld [vmem:[#allocation2 + $0x2c0] sm:$0xff]
      %v1559 = vld [vmem:[#allocation2 + $0x2c8] sm:$0xff]
      %v1560 = vld [vmem:[#allocation2 + $0x2d0] sm:$0xff]
      %v1561 = vld [vmem:[#allocation2 + $0x2d8] sm:$0xff]
      %v1562 = vld [vmem:[#allocation2 + $0x2e0] sm:$0xff]
      %v1563 = vld [vmem:[#allocation2 + $0x2e8] sm:$0xff]
      %v1564 = vld [vmem:[#allocation2 + $0x2f0] sm:$0xff]
      %v1565 = vld [vmem:[#allocation2 + $0x2f8] sm:$0xff]
      %v1566 = vld [vmem:[#allocation2 + $0x300] sm:$0xff]
      %v1567 = vld [vmem:[#allocation2 + $0x308] sm:$0xff]
      %v1568 = vld [vmem:[#allocation2 + $0x310] sm:$0xff]
      %v1569 = vld [vmem:[#allocation2 + $0x318] sm:$0xff]
      %v1570 = vld [vmem:[%s6] sm:$0xff]
      %v1571 = vld [vmem:[%s6 + $0x8] sm:$0xff]
      %v1572 = vld [vmem:[%s6 + $0x10] sm:$0xff]
      %v1573 = vld [vmem:[%s6 + $0x18] sm:$0xff]
      %v1574 = vld [vmem:[%s6 + $0x20] sm:$0xff]
      %v1575 = vld [vmem:[%s6 + $0x28] sm:$0xff]
      %v1576 = vld [vmem:[%s6 + $0x30] sm:$0xff]
      %v1577 = vld [vmem:[%s6 + $0x38] sm:$0xff]
      %v1578 = vld [vmem:[%s6 + $0x40] sm:$0xff]
      %v1579 = vld [vmem:[%s6 + $0x48] sm:$0xff]
      %v1580 = vld [vmem:[%s6 + $0x50] sm:$0xff]
      %v1581 = vld [vmem:[%s6 + $0x58] sm:$0xff]
      %1583 = vset.pattern.permute.xlu0 0
      %1584 = vperm.xlu0 %1583, %v849
      %v1585 = vpop.permute.xlu0 %1584
      %1588 = vset.pattern.permute.xlu0 0
      %1589 = vperm.xlu0 %1588, %v850
      %v1590 = vpop.permute.xlu0 %1589
      %1593 = vset.pattern.permute.xlu0 0
      %1594 = vperm.xlu0 %1593, %v851
      %v1595 = vpop.permute.xlu0 %1594
      %v1598 = vsel %vm618, %v1573, 0
      %v1601 = vsel %vm618, %v1577, 0
      %v1604 = vsel %vm618, %v1581, 0
      %1606 = vmatprep.subr.mxu0 %v1471
      %1607 = vmatpush1.msra.mxu0 %v1470
      %1608 = vmatprep.subr.mxu0 %v1473
      %1609 = vmatpush1.msra.mxu0 %v1472
      %1610 = vmatprep.subr.mxu0 %v1475
      %1611 = vmatpush1.msra.mxu0 %v1474
      %1612 = vmatprep.subr.mxu0 %v1477
      %1613 = vmatpush1.msra.mxu0 %v1476
      %1614 = vmatprep.subr.mxu0 %v1479
      %1615 = vmatpush1.msra.mxu0 %v1478
      %1616 = vmatprep.subr.mxu0 %v1481
      %1617 = vmatpush1.msra.mxu0 %v1480
      %1618 = vmatprep.subr.mxu0 %v1483
      %1619 = vmatpush1.msra.mxu0 %v1482
      %1620 = vmatprep.subr.mxu0 %v1485
      %1621 = vmatpush1.msra.mxu0 %v1484
      %1622 = vmatprep.subr.mxu0 %v1487
      %1623 = vmatpush1.msra.mxu0 %v1486
      %1624 = vmatprep.subr.mxu0 %v1489
      %1625 = vmatpush1.msra.mxu0 %v1488
      %1626 = vmatprep.subr.mxu0 %v1491
      %1627 = vmatpush1.msra.mxu0 %v1490
      %1628 = vmatprep.subr.mxu0 %v1493
      %1629 = vmatpush1.msra.mxu0 %v1492
      %1630 = vmatprep.subr.mxu0 %v1495
      %1631 = vmatpush1.msra.mxu0 %v1494
      %1632 = vmatprep.subr.mxu0 %v1497
      %1633 = vmatpush1.msra.mxu0 %v1496
      %1634 = vmatprep.subr.mxu0 %v1499
      %1635 = vmatpush1.msra.mxu0 %v1498
      %1636 = vmatprep.subr.mxu0 %v1501
      %1637 = vmatpush1.msra.mxu0 %v1500
      %1638 = vmatprep.subr.mxu0 %v1503
      %1639 = vmatpush1.msra.mxu0 %v1502
      %1640 = vmatprep.subr.mxu0 %v1505
      %1641 = vmatpush1.msra.mxu0 %v1504
      %1642 = vmatprep.subr.mxu0 %v1507
      %1643 = vmatpush1.msra.mxu0 %v1506
      %1644 = vmatprep.subr.mxu0 %v1509
      %1645 = vmatpush1.msra.mxu0 %v1508
      %1646 = vmatprep.subr.mxu0 %v1511
      %1647 = vmatpush1.msra.mxu0 %v1510
      %1648 = vmatprep.subr.mxu0 %v1513
      %1649 = vmatpush1.msra.mxu0 %v1512
      %1650 = vmatprep.subr.mxu0 %v1515
      %1651 = vmatpush1.msra.mxu0 %v1514
      %1652 = vmatprep.subr.mxu0 %v1517
      %1653 = vmatpush1.msra.mxu0 %v1516
      %1654 = vmatprep.subr.mxu0 %v1519
      %1655 = vmatpush1.msra.mxu0 %v1518
      %1656 = vmatprep.subr.mxu0 %v1521
      %1657 = vmatpush1.msra.mxu0 %v1520
      %1658 = vmatprep.subr.mxu0 %v1523
      %1659 = vmatpush1.msra.mxu0 %v1522
      %1660 = vmatprep.subr.mxu0 %v1525
      %1661 = vmatpush1.msra.mxu0 %v1524
      %1662 = vmatprep.subr.mxu0 %v1527
      %1663 = vmatpush1.msra.mxu0 %v1526
      %1664 = vmatprep.subr.mxu0 %v1529
      %1665 = vmatpush1.msra.mxu0 %v1528
      %1666 = vmatprep.subr.mxu0 %v1531
      %1667 = vmatpush1.msra.mxu0 %v1530
      %1668 = vmatprep.subr.mxu0 %v1533
      %1669 = vmatpush1.msra.mxu0 %v1532
      %1670 = vmatprep.mubr.f32.mxu0 %v1571
      %1671 = vmatmul.mubr.f32.gmra.mrb[0].mxu0 %v1570
      %v1672 = vpop.f32.mrb[0].mxu0
      %v1673 = vadd.f32 %v1585, %v1672
      %v1674 = vpop.f32.mrb[0].mxu0
      %v1675 = vadd.f32 %v1585, %v1674
      %1676 = vmatprep.mubr.f32.mxu0 %v1575
      %1677 = vmatmul.mubr.f32.gmra.mrb[0].mxu0 %v1574
      %v1678 = vpop.f32.mrb[0].mxu0
      %v1679 = vadd.f32 %v1590, %v1678
      %v1680 = vpop.f32.mrb[0].mxu0
      %v1681 = vadd.f32 %v1590, %v1680
      %1682 = vmatprep.mubr.f32.mxu0 %v1579
      %1683 = vmatmul.mubr.f32.gmra.mrb[0].mxu0 %v1578
      %v1684 = vpop.f32.mrb[0].mxu0
      %v1685 = vadd.f32 %v1595, %v1684
      %v1686 = vpop.f32.mrb[0].mxu0
      %v1687 = vadd.f32 %v1595, %v1686
      %1688 = vdwg.mxu0
      %1689 = vmatprep.subr.mxu0 %v1535
      %1690 = vmatpush1.msra.mxu0 %v1534
      %1691 = vmatprep.subr.mxu0 %v1537
      %1692 = vmatpush1.msra.mxu0 %v1536
      %1693 = vmatprep.subr.mxu0 %v1539
      %1694 = vmatpush1.msra.mxu0 %v1538
      %1695 = vmatprep.subr.mxu0 %v1541
      %1696 = vmatpush1.msra.mxu0 %v1540
      %1697 = vmatprep.subr.mxu0 %v1543
      %1698 = vmatpush1.msra.mxu0 %v1542
      %1699 = vmatprep.subr.mxu0 %v1545
      %1700 = vmatpush1.msra.mxu0 %v1544
      %1701 = vmatprep.subr.mxu0 %v1547
      %1702 = vmatpush1.msra.mxu0 %v1546
      %1703 = vmatprep.subr.mxu0 %v1549
      %1704 = vmatpush1.msra.mxu0 %v1548
      %1705 = vmatprep.subr.mxu0 %v1551
      %1706 = vmatpush1.msra.mxu0 %v1550
      %1707 = vmatprep.subr.mxu0 %v1553
      %1708 = vmatpush1.msra.mxu0 %v1552
      %1709 = vmatprep.subr.mxu0 %v1555
      %1710 = vmatpush1.msra.mxu0 %v1554
      %1711 = vmatprep.subr.mxu0 %v1557
      %1712 = vmatpush1.msra.mxu0 %v1556
      %1713 = vmatprep.subr.mxu0 %v1559
      %1714 = vmatpush1.msra.mxu0 %v1558
      %1715 = vmatprep.subr.mxu0 %v1561
      %1716 = vmatpush1.msra.mxu0 %v1560
      %1717 = vmatprep.subr.mxu0 %v1563
      %1718 = vmatpush1.msra.mxu0 %v1562
      %1719 = vmatprep.subr.mxu0 %v1565
      %1720 = vmatpush1.msra.mxu0 %v1564
      %1721 = vmatprep.subr.mxu0 %v1567
      %1722 = vmatpush1.msra.mxu0 %v1566
      %1723 = vmatprep.subr.mxu0 %v1569
      %1724 = vmatpush1.msra.mxu0 %v1568
      %1725 = vmatprep.subr.mxu0 0.0
      %1726 = vmatpush1.msra.mxu0 0.0
      %1727 = vmatprep.subr.mxu0 0.0
      %1728 = vmatpush1.msra.mxu0 0.0
      %1729 = vmatprep.subr.mxu0 0.0
      %1730 = vmatpush1.msra.mxu0 0.0
      %1731 = vmatprep.subr.mxu0 0.0
      %1732 = vmatpush1.msra.mxu0 0.0
      %1733 = vmatprep.subr.mxu0 0.0
      %1734 = vmatpush1.msra.mxu0 0.0
      %1735 = vmatprep.subr.mxu0 0.0
      %1736 = vmatpush1.msra.mxu0 0.0
      %1737 = vmatprep.subr.mxu0 0.0
      %1738 = vmatpush1.msra.mxu0 0.0
      %1739 = vmatprep.subr.mxu0 0.0
      %1740 = vmatpush1.msra.mxu0 0.0
      %1741 = vmatprep.subr.mxu0 0.0
      %1742 = vmatpush1.msra.mxu0 0.0
      %1743 = vmatprep.subr.mxu0 0.0
      %1744 = vmatpush1.msra.mxu0 0.0
      %1745 = vmatprep.subr.mxu0 0.0
      %1746 = vmatpush1.msra.mxu0 0.0
      %1747 = vmatprep.subr.mxu0 0.0
      %1748 = vmatpush1.msra.mxu0 0.0
      %1749 = vmatprep.subr.mxu0 0.0
      %1750 = vmatpush1.msra.mxu0 0.0
      %1751 = vmatprep.subr.mxu0 0.0
      %1752 = vmatpush1.msra.mxu0 0.0
      %1753 = vmatprep.mubr.f32.mxu0 %v1598
      %1754 = vmatmul.mubr.f32.gmra.mrb[0].mxu0 %v1572
      %v1755 = vpop.f32.mrb[0].mxu0
      %v1756 = vadd.f32 %v1673, %v1755
      %v1757 = vpop.f32.mrb[0].mxu0
      %v1758 = vadd.f32 %v1675, %v1757
      %1759 = vmatprep.mubr.f32.mxu0 %v1601
      %1760 = vmatmul.mubr.f32.gmra.mrb[0].mxu0 %v1576
      %v1761 = vpop.f32.mrb[0].mxu0
      %v1762 = vadd.f32 %v1679, %v1761
      %v1763 = vpop.f32.mrb[0].mxu0
      %v1764 = vadd.f32 %v1681, %v1763
      %1765 = vmatprep.mubr.f32.mxu0 %v1604
      %1766 = vmatmul.mubr.f32.gmra.mrb[0].mxu0 %v1580
      %v1767 = vpop.f32.mrb[0].mxu0
      %v1768 = vadd.f32 %v1685, %v1767
      %v1769 = vpop.f32.mrb[0].mxu0
      %v1770 = vadd.f32 %v1687, %v1769
      %1771 = vdwg.mxu0
      %v1772 = vld [vmem:[%s9] sm:$0xff]
      %v1773 = vld [vmem:[%s9 + $0x8] sm:$0xff]
      %v1774 = vld [vmem:[%s9 + $0x10] sm:$0xff]
      %1779 = vrot.lane.b32.xlu0 %v557, 17
      %v1780 = vpop.permute.xlu0 %1779
      %1781 = vrot.lane.b32.xlu0 %v559, 17
      %v1782 = vpop.permute.xlu0 %1781
      %1783 = vrot.lane.b32.xlu0 %v563, 17
      %v1784 = vpop.permute.xlu0 %1783
      %1785 = vrot.lane.b32.xlu0 %v565, 17
      %v1786 = vpop.permute.xlu0 %1785
      %v1787 = vsel %vm588, %v1780, %v1782
      %v1788 = vsel %vm588, %v1784, %v1786
      %v1793 = vsel %vm588, 0.0, %v1780
      %v1794 = vsel %vm588, 0.0, %v1784
      %v1795 = vmul.f32 %v1793, %v603
      %v1796 = vmul.f32 %v1787, %v607
      %v1797 = vmul.f32 %v1794, %v603
      %v1798 = vmul.f32 %v1788, %v607
      %1799 = vst [vmem:[#allocation2] sm:$0xff] %v1795
      %1800 = vst [vmem:[#allocation2 + $0x8] sm:$0xff] %v1796
      %1801 = vst [vmem:[#allocation2 + $0x10] sm:$0xff] %v1797
      %1802 = vst [vmem:[#allocation2 + $0x18] sm:$0xff] %v1798
      %1803 = vrot.lane.b32.xlu0 %v557, 16
      %v1804 = vpop.permute.xlu0 %1803
      %1805 = vrot.lane.b32.xlu0 %v559, 16
      %v1806 = vpop.permute.xlu0 %1805
      %1807 = vrot.lane.b32.xlu0 %v563, 16
      %v1808 = vpop.permute.xlu0 %1807
      %1809 = vrot.lane.b32.xlu0 %v565, 16
      %v1810 = vpop.permute.xlu0 %1809
      %v1811 = vsel %vm618, %v1804, %v1806
      %v1812 = vsel %vm618, %v1808, %v1810
      %v1817 = vsel %vm618, 0.0, %v1804
      %v1818 = vsel %vm618, 0.0, %v1808
      %1819 = vst [vmem:[#allocation2 + $0x20] sm:$0xff] %v1817
      %1820 = vst [vmem:[#allocation2 + $0x28] sm:$0xff] %v1811
      %1821 = vst [vmem:[#allocation2 + $0x30] sm:$0xff] %v1818
      %1822 = vst [vmem:[#allocation2 + $0x38] sm:$0xff] %v1812
      %1823 = vrot.lane.b32.xlu0 %v557, 15
      %v1824 = vpop.permute.xlu0 %1823
      %1825 = vrot.lane.b32.xlu0 %v559, 15
      %v1826 = vpop.permute.xlu0 %1825
      %1827 = vrot.lane.b32.xlu0 %v563, 15
      %v1828 = vpop.permute.xlu0 %1827
      %1829 = vrot.lane.b32.xlu0 %v565, 15
      %v1830 = vpop.permute.xlu0 %1829
      %v1831 = vsel %vm629, %v1824, %v1826
      %v1832 = vsel %vm629, %v1828, %v1830
      %v1837 = vsel %vm629, 0.0, %v1824
      %v1838 = vsel %vm629, 0.0, %v1828
      %v1839 = vmul.f32 %v1837, %v644
      %v1840 = vmul.f32 %v1831, %v648
      %v1841 = vmul.f32 %v1838, %v644
      %v1842 = vmul.f32 %v1832, %v648
      %1843 = vst [vmem:[#allocation2 + $0x40] sm:$0xff] %v1839
      %1844 = vst [vmem:[#allocation2 + $0x48] sm:$0xff] %v1840
      %1845 = vst [vmem:[#allocation2 + $0x50] sm:$0xff] %v1841
      %1846 = vst [vmem:[#allocation2 + $0x58] sm:$0xff] %v1842
      %1847 = vrot.lane.b32.xlu0 %v557, 1
      %v1848 = vpop.permute.xlu0 %1847
      %1849 = vrot.lane.b32.xlu0 %v559, 1
      %v1850 = vpop.permute.xlu0 %1849
      %1851 = vrot.lane.b32.xlu0 %v563, 1
      %v1852 = vpop.permute.xlu0 %1851
      %1853 = vrot.lane.b32.xlu0 %v565, 1
      %v1854 = vpop.permute.xlu0 %1853
      %v1855 = vsel %vm659, %v1848, %v1850
      %v1856 = vsel %vm659, %v1852, %v1854
      %v1861 = vsel %vm659, 0.0, %v1848
      %v1862 = vsel %vm659, 0.0, %v1852
      %v1863 = vmul.f32 %v1861, %v603
      %v1864 = vmul.f32 %v1855, %v607
      %v1865 = vmul.f32 %v1862, %v603
      %v1866 = vmul.f32 %v1856, %v607
      %1867 = vst [vmem:[#allocation2 + $0x60] sm:$0xff] %v1863
      %1868 = vst [vmem:[#allocation2 + $0x68] sm:$0xff] %v1864
      %1869 = vst [vmem:[#allocation2 + $0x70] sm:$0xff] %v1865
      %1870 = vst [vmem:[#allocation2 + $0x78] sm:$0xff] %v1866
      %1871 = vst [vmem:[#allocation2 + $0x80] sm:$0xff] %v557
      %1872 = vst [vmem:[#allocation2 + $0x88] sm:$0xff] %v559
      %1873 = vst [vmem:[#allocation2 + $0x90] sm:$0xff] %v563
      %1874 = vst [vmem:[#allocation2 + $0x98] sm:$0xff] %v565
      %1875 = vrot.lane.b32.xlu0 %v557, 127
      %v1876 = vpop.permute.xlu0 %1875
      %1877 = vrot.lane.b32.xlu0 %v559, 127
      %v1878 = vpop.permute.xlu0 %1877
      %1879 = vrot.lane.b32.xlu0 %v563, 127
      %v1880 = vpop.permute.xlu0 %1879
      %1881 = vrot.lane.b32.xlu0 %v565, 127
      %v1882 = vpop.permute.xlu0 %1881
      %v1883 = vsel %vm674, %v1876, %v1878
      %v1884 = vsel %vm674, %v1880, %v1882
      %v1889 = vsel %vm674, %v1878, 0.0
      %v1890 = vsel %vm674, %v1882, 0.0
      %v1891 = vmul.f32 %v1883, %v644
      %v1892 = vmul.f32 %v1889, %v648
      %v1893 = vmul.f32 %v1884, %v644
      %v1894 = vmul.f32 %v1890, %v648
      %1895 = vst [vmem:[#allocation2 + $0xa0] sm:$0xff] %v1891
      %1896 = vst [vmem:[#allocation2 + $0xa8] sm:$0xff] %v1892
      %1897 = vst [vmem:[#allocation2 + $0xb0] sm:$0xff] %v1893
      %1898 = vst [vmem:[#allocation2 + $0xb8] sm:$0xff] %v1894
      %1899 = vrot.lane.b32.xlu0 %v557, 113
      %v1900 = vpop.permute.xlu0 %1899
      %1901 = vrot.lane.b32.xlu0 %v559, 113
      %v1902 = vpop.permute.xlu0 %1901
      %1903 = vrot.lane.b32.xlu0 %v563, 113
      %v1904 = vpop.permute.xlu0 %1903
      %1905 = vrot.lane.b32.xlu0 %v565, 113
      %v1906 = vpop.permute.xlu0 %1905
      %v1907 = vsel %vm687, %v1900, %v1902
      %v1908 = vsel %vm687, %v1904, %v1906
      %v1913 = vsel %vm687, %v1902, 0.0
      %v1914 = vsel %vm687, %v1906, 0.0
      %v1915 = vmul.f32 %v1907, %v603
      %v1916 = vmul.f32 %v1913, %v607
      %v1917 = vmul.f32 %v1908, %v603
      %v1918 = vmul.f32 %v1914, %v607
      %1919 = vst [vmem:[#allocation2 + $0xc0] sm:$0xff] %v1915
      %1920 = vst [vmem:[#allocation2 + $0xc8] sm:$0xff] %v1916
      %1921 = vst [vmem:[#allocation2 + $0xd0] sm:$0xff] %v1917
      %1922 = vst [vmem:[#allocation2 + $0xd8] sm:$0xff] %v1918
      %1923 = vrot.lane.b32.xlu0 %v557, 112
      %v1924 = vpop.permute.xlu0 %1923
      %1925 = vrot.lane.b32.xlu0 %v559, 112
      %v1926 = vpop.permute.xlu0 %1925
      %1927 = vrot.lane.b32.xlu0 %v563, 112
      %v1928 = vpop.permute.xlu0 %1927
      %1929 = vrot.lane.b32.xlu0 %v565, 112
      %v1930 = vpop.permute.xlu0 %1929
      %v1931 = vsel %vm700, %v1924, %v1926
      %v1932 = vsel %vm700, %v1928, %v1930
      %v1937 = vsel %vm700, %v1926, 0.0
      %v1938 = vsel %vm700, %v1930, 0.0
      %1939 = vst [vmem:[#allocation2 + $0xe0] sm:$0xff] %v1931
      %1940 = vst [vmem:[#allocation2 + $0xe8] sm:$0xff] %v1937
      %1941 = vst [vmem:[#allocation2 + $0xf0] sm:$0xff] %v1932
      %1942 = vst [vmem:[#allocation2 + $0xf8] sm:$0xff] %v1938
      %1943 = vrot.lane.b32.xlu0 %v557, 111
      %v1944 = vpop.permute.xlu0 %1943
      %1945 = vrot.lane.b32.xlu0 %v559, 111
      %v1946 = vpop.permute.xlu0 %1945
      %1947 = vrot.lane.b32.xlu0 %v563, 111
      %v1948 = vpop.permute.xlu0 %1947
      %1949 = vrot.lane.b32.xlu0 %v565, 111
      %v1950 = vpop.permute.xlu0 %1949
      %v1951 = vsel %vm711, %v1944, %v1946
      %v1952 = vsel %vm711, %v1948, %v1950
      %v1957 = vsel %vm711, %v1946, 0.0
      %v1958 = vsel %vm711, %v1950, 0.0
      %v1959 = vmul.f32 %v1951, %v644
      %v1960 = vmul.f32 %v1957, %v648
      %v1961 = vmul.f32 %v1952, %v644
      %v1962 = vmul.f32 %v1958, %v648
      %1963 = vst [vmem:[#allocation2 + $0x100] sm:$0xff] %v1959
      %1964 = vst [vmem:[#allocation2 + $0x108] sm:$0xff] %v1960
      %1965 = vst [vmem:[#allocation2 + $0x110] sm:$0xff] %v1961
      %1966 = vst [vmem:[#allocation2 + $0x118] sm:$0xff] %v1962
      %v1967 = vld [vmem:[#allocation2] sm:$0xff]
      %v1968 = vld [vmem:[#allocation2 + $0x8] sm:$0xff]
      %v1969 = vld [vmem:[#allocation2 + $0x10] sm:$0xff]
      %v1970 = vld [vmem:[#allocation2 + $0x18] sm:$0xff]
      %v1971 = vld [vmem:[#allocation2 + $0x20] sm:$0xff]
      %v1972 = vld [vmem:[#allocation2 + $0x28] sm:$0xff]
      %v1973 = vld [vmem:[#allocation2 + $0x30] sm:$0xff]
      %v1974 = vld [vmem:[#allocation2 + $0x38] sm:$0xff]
      %v1975 = vld [vmem:[#allocation2 + $0x40] sm:$0xff]
      %v1976 = vld [vmem:[#allocation2 + $0x48] sm:$0xff]
      %v1977 = vld [vmem:[#allocation2 + $0x50] sm:$0xff]
      %v1978 = vld [vmem:[#allocation2 + $0x58] sm:$0xff]
      %v1979 = vld [vmem:[#allocation2 + $0x60] sm:$0xff]
      %v1980 = vld [vmem:[#allocation2 + $0x68] sm:$0xff]
      %v1981 = vld [vmem:[#allocation2 + $0x70] sm:$0xff]
      %v1982 = vld [vmem:[#allocation2 + $0x78] sm:$0xff]
      %v1983 = vld [vmem:[#allocation2 + $0x80] sm:$0xff]
      %v1984 = vld [vmem:[#allocation2 + $0x88] sm:$0xff]
      %v1985 = vld [vmem:[#allocation2 + $0x90] sm:$0xff]
      %v1986 = vld [vmem:[#allocation2 + $0x98] sm:$0xff]
      %v1987 = vld [vmem:[#allocation2 + $0xa0] sm:$0xff]
      %v1988 = vld [vmem:[#allocation2 + $0xa8] sm:$0xff]
      %v1989 = vld [vmem:[#allocation2 + $0xb0] sm:$0xff]
      %v1990 = vld [vmem:[#allocation2 + $0xb8] sm:$0xff]
      %v1991 = vld [vmem:[#allocation2 + $0xc0] sm:$0xff]
      %v1992 = vld [vmem:[#allocation2 + $0xc8] sm:$0xff]
      %v1993 = vld [vmem:[#allocation2 + $0xd0] sm:$0xff]
      %v1994 = vld [vmem:[#allocation2 + $0xd8] sm:$0xff]
      %v1995 = vld [vmem:[#allocation2 + $0xe0] sm:$0xff]
      %v1996 = vld [vmem:[#allocation2 + $0xe8] sm:$0xff]
      %v1997 = vld [vmem:[#allocation2 + $0xf0] sm:$0xff]
      %v1998 = vld [vmem:[#allocation2 + $0xf8] sm:$0xff]
      %v1999 = vld [vmem:[#allocation2 + $0x100] sm:$0xff]
      %v2000 = vld [vmem:[#allocation2 + $0x108] sm:$0xff]
      %v2001 = vld [vmem:[#allocation2 + $0x110] sm:$0xff]
      %v2002 = vld [vmem:[#allocation2 + $0x118] sm:$0xff]
      %v2003 = vld [vmem:[%s8] sm:$0xff]
      %v2004 = vld [vmem:[%s8 + $0x8] sm:$0xff]
      %v2005 = vld [vmem:[%s8 + $0x10] sm:$0xff]
      %v2006 = vld [vmem:[%s8 + $0x18] sm:$0xff]
      %v2007 = vld [vmem:[%s8 + $0x20] sm:$0xff]
      %v2008 = vld [vmem:[%s8 + $0x28] sm:$0xff]
      %2010 = vset.pattern.permute.xlu0 0
      %2011 = vperm.xlu0 %2010, %v1772
      %v2012 = vpop.permute.xlu0 %2011
      %2015 = vset.pattern.permute.xlu0 0
      %2016 = vperm.xlu0 %2015, %v1773
      %v2017 = vpop.permute.xlu0 %2016
      %2020 = vset.pattern.permute.xlu0 0
      %2021 = vperm.xlu0 %2020, %v1774
      %v2022 = vpop.permute.xlu0 %2021
      %v2025 = vsel %vm618, %v2004, 0
      %v2028 = vsel %vm618, %v2006, 0
      %v2031 = vsel %vm618, %v2008, 0
      %2033 = vmatprep.subr.mxu0 %v1968
      %2034 = vmatpush1.msra.mxu0 %v1967
      %2035 = vmatprep.subr.mxu0 %v1970
      %2036 = vmatpush1.msra.mxu0 %v1969
      %2037 = vmatprep.subr.mxu0 %v1972
      %2038 = vmatpush1.msra.mxu0 %v1971
      %2039 = vmatprep.subr.mxu0 %v1974
      %2040 = vmatpush1.msra.mxu0 %v1973
      %2041 = vmatprep.subr.mxu0 %v1976
      %2042 = vmatpush1.msra.mxu0 %v1975
      %2043 = vmatprep.subr.mxu0 %v1978
      %2044 = vmatpush1.msra.mxu0 %v1977
      %2045 = vmatprep.subr.mxu0 %v1980
      %2046 = vmatpush1.msra.mxu0 %v1979
      %2047 = vmatprep.subr.mxu0 %v1982
      %2048 = vmatpush1.msra.mxu0 %v1981
      %2049 = vmatprep.subr.mxu0 %v1984
      %2050 = vmatpush1.msra.mxu0 %v1983
      %2051 = vmatprep.subr.mxu0 %v1986
      %2052 = vmatpush1.msra.mxu0 %v1985
      %2053 = vmatprep.subr.mxu0 %v1988
      %2054 = vmatpush1.msra.mxu0 %v1987
      %2055 = vmatprep.subr.mxu0 %v1990
      %2056 = vmatpush1.msra.mxu0 %v1989
      %2057 = vmatprep.subr.mxu0 %v1992
      %2058 = vmatpush1.msra.mxu0 %v1991
      %2059 = vmatprep.subr.mxu0 %v1994
      %2060 = vmatpush1.msra.mxu0 %v1993
      %2061 = vmatprep.subr.mxu0 %v1996
      %2062 = vmatpush1.msra.mxu0 %v1995
      %2063 = vmatprep.subr.mxu0 %v1998
      %2064 = vmatpush1.msra.mxu0 %v1997
      %2065 = vmatprep.subr.mxu0 %v2000
      %2066 = vmatpush1.msra.mxu0 %v1999
      %2067 = vmatprep.subr.mxu0 %v2002
      %2068 = vmatpush1.msra.mxu0 %v2001
      %2069 = vmatprep.subr.mxu0 0.0
      %2070 = vmatpush1.msra.mxu0 0.0
      %2071 = vmatprep.subr.mxu0 0.0
      %2072 = vmatpush1.msra.mxu0 0.0
      %2073 = vmatprep.subr.mxu0 0.0
      %2074 = vmatpush1.msra.mxu0 0.0
      %2075 = vmatprep.subr.mxu0 0.0
      %2076 = vmatpush1.msra.mxu0 0.0
      %2077 = vmatprep.subr.mxu0 0.0
      %2078 = vmatpush1.msra.mxu0 0.0
      %2079 = vmatprep.subr.mxu0 0.0
      %2080 = vmatpush1.msra.mxu0 0.0
      %2081 = vmatprep.subr.mxu0 0.0
      %2082 = vmatpush1.msra.mxu0 0.0
      %2083 = vmatprep.subr.mxu0 0.0
      %2084 = vmatpush1.msra.mxu0 0.0
      %2085 = vmatprep.subr.mxu0 0.0
      %2086 = vmatpush1.msra.mxu0 0.0
      %2087 = vmatprep.subr.mxu0 0.0
      %2088 = vmatpush1.msra.mxu0 0.0
      %2089 = vmatprep.subr.mxu0 0.0
      %2090 = vmatpush1.msra.mxu0 0.0
      %2091 = vmatprep.subr.mxu0 0.0
      %2092 = vmatpush1.msra.mxu0 0.0
      %2093 = vmatprep.subr.mxu0 0.0
      %2094 = vmatpush1.msra.mxu0 0.0
      %2095 = vmatprep.subr.mxu0 0.0
      %2096 = vmatpush1.msra.mxu0 0.0
      %2097 = vmatprep.mubr.f32.mxu0 %v2025
      %2098 = vmatmul.mubr.f32.gmra.mrb[0].mxu0 %v2003
      %v2099 = vpop.f32.mrb[0].mxu0
      %v2100 = vadd.f32 %v2012, %v2099
      %v2101 = vpop.f32.mrb[0].mxu0
      %v2102 = vadd.f32 %v2012, %v2101
      %2103 = vmatprep.mubr.f32.mxu0 %v2028
      %2104 = vmatmul.mubr.f32.gmra.mrb[0].mxu0 %v2005
      %v2105 = vpop.f32.mrb[0].mxu0
      %v2106 = vadd.f32 %v2017, %v2105
      %v2107 = vpop.f32.mrb[0].mxu0
      %v2108 = vadd.f32 %v2017, %v2107
      %2109 = vmatprep.mubr.f32.mxu0 %v2031
      %2110 = vmatmul.mubr.f32.gmra.mrb[0].mxu0 %v2007
      %v2111 = vpop.f32.mrb[0].mxu0
      %v2112 = vadd.f32 %v2022, %v2111
      %v2113 = vpop.f32.mrb[0].mxu0
      %v2114 = vadd.f32 %v2022, %v2113
      %2115 = vdwg.mxu0
      %v2116 = vld [vmem:[%s11] sm:$0xff]
      %v2117 = vld [vmem:[%s11 + $0x8] sm:$0xff]
      %v2118 = vld [vmem:[%s11 + $0x10] sm:$0xff]
      %2125 = vrot.lane.b32.xlu0 %v2100, 17
      %v2126 = vpop.permute.xlu0 %2125
      %2127 = vrot.lane.b32.xlu0 %v2102, 17
      %v2128 = vpop.permute.xlu0 %2127
      %2129 = vrot.lane.b32.xlu0 %v2106, 17
      %v2130 = vpop.permute.xlu0 %2129
      %2131 = vrot.lane.b32.xlu0 %v2108, 17
      %v2132 = vpop.permute.xlu0 %2131
      %2133 = vrot.lane.b32.xlu0 %v2112, 17
      %v2134 = vpop.permute.xlu0 %2133
      %2135 = vrot.lane.b32.xlu0 %v2114, 17
      %v2136 = vpop.permute.xlu0 %2135
      %v2137 = vsel %vm588, %v2126, %v2128
      %v2138 = vsel %vm588, %v2130, %v2132
      %v2139 = vsel %vm588, %v2134, %v2136
      %v2146 = vsel %vm588, 0.0, %v2126
      %v2147 = vsel %vm588, 0.0, %v2130
      %v2148 = vsel %vm588, 0.0, %v2134
      %v2149 = vmul.f32 %v2146, %v603
      %v2150 = vmul.f32 %v2137, %v607
      %v2151 = vmul.f32 %v2147, %v603
      %v2152 = vmul.f32 %v2138, %v607
      %v2153 = vmul.f32 %v2148, %v603
      %v2154 = vmul.f32 %v2139, %v607
      %2155 = vst [vmem:[#allocation2] sm:$0xff] %v2149
      %2156 = vst [vmem:[#allocation2 + $0x8] sm:$0xff] %v2150
      %2157 = vst [vmem:[#allocation2 + $0x10] sm:$0xff] %v2151
      %2158 = vst [vmem:[#allocation2 + $0x18] sm:$0xff] %v2152
      %2159 = vst [vmem:[#allocation2 + $0x20] sm:$0xff] %v2153
      %2160 = vst [vmem:[#allocation2 + $0x28] sm:$0xff] %v2154
      %2161 = vrot.lane.b32.xlu0 %v2100, 16
      %v2162 = vpop.permute.xlu0 %2161
      %2163 = vrot.lane.b32.xlu0 %v2102, 16
      %v2164 = vpop.permute.xlu0 %2163
      %2165 = vrot.lane.b32.xlu0 %v2106, 16
      %v2166 = vpop.permute.xlu0 %2165
      %2167 = vrot.lane.b32.xlu0 %v2108, 16
      %v2168 = vpop.permute.xlu0 %2167
      %2169 = vrot.lane.b32.xlu0 %v2112, 16
      %v2170 = vpop.permute.xlu0 %2169
      %2171 = vrot.lane.b32.xlu0 %v2114, 16
      %v2172 = vpop.permute.xlu0 %2171
      %v2173 = vsel %vm618, %v2162, %v2164
      %v2174 = vsel %vm618, %v2166, %v2168
      %v2175 = vsel %vm618, %v2170, %v2172
      %v2182 = vsel %vm618, 0.0, %v2162
      %v2183 = vsel %vm618, 0.0, %v2166
      %v2184 = vsel %vm618, 0.0, %v2170
      %2185 = vst [vmem:[#allocation2 + $0x30] sm:$0xff] %v2182
      %2186 = vst [vmem:[#allocation2 + $0x38] sm:$0xff] %v2173
      %2187 = vst [vmem:[#allocation2 + $0x40] sm:$0xff] %v2183
      %2188 = vst [vmem:[#allocation2 + $0x48] sm:$0xff] %v2174
      %2189 = vst [vmem:[#allocation2 + $0x50] sm:$0xff] %v2184
      %2190 = vst [vmem:[#allocation2 + $0x58] sm:$0xff] %v2175
      %2191 = vrot.lane.b32.xlu0 %v2100, 15
      %v2192 = vpop.permute.xlu0 %2191
      %2193 = vrot.lane.b32.xlu0 %v2102, 15
      %v2194 = vpop.permute.xlu0 %2193
      %2195 = vrot.lane.b32.xlu0 %v2106, 15
      %v2196 = vpop.permute.xlu0 %2195
      %2197 = vrot.lane.b32.xlu0 %v2108, 15
      %v2198 = vpop.permute.xlu0 %2197
      %2199 = vrot.lane.b32.xlu0 %v2112, 15
      %v2200 = vpop.permute.xlu0 %2199
      %2201 = vrot.lane.b32.xlu0 %v2114, 15
      %v2202 = vpop.permute.xlu0 %2201
      %v2203 = vsel %vm629, %v2192, %v2194
      %v2204 = vsel %vm629, %v2196, %v2198
      %v2205 = vsel %vm629, %v2200, %v2202
      %v2212 = vsel %vm629, 0.0, %v2192
      %v2213 = vsel %vm629, 0.0, %v2196
      %v2214 = vsel %vm629, 0.0, %v2200
      %v2215 = vmul.f32 %v2212, %v644
      %v2216 = vmul.f32 %v2203, %v648
      %v2217 = vmul.f32 %v2213, %v644
      %v2218 = vmul.f32 %v2204, %v648
      %v2219 = vmul.f32 %v2214, %v644
      %v2220 = vmul.f32 %v2205, %v648
      %2221 = vst [vmem:[#allocation2 + $0x60] sm:$0xff] %v2215
      %2222 = vst [vmem:[#allocation2 + $0x68] sm:$0xff] %v2216
      %2223 = vst [vmem:[#allocation2 + $0x70] sm:$0xff] %v2217
      %2224 = vst [vmem:[#allocation2 + $0x78] sm:$0xff] %v2218
      %2225 = vst [vmem:[#allocation2 + $0x80] sm:$0xff] %v2219
      %2226 = vst [vmem:[#allocation2 + $0x88] sm:$0xff] %v2220
      %2227 = vrot.lane.b32.xlu0 %v2100, 1
      %v2228 = vpop.permute.xlu0 %2227
      %2229 = vrot.lane.b32.xlu0 %v2102, 1
      %v2230 = vpop.permute.xlu0 %2229
      %2231 = vrot.lane.b32.xlu0 %v2106, 1
      %v2232 = vpop.permute.xlu0 %2231
      %2233 = vrot.lane.b32.xlu0 %v2108, 1
      %v2234 = vpop.permute.xlu0 %2233
      %2235 = vrot.lane.b32.xlu0 %v2112, 1
      %v2236 = vpop.permute.xlu0 %2235
      %2237 = vrot.lane.b32.xlu0 %v2114, 1
      %v2238 = vpop.permute.xlu0 %2237
      %v2239 = vsel %vm659, %v2228, %v2230
      %v2240 = vsel %vm659, %v2232, %v2234
      %v2241 = vsel %vm659, %v2236, %v2238
      %v2248 = vsel %vm659, 0.0, %v2228
      %v2249 = vsel %vm659, 0.0, %v2232
      %v2250 = vsel %vm659, 0.0, %v2236
      %v2251 = vmul.f32 %v2248, %v603
      %v2252 = vmul.f32 %v2239, %v607
      %v2253 = vmul.f32 %v2249, %v603
      %v2254 = vmul.f32 %v2240, %v607
      %v2255 = vmul.f32 %v2250, %v603
      %v2256 = vmul.f32 %v2241, %v607
      %2257 = vst [vmem:[#allocation2 + $0x90] sm:$0xff] %v2251
      %2258 = vst [vmem:[#allocation2 + $0x98] sm:$0xff] %v2252
      %2259 = vst [vmem:[#allocation2 + $0xa0] sm:$0xff] %v2253
      %2260 = vst [vmem:[#allocation2 + $0xa8] sm:$0xff] %v2254
      %2261 = vst [vmem:[#allocation2 + $0xb0] sm:$0xff] %v2255
      %2262 = vst [vmem:[#allocation2 + $0xb8] sm:$0xff] %v2256
      %2263 = vst [vmem:[#allocation2 + $0xc0] sm:$0xff] %v2100
      %2264 = vst [vmem:[#allocation2 + $0xc8] sm:$0xff] %v2102
      %2265 = vst [vmem:[#allocation2 + $0xd0] sm:$0xff] %v2106
      %2266 = vst [vmem:[#allocation2 + $0xd8] sm:$0xff] %v2108
      %2267 = vst [vmem:[#allocation2 + $0xe0] sm:$0xff] %v2112
      %2268 = vst [vmem:[#allocation2 + $0xe8] sm:$0xff] %v2114
      %2269 = vrot.lane.b32.xlu0 %v2100, 127
      %v2270 = vpop.permute.xlu0 %2269
      %2271 = vrot.lane.b32.xlu0 %v2102, 127
      %v2272 = vpop.permute.xlu0 %2271
      %2273 = vrot.lane.b32.xlu0 %v2106, 127
      %v2274 = vpop.permute.xlu0 %2273
      %2275 = vrot.lane.b32.xlu0 %v2108, 127
      %v2276 = vpop.permute.xlu0 %2275
      %2277 = vrot.lane.b32.xlu0 %v2112, 127
      %v2278 = vpop.permute.xlu0 %2277
      %2279 = vrot.lane.b32.xlu0 %v2114, 127
      %v2280 = vpop.permute.xlu0 %2279
      %v2281 = vsel %vm674, %v2270, %v2272
      %v2282 = vsel %vm674, %v2274, %v2276
      %v2283 = vsel %vm674, %v2278, %v2280
      %v2290 = vsel %vm674, %v2272, 0.0
      %v2291 = vsel %vm674, %v2276, 0.0
      %v2292 = vsel %vm674, %v2280, 0.0
      %v2293 = vmul.f32 %v2281, %v644
      %v2294 = vmul.f32 %v2290, %v648
      %v2295 = vmul.f32 %v2282, %v644
      %v2296 = vmul.f32 %v2291, %v648
      %v2297 = vmul.f32 %v2283, %v644
      %v2298 = vmul.f32 %v2292, %v648
      %2299 = vst [vmem:[#allocation2 + $0xf0] sm:$0xff] %v2293
      %2300 = vst [vmem:[#allocation2 + $0xf8] sm:$0xff] %v2294
      %2301 = vst [vmem:[#allocation2 + $0x100] sm:$0xff] %v2295
      %2302 = vst [vmem:[#allocation2 + $0x108] sm:$0xff] %v2296
      %2303 = vst [vmem:[#allocation2 + $0x110] sm:$0xff] %v2297
      %2304 = vst [vmem:[#allocation2 + $0x118] sm:$0xff] %v2298
      %2305 = vrot.lane.b32.xlu0 %v2100, 113
      %v2306 = vpop.permute.xlu0 %2305
      %2307 = vrot.lane.b32.xlu0 %v2102, 113
      %v2308 = vpop.permute.xlu0 %2307
      %2309 = vrot.lane.b32.xlu0 %v2106, 113
      %v2310 = vpop.permute.xlu0 %2309
      %2311 = vrot.lane.b32.xlu0 %v2108, 113
      %v2312 = vpop.permute.xlu0 %2311
      %2313 = vrot.lane.b32.xlu0 %v2112, 113
      %v2314 = vpop.permute.xlu0 %2313
      %2315 = vrot.lane.b32.xlu0 %v2114, 113
      %v2316 = vpop.permute.xlu0 %2315
      %v2317 = vsel %vm687, %v2306, %v2308
      %v2318 = vsel %vm687, %v2310, %v2312
      %v2319 = vsel %vm687, %v2314, %v2316
      %v2326 = vsel %vm687, %v2308, 0.0
      %v2327 = vsel %vm687, %v2312, 0.0
      %v2328 = vsel %vm687, %v2316, 0.0
      %v2329 = vmul.f32 %v2317, %v603
      %v2330 = vmul.f32 %v2326, %v607
      %v2331 = vmul.f32 %v2318, %v603
      %v2332 = vmul.f32 %v2327, %v607
      %v2333 = vmul.f32 %v2319, %v603
      %v2334 = vmul.f32 %v2328, %v607
      %2335 = vst [vmem:[#allocation2 + $0x120] sm:$0xff] %v2329
      %2336 = vst [vmem:[#allocation2 + $0x128] sm:$0xff] %v2330
      %2337 = vst [vmem:[#allocation2 + $0x130] sm:$0xff] %v2331
      %2338 = vst [vmem:[#allocation2 + $0x138] sm:$0xff] %v2332
      %2339 = vst [vmem:[#allocation2 + $0x140] sm:$0xff] %v2333
      %2340 = vst [vmem:[#allocation2 + $0x148] sm:$0xff] %v2334
      %2341 = vrot.lane.b32.xlu0 %v2100, 112
      %v2342 = vpop.permute.xlu0 %2341
      %2343 = vrot.lane.b32.xlu0 %v2102, 112
      %v2344 = vpop.permute.xlu0 %2343
      %2345 = vrot.lane.b32.xlu0 %v2106, 112
      %v2346 = vpop.permute.xlu0 %2345
      %2347 = vrot.lane.b32.xlu0 %v2108, 112
      %v2348 = vpop.permute.xlu0 %2347
      %2349 = vrot.lane.b32.xlu0 %v2112, 112
      %v2350 = vpop.permute.xlu0 %2349
      %2351 = vrot.lane.b32.xlu0 %v2114, 112
      %v2352 = vpop.permute.xlu0 %2351
      %v2353 = vsel %vm700, %v2342, %v2344
      %v2354 = vsel %vm700, %v2346, %v2348
      %v2355 = vsel %vm700, %v2350, %v2352
      %v2362 = vsel %vm700, %v2344, 0.0
      %v2363 = vsel %vm700, %v2348, 0.0
      %v2364 = vsel %vm700, %v2352, 0.0
      %2365 = vst [vmem:[#allocation2 + $0x150] sm:$0xff] %v2353
      %2366 = vst [vmem:[#allocation2 + $0x158] sm:$0xff] %v2362
      %2367 = vst [vmem:[#allocation2 + $0x160] sm:$0xff] %v2354
      %2368 = vst [vmem:[#allocation2 + $0x168] sm:$0xff] %v2363
      %2369 = vst [vmem:[#allocation2 + $0x170] sm:$0xff] %v2355
      %2370 = vst [vmem:[#allocation2 + $0x178] sm:$0xff] %v2364
      %2371 = vrot.lane.b32.xlu0 %v2100, 111
      %v2372 = vpop.permute.xlu0 %2371
      %2373 = vrot.lane.b32.xlu0 %v2102, 111
      %v2374 = vpop.permute.xlu0 %2373
      %2375 = vrot.lane.b32.xlu0 %v2106, 111
      %v2376 = vpop.permute.xlu0 %2375
      %2377 = vrot.lane.b32.xlu0 %v2108, 111
      %v2378 = vpop.permute.xlu0 %2377
      %2379 = vrot.lane.b32.xlu0 %v2112, 111
      %v2380 = vpop.permute.xlu0 %2379
      %2381 = vrot.lane.b32.xlu0 %v2114, 111
      %v2382 = vpop.permute.xlu0 %2381
      %v2383 = vsel %vm711, %v2372, %v2374
      %v2384 = vsel %vm711, %v2376, %v2378
      %v2385 = vsel %vm711, %v2380, %v2382
      %v2392 = vsel %vm711, %v2374, 0.0
      %v2393 = vsel %vm711, %v2378, 0.0
      %v2394 = vsel %vm711, %v2382, 0.0
      %v2395 = vmul.f32 %v2383, %v644
      %v2396 = vmul.f32 %v2392, %v648
      %v2397 = vmul.f32 %v2384, %v644
      %v2398 = vmul.f32 %v2393, %v648
      %v2399 = vmul.f32 %v2385, %v644
      %v2400 = vmul.f32 %v2394, %v648
      %2401 = vst [vmem:[#allocation2 + $0x180] sm:$0xff] %v2395
      %2402 = vst [vmem:[#allocation2 + $0x188] sm:$0xff] %v2396
      %2403 = vst [vmem:[#allocation2 + $0x190] sm:$0xff] %v2397
      %2404 = vst [vmem:[#allocation2 + $0x198] sm:$0xff] %v2398
      %2405 = vst [vmem:[#allocation2 + $0x1a0] sm:$0xff] %v2399
      %2406 = vst [vmem:[#allocation2 + $0x1a8] sm:$0xff] %v2400
      %v2407 = vld [vmem:[#allocation2] sm:$0xff]
      %v2408 = vld [vmem:[#allocation2 + $0x8] sm:$0xff]
      %v2409 = vld [vmem:[#allocation2 + $0x10] sm:$0xff]
      %v2410 = vld [vmem:[#allocation2 + $0x18] sm:$0xff]
      %v2411 = vld [vmem:[#allocation2 + $0x20] sm:$0xff]
      %v2412 = vld [vmem:[#allocation2 + $0x28] sm:$0xff]
      %v2413 = vld [vmem:[#allocation2 + $0x30] sm:$0xff]
      %v2414 = vld [vmem:[#allocation2 + $0x38] sm:$0xff]
      %v2415 = vld [vmem:[#allocation2 + $0x40] sm:$0xff]
      %v2416 = vld [vmem:[#allocation2 + $0x48] sm:$0xff]
      %v2417 = vld [vmem:[#allocation2 + $0x50] sm:$0xff]
      %v2418 = vld [vmem:[#allocation2 + $0x58] sm:$0xff]
      %v2419 = vld [vmem:[#allocation2 + $0x60] sm:$0xff]
      %v2420 = vld [vmem:[#allocation2 + $0x68] sm:$0xff]
      %v2421 = vld [vmem:[#allocation2 + $0x70] sm:$0xff]
      %v2422 = vld [vmem:[#allocation2 + $0x78] sm:$0xff]
      %v2423 = vld [vmem:[#allocation2 + $0x80] sm:$0xff]
      %v2424 = vld [vmem:[#allocation2 + $0x88] sm:$0xff]
      %v2425 = vld [vmem:[#allocation2 + $0x90] sm:$0xff]
      %v2426 = vld [vmem:[#allocation2 + $0x98] sm:$0xff]
      %v2427 = vld [vmem:[#allocation2 + $0xa0] sm:$0xff]
      %v2428 = vld [vmem:[#allocation2 + $0xa8] sm:$0xff]
      %v2429 = vld [vmem:[#allocation2 + $0xb0] sm:$0xff]
      %v2430 = vld [vmem:[#allocation2 + $0xb8] sm:$0xff]
      %v2431 = vld [vmem:[#allocation2 + $0xc0] sm:$0xff]
      %v2432 = vld [vmem:[#allocation2 + $0xc8] sm:$0xff]
      %v2433 = vld [vmem:[#allocation2 + $0xd0] sm:$0xff]
      %v2434 = vld [vmem:[#allocation2 + $0xd8] sm:$0xff]
      %v2435 = vld [vmem:[#allocation2 + $0xe0] sm:$0xff]
      %v2436 = vld [vmem:[#allocation2 + $0xe8] sm:$0xff]
      %v2437 = vld [vmem:[#allocation2 + $0xf0] sm:$0xff]
      %v2438 = vld [vmem:[#allocation2 + $0xf8] sm:$0xff]
      %v2439 = vld [vmem:[#allocation2 + $0x100] sm:$0xff]
      %v2440 = vld [vmem:[#allocation2 + $0x108] sm:$0xff]
      %v2441 = vld [vmem:[#allocation2 + $0x110] sm:$0xff]
      %v2442 = vld [vmem:[#allocation2 + $0x118] sm:$0xff]
      %v2443 = vld [vmem:[#allocation2 + $0x120] sm:$0xff]
      %v2444 = vld [vmem:[#allocation2 + $0x128] sm:$0xff]
      %v2445 = vld [vmem:[#allocation2 + $0x130] sm:$0xff]
      %v2446 = vld [vmem:[#allocation2 + $0x138] sm:$0xff]
      %v2447 = vld [vmem:[#allocation2 + $0x140] sm:$0xff]
      %v2448 = vld [vmem:[#allocation2 + $0x148] sm:$0xff]
      %v2449 = vld [vmem:[#allocation2 + $0x150] sm:$0xff]
      %v2450 = vld [vmem:[#allocation2 + $0x158] sm:$0xff]
      %v2451 = vld [vmem:[#allocation2 + $0x160] sm:$0xff]
      %v2452 = vld [vmem:[#allocation2 + $0x168] sm:$0xff]
      %v2453 = vld [vmem:[#allocation2 + $0x170] sm:$0xff]
      %v2454 = vld [vmem:[#allocation2 + $0x178] sm:$0xff]
      %v2455 = vld [vmem:[#allocation2 + $0x180] sm:$0xff]
      %v2456 = vld [vmem:[#allocation2 + $0x188] sm:$0xff]
      %v2457 = vld [vmem:[#allocation2 + $0x190] sm:$0xff]
      %v2458 = vld [vmem:[#allocation2 + $0x198] sm:$0xff]
      %v2459 = vld [vmem:[#allocation2 + $0x1a0] sm:$0xff]
      %v2460 = vld [vmem:[#allocation2 + $0x1a8] sm:$0xff]
      %v2461 = vld [vmem:[%s10] sm:$0xff]
      %v2462 = vld [vmem:[%s10 + $0x8] sm:$0xff]
      %v2463 = vld [vmem:[%s10 + $0x10] sm:$0xff]
      %v2464 = vld [vmem:[%s10 + $0x18] sm:$0xff]
      %v2465 = vld [vmem:[%s10 + $0x20] sm:$0xff]
      %v2466 = vld [vmem:[%s10 + $0x28] sm:$0xff]
      %2468 = vset.pattern.permute.xlu0 0
      %2469 = vperm.xlu0 %2468, %v2116
      %v2470 = vpop.permute.xlu0 %2469
      %2473 = vset.pattern.permute.xlu0 0
      %2474 = vperm.xlu0 %2473, %v2117
      %v2475 = vpop.permute.xlu0 %2474
      %2478 = vset.pattern.permute.xlu0 0
      %2479 = vperm.xlu0 %2478, %v2118
      %v2480 = vpop.permute.xlu0 %2479
      %vm2482 = vcmask 719872
      %v2484 = vsel %vm2482, %v2462, 0
      %v2487 = vsel %vm2482, %v2464, 0
      %v2490 = vsel %vm2482, %v2466, 0
      %2492 = vmatprep.subr.mxu0 %v2408
      %2493 = vmatpush1.msra.mxu0 %v2407
      %2494 = vmatprep.subr.mxu0 %v2410
      %2495 = vmatpush1.msra.mxu0 %v2409
      %2496 = vmatprep.subr.mxu0 %v2412
      %2497 = vmatpush1.msra.mxu0 %v2411
      %2498 = vmatprep.subr.mxu0 %v2414
      %2499 = vmatpush1.msra.mxu0 %v2413
      %2500 = vmatprep.subr.mxu0 %v2416
      %2501 = vmatpush1.msra.mxu0 %v2415
      %2502 = vmatprep.subr.mxu0 %v2418
      %2503 = vmatpush1.msra.mxu0 %v2417
      %2504 = vmatprep.subr.mxu0 %v2420
      %2505 = vmatpush1.msra.mxu0 %v2419
      %2506 = vmatprep.subr.mxu0 %v2422
      %2507 = vmatpush1.msra.mxu0 %v2421
      %2508 = vmatprep.subr.mxu0 %v2424
      %2509 = vmatpush1.msra.mxu0 %v2423
      %2510 = vmatprep.subr.mxu0 %v2426
      %2511 = vmatpush1.msra.mxu0 %v2425
      %2512 = vmatprep.subr.mxu0 %v2428
      %2513 = vmatpush1.msra.mxu0 %v2427
      %2514 = vmatprep.subr.mxu0 %v2430
      %2515 = vmatpush1.msra.mxu0 %v2429
      %2516 = vmatprep.subr.mxu0 %v2432
      %2517 = vmatpush1.msra.mxu0 %v2431
      %2518 = vmatprep.subr.mxu0 %v2434
      %2519 = vmatpush1.msra.mxu0 %v2433
      %2520 = vmatprep.subr.mxu0 %v2436
      %2521 = vmatpush1.msra.mxu0 %v2435
      %2522 = vmatprep.subr.mxu0 %v2438
      %2523 = vmatpush1.msra.mxu0 %v2437
      %2524 = vmatprep.subr.mxu0 %v2440
      %2525 = vmatpush1.msra.mxu0 %v2439
      %2526 = vmatprep.subr.mxu0 %v2442
      %2527 = vmatpush1.msra.mxu0 %v2441
      %2528 = vmatprep.subr.mxu0 %v2444
      %2529 = vmatpush1.msra.mxu0 %v2443
      %2530 = vmatprep.subr.mxu0 %v2446
      %2531 = vmatpush1.msra.mxu0 %v2445
      %2532 = vmatprep.subr.mxu0 %v2448
      %2533 = vmatpush1.msra.mxu0 %v2447
      %2534 = vmatprep.subr.mxu0 %v2450
      %2535 = vmatpush1.msra.mxu0 %v2449
      %2536 = vmatprep.subr.mxu0 %v2452
      %2537 = vmatpush1.msra.mxu0 %v2451
      %2538 = vmatprep.subr.mxu0 %v2454
      %2539 = vmatpush1.msra.mxu0 %v2453
      %2540 = vmatprep.subr.mxu0 %v2456
      %2541 = vmatpush1.msra.mxu0 %v2455
      %2542 = vmatprep.subr.mxu0 %v2458
      %2543 = vmatpush1.msra.mxu0 %v2457
      %2544 = vmatprep.subr.mxu0 %v2460
      %2545 = vmatpush1.msra.mxu0 %v2459
      %2546 = vmatprep.subr.mxu0 0.0
      %2547 = vmatpush1.msra.mxu0 0.0
      %2548 = vmatprep.subr.mxu0 0.0
      %2549 = vmatpush1.msra.mxu0 0.0
      %2550 = vmatprep.subr.mxu0 0.0
      %2551 = vmatpush1.msra.mxu0 0.0
      %2552 = vmatprep.subr.mxu0 0.0
      %2553 = vmatpush1.msra.mxu0 0.0
      %2554 = vmatprep.subr.mxu0 0.0
      %2555 = vmatpush1.msra.mxu0 0.0
      %2556 = vmatprep.mubr.f32.mxu0 %v2484
      %2557 = vmatmul.mubr.f32.gmra.mrb[0].mxu0 %v2461
      %v2558 = vpop.f32.mrb[0].mxu0
      %v2559 = vadd.f32 %v2470, %v2558
      %v2560 = vpop.f32.mrb[0].mxu0
      %v2561 = vadd.f32 %v2470, %v2560
      %2562 = vmatprep.mubr.f32.mxu0 %v2487
      %2563 = vmatmul.mubr.f32.gmra.mrb[0].mxu0 %v2463
      %v2564 = vpop.f32.mrb[0].mxu0
      %v2565 = vadd.f32 %v2475, %v2564
      %v2566 = vpop.f32.mrb[0].mxu0
      %v2567 = vadd.f32 %v2475, %v2566
      %2568 = vmatprep.mubr.f32.mxu0 %v2490
      %2569 = vmatmul.mubr.f32.gmra.mrb[0].mxu0 %v2465
      %v2570 = vpop.f32.mrb[0].mxu0
      %v2571 = vadd.f32 %v2480, %v2570
      %v2572 = vpop.f32.mrb[0].mxu0
      %v2573 = vadd.f32 %v2480, %v2572
      %2574 = vdwg.mxu0
      %2575 = vst [vmem:[%s413] sm:$0xff] %v833
      %2576 = vst [vmem:[%s413 + $0x8] sm:$0xff] %v835
      %2577 = vst [vmem:[%s413 + $0x10] sm:$0xff] %v839
      %2578 = vst [vmem:[%s413 + $0x18] sm:$0xff] %v841
      %2579 = vst [vmem:[%s413 + $0x20] sm:$0xff] %v845
      %2580 = vst [vmem:[%s413 + $0x28] sm:$0xff] %v847
      %2581 = vst [vmem:[%s413 + $0x30] sm:$0xff] %v545
      %2582 = vst [vmem:[%s413 + $0x38] sm:$0xff] %v547
      %2583 = vst [vmem:[%s413 + $0x40] sm:$0xff] %v551
      %2584 = vst [vmem:[%s413 + $0x48] sm:$0xff] %v553
      %2585 = vst [vmem:[%s413 + $0x50] sm:$0xff] %v1756
      %2586 = vst [vmem:[%s413 + $0x58] sm:$0xff] %v1758
      %2587 = vst [vmem:[%s413 + $0x60] sm:$0xff] %v1762
      %2588 = vst [vmem:[%s413 + $0x68] sm:$0xff] %v1764
      %2589 = vst [vmem:[%s413 + $0x70] sm:$0xff] %v1768
      %2590 = vst [vmem:[%s413 + $0x78] sm:$0xff] %v1770
      %2591 = vst [vmem:[%s413 + $0x80] sm:$0xff] %v2559
      %2592 = vst [vmem:[%s413 + $0x88] sm:$0xff] %v2561
      %2593 = vst [vmem:[%s413 + $0x90] sm:$0xff] %v2565
      %2594 = vst [vmem:[%s413 + $0x98] sm:$0xff] %v2567
      %2595 = vst [vmem:[%s413 + $0xa0] sm:$0xff] %v2571
      %2596 = vst [vmem:[%s413 + $0xa8] sm:$0xff] %v2573
      %p2597 = scmp.lt.s32.totalorder %s23, 1
      %s2598 = scalar_select %p2597, %s23, 1
      %s2599 = smul.addr %s2598, 22
      %s2600 = smul.addr %s2599, 8
      %s2601 = scalar_lea.vmem %s12, %s2600
      // Predicated region
      $region69: #{inception_a.1} parent=67 // pred_check
        %p2602 = pneg %p298
      $region70: #{inception_a.1} parent=67 // pred_check_branch
        %2604 = sbr.rel (%p2602) target = $region72
      $region71: #{inception_a.1} parent=67 // pred_region
        _
      $region72: #{inception_a.1} parent=67 // pred_fallthru
        _
    $region68: #{inception_a.1} parent=5 // pred_fallthru
      _
    %p2605 = scmp.le.s32.totalorder 2, %s18
    // Predicated region
    $region73: #{inception_a.1} parent=5 // pred_check
      %p2606 = pneg %p2605
    $region74: #{inception_a.1} parent=5 // pred_check_branch
      %2608 = sbr.rel (%p2606) target = $region76
    $region75: #{inception_a.1} parent=5 // pred_region
      %s2609 = ssub.s32 %s18, 2
      // Predicated region
      $region77: #{inception_a.1} parent=75 // pred_check
        %p2610 = pneg %p304
      $region78: #{inception_a.1} parent=75 // pred_check_branch
        %2612 = sbr.rel (%p2610) target = $region80
      $region79: #{inception_a.1} parent=75 // pred_region
        %p2613 = scmp.lt.s32.totalorder %s24, 1
        %s2614 = scalar_select %p2613, %s24, 1
        %s2615 = smul.addr %s2614, 22
        %s2616 = smul.addr %s2615, 8
        %s2617 = scalar_lea.vmem %s12, %s2616
      $region80: #{inception_a.1} parent=75 // pred_fallthru
        _
    $region76: #{inception_a.1} parent=5 // pred_fallthru
      _
  $region6: #{inception_a.1} parent=0 // loop_footer
    %s22 = sadd.s32 1, %s18
  $region7: #{inception_a.1} parent=0 // loop_footer_branch
    %17 = sbr.rel target = $region3
  $region8: #{inception_a.1} parent=0 // loop_exit
    _

</llo_original>
